<compile_context>
chip_gen: v6e
topology: v6e:2x2x1
jax: 0.10.0
libtpu: 0.0.40
codegen_flags: <defaults>
</compile_context>

<pallas_src>
import math
from functools import partial

import jax
import jax.numpy as jnp
from jax.experimental import pallas as pl
from jax.experimental.pallas import tpu as pltpu

NEG_INF = float(jnp.finfo(jnp.float32).min)
COMPUTE_DTYPE = jnp.bfloat16          # MXU operand dtype (accumulation is f32)
VMEM_LIMIT_BYTES = 48 * 1024 * 1024   # > default scoped limit everywhere, < v7x physical


def _round_up(x, m):
    return ((x + m - 1) // m) * m


def _layer_norm(x, g, b, eps):
    mu = jnp.mean(x, axis=-1, keepdims=True)
    var = jnp.mean(jnp.square(x - mu), axis=-1, keepdims=True)
    return (x - mu) * jax.lax.rsqrt(var + eps) * g + b


def _mha(q, k, v, w_out_ref, b_out, mask, n_heads, scale):
    """Multi-head scaled-dot-product attention + output projection.

    q:[Lq,D] k/v:[Lk,D] f32, w_out_ref: VMEM ref [H, dk, D] (head-major),
    mask:[Lq,Lk] bool.  Out-projection is accumulated per head, so no
    concatenate/relayout of the context is needed.  Attention probabilities
    are never written out (unused by the reference forward()).
    """
    Lq, D = q.shape
    dk = D // n_heads
    out = jnp.zeros((Lq, D), jnp.float32)
    for hd in range(n_heads):
        sl = slice(hd * dk, (hd + 1) * dk)
        qh = q[:, sl].astype(COMPUTE_DTYPE)
        kh = k[:, sl].astype(COMPUTE_DTYPE)
        vh = v[:, sl].astype(COMPUTE_DTYPE)
        s = jnp.dot(qh, kh.T, preferred_element_type=jnp.float32) * scale
        s = jnp.where(mask, s, NEG_INF)
        s = s - jnp.max(s, axis=-1, keepdims=True)
        p = jnp.exp(s)
        p = p * pl.reciprocal(jnp.sum(p, axis=-1, keepdims=True), approx=True)
        ctx = jnp.dot(p.astype(COMPUTE_DTYPE), vh,
                      preferred_element_type=jnp.float32)        # [Lq, dk]
        out = out + jnp.dot(ctx.astype(COMPUTE_DTYPE), w_out_ref[hd],
                            preferred_element_type=jnp.float32)  # accumulate heads
    return out + b_out


# ---------------- ONE fused kernel per decoder layer (3 sublayers) -----------
def _decoder_layer_kernel(ylen_ref, elen_ref,
                          y_ref, x_ref,
                          s_lng, s_lnb, s_wqkv, s_wout, s_bout,
                          c_lng, c_lnb, c_wq, c_wkv, c_wout, c_bout,
                          f_lng, f_lnb, f_w1, f_b1, f_w2, f_b2,
                          o_ref, *, n_heads, eps, scale):
    b = pl.program_id(0)
    ylen = ylen_ref[b]
    elen = elen_ref[b]

    y = y_ref[0].astype(jnp.float32)                  # [L, D] residual (f32 in VMEM)
    x = x_ref[0]                                      # [T, D] encoder outs (bf16)
    L, D = y.shape
    T = x.shape[0]

    # ---- pre-norm self-attention sublayer (causal + key-length mask) ----
    h = _layer_norm(y, s_lng[...], s_lnb[...], eps)
    qkv = jnp.dot(h.astype(s_wqkv.dtype), s_wqkv[...],
                  preferred_element_type=jnp.float32)             # [L, 3D]
    kpos = jax.lax.broadcasted_iota(jnp.int32, (L, L), 1)
    qpos = jax.lax.broadcasted_iota(jnp.int32, (L, L), 0)
    self_mask = jnp.logical_and(kpos < ylen, kpos <= qpos)
    # NOTE: a fully-masked row would give a uniform distribution (PyTorch: NaN);
    # never triggered since key lengths are >= 1.
    y = y + _mha(qkv[:, :D], qkv[:, D:2 * D], qkv[:, 2 * D:],
                 s_wout, s_bout[...], self_mask, n_heads, scale)

    # ---- pre-norm source-attention sublayer (encoder key-length mask) ----
    # TODO(synk): flash-style Lk tiling of these scores for very long encoder T.
    h = _layer_norm(y, c_lng[...], c_lnb[...], eps)
    q = jnp.dot(h.astype(c_wq.dtype), c_wq[...], preferred_element_type=jnp.float32)
    kvp = jnp.dot(x, c_wkv[...], preferred_element_type=jnp.float32)  # [T, 2D]
    src_mask = jax.lax.broadcasted_iota(jnp.int32, (L, T), 1) < elen
    y = y + _mha(q, kvp[:, :D], kvp[:, D:],
                 c_wout, c_bout[...], src_mask, n_heads, scale)

    # ---- pre-norm position-wise FFN sublayer ----
    h = _layer_norm(y, f_lng[...], f_lnb[...], eps)
    t = jnp.dot(h.astype(f_w1.dtype), f_w1[...],
                preferred_element_type=jnp.float32) + f_b1[...]
    t = jnp.maximum(t, 0.0)
    o = jnp.dot(t.astype(f_w2.dtype), f_w2[...],
                preferred_element_type=jnp.float32) + f_b2[...]
    y = y + o

    o_ref[0] = y.astype(o_ref.dtype)                  # bf16 back to HBM


def decoder_layer(y, x, ylens, elens, prm, n_heads, eps):
    B, L, D = y.shape
    T = x.shape[1]
    Dff = prm["ff_w1"].shape[1]
    dk = D // n_heads
    scale = 1.0 / math.sqrt(dk)

    def rep(shape):
        return pl.BlockSpec(shape, lambda b, yl, el: (0,) * len(shape))

    in_specs = [
        pl.BlockSpec((1, L, D), lambda b, yl, el: (b, 0, 0)),   # y (bf16)
        pl.BlockSpec((1, T, D), lambda b, yl, el: (b, 0, 0)),   # encoder outs (bf16)
        rep((1, D)), rep((1, D)), rep((D, 3 * D)), rep((n_heads, dk, D)), rep((1, D)),
        rep((1, D)), rep((1, D)), rep((D, D)), rep((D, 2 * D)),
        rep((n_heads, dk, D)), rep((1, D)),
        rep((1, D)), rep((1, D)), rep((D, Dff)), rep((1, Dff)), rep((Dff, D)), rep((1, D)),
    ]
    args = [
        y, x,
        prm["self"]["ln_g"], prm["self"]["ln_b"], prm["self"]["w_qkv"],
        prm["self"]["w_out_h"], prm["self"]["b_out"],
        prm["src"]["ln_g"], prm["src"]["ln_b"], prm["src"]["w_q"],
        prm["src"]["w_kv"], prm["src"]["w_out_h"], prm["src"]["b_out"],
        prm["ln3_g"], prm["ln3_b"], prm["ff_w1"], prm["ff_b1"],
        prm["ff_w2"], prm["ff_b2"],
    ]

    return pl.pallas_call(
        partial(_decoder_layer_kernel, n_heads=n_heads, eps=eps, scale=scale),
        out_shape=jax.ShapeDtypeStruct((B, L, D), y.dtype),
        grid_spec=pltpu.PrefetchScalarGridSpec(
            num_scalar_prefetch=2,
            grid=(B,),
            in_specs=in_specs,
            out_specs=pl.BlockSpec((1, L, D), lambda b, yl, el: (b, 0, 0)),
        ),
        compiler_params=pltpu.CompilerParams(
            dimension_semantics=("parallel",),
            vmem_limit_bytes=VMEM_LIMIT_BYTES),
    )(ylens, elens, *args)


# --------- fused output head: LN_top + tiled vocab proj + online CE ----------
# grid = (row_tiles, vocab_tiles); vocab axis last, "arbitrary".  Per row tile
# we keep running max / sum-of-exp / target-logit / argmax in VMEM scratch and
# only emit two scalars per row tile (sum of masked NLL, sum of correct).
def _head_kernel(y_ref, tgt_ref, lng_ref, lnb_ref, w_ref, b_ref,
                 nll_ref, corr_ref,
                 h_sc, m_sc, s_sc, tl_sc, am_sc, *, eps, pad, v_tile):
    v = pl.program_id(1)

    @pl.when(v == 0)
    def _():
        yv = y_ref[...].astype(jnp.float32)                          # [RT, D]
        h_sc[...] = _layer_norm(yv, lng_ref[...], lnb_ref[...], eps).astype(h_sc.dtype)
        m_sc[...] = jnp.full_like(m_sc, -jnp.inf)
        s_sc[...] = jnp.zeros_like(s_sc)
        tl_sc[...] = jnp.zeros_like(tl_sc)
        am_sc[...] = jnp.full_like(am_sc, -1)

    logits = jnp.dot(h_sc[...], w_ref[...],
                     preferred_element_type=jnp.float32) + b_ref[...]  # [RT, VT]
    tgt = tgt_ref[...]                                                 # [RT, 1] int32
    col = jax.lax.broadcasted_iota(jnp.int32, logits.shape, 1) + v * v_tile

    # target logit via per-tile compare+select (no [R,V] one-hot)
    tl_sc[...] += jnp.sum(jnp.where(col == tgt, logits, 0.0),
                          axis=-1, keepdims=True)

    # online logsumexp + first-occurrence argmax
    tile_max = jnp.max(logits, axis=-1, keepdims=True)
    tile_arg = jnp.min(jnp.where(logits == tile_max, col, jnp.int32(2**31 - 1)),
                       axis=-1, keepdims=True)
    m_old = m_sc[...]
    m_new = jnp.maximum(m_old, tile_max)
    s_sc[...] = s_sc[...] * jnp.exp(m_old - m_new) + \
        jnp.sum(jnp.exp(logits - m_new), axis=-1, keepdims=True)
    am_sc[...] = jnp.where(tile_max > m_old, tile_arg, am_sc[...])
    m_sc[...] = m_new

    @pl.when(v == pl.num_programs(1) - 1)
    def _():
        valid = (tgt != pad).astype(jnp.float32)                     # ignore_index=pad
        lse = m_sc[...] + jnp.log(s_sc[...])
        nll = (lse - tl_sc[...]) * valid
        corr = (am_sc[...] == tgt).astype(jnp.float32) * valid
        nll_ref[0] = jnp.sum(nll, keepdims=True)                     # (1, 1)
        corr_ref[0] = jnp.sum(corr, keepdims=True)


def output_head(y, ys_out_pad, params, eps, pad):
    B, L, D = y.shape
    R = B * L
    V = params["out_w"].shape[1]

    RT = min(256, _round_up(R, 8))          # fold B*L into matmul rows
    Rp = _round_up(R, RT)
    VT = 512 if V > 512 else _round_up(V, 128)
    Vp = _round_up(V, VT)
    nrt, nvt = Rp // RT, Vp // VT

    y_rows = y.reshape(R, D)
    tgt = ys_out_pad.reshape(R, 1).astype(jnp.int32)
    if Rp > R:
        y_rows = jnp.pad(y_rows, ((0, Rp - R), (0, 0)))
        tgt = jnp.pad(tgt, ((0, Rp - R), (0, 0)), constant_values=pad)
    w = params["out_w"]
    bias = params["out_b"]
    if Vp > V:
        w = jnp.pad(w, ((0, 0), (0, Vp - V)))
        bias = jnp.pad(bias, ((0, 0), (0, Vp - V)), constant_values=NEG_INF)

    nll_s, corr_s = pl.pallas_call(
        partial(_head_kernel, eps=eps, pad=pad, v_tile=VT),
        out_shape=(jax.ShapeDtypeStruct((nrt, 1, 1), jnp.float32),
                   jax.ShapeDtypeStruct((nrt, 1, 1), jnp.float32)),
        grid=(nrt, nvt),
        in_specs=[
            pl.BlockSpec((RT, D), lambda r, v: (r, 0)),
            pl.BlockSpec((RT, 1), lambda r, v: (r, 0)),
            pl.BlockSpec((1, D), lambda r, v: (0, 0)),
            pl.BlockSpec((1, D), lambda r, v: (0, 0)),
            pl.BlockSpec((D, VT), lambda r, v: (0, v)),
            pl.BlockSpec((1, VT), lambda r, v: (0, v)),
        ],
        out_specs=(pl.BlockSpec((1, 1, 1), lambda r, v: (r, 0, 0)),
                   pl.BlockSpec((1, 1, 1), lambda r, v: (r, 0, 0))),
        scratch_shapes=[
            pltpu.VMEM((RT, D), COMPUTE_DTYPE),   # cached LN(y) rows
            pltpu.VMEM((RT, 1), jnp.float32),     # running max
            pltpu.VMEM((RT, 1), jnp.float32),     # running sum-of-exp
            pltpu.VMEM((RT, 1), jnp.float32),     # target logit
            pltpu.VMEM((RT, 1), jnp.int32),       # running argmax
        ],
        compiler_params=pltpu.CompilerParams(
            dimension_semantics=("parallel", "arbitrary"),
            vmem_limit_bytes=VMEM_LIMIT_BYTES),
    )(y_rows, tgt, params["ln_top_g"], params["ln_top_b"], w, bias)
    return nll_s, corr_s


# --------------------------- model glue (plain JAX) --------------------------
def forward_att(params, cfg, eouts, elens, ys_in_pad, ys_out_pad, ylens):
    B = eouts.shape[0]
    d_model = cfg["d_model"]
    # embedding (padding_idx=pad -> zero row) scaled by sqrt(d_model); pe_type=False
    ys_emb = (jnp.take(params["embed"], ys_in_pad, axis=0)
              * (d_model ** 0.5)).astype(COMPUTE_DTYPE)
    x_bf = eouts.astype(COMPUTE_DTYPE)
    # NOTE: the reference passes the ORIGINAL target lengths (without the
    # prepended <eos>) as key_lens to the decoder layers; reproduced here.
    for lp in params["layers"]:
        ys_emb = decoder_layer(ys_emb, x_bf, ylens, elens, lp,
                               cfg["n_heads"], cfg["ln_eps"])
    nll_s, corr_s = output_head(ys_emb, ys_out_pad, params,
                                cfg["ln_eps"], cfg["pad"])
    # cross entropy (ignore_index=pad, summed, / bs) -- lsm_prob=0 path
    loss = jnp.sum(nll_s) / B
    n_valid = jnp.sum((ys_out_pad != cfg["pad"]).astype(jnp.float32))
    acc = 100.0 * jnp.sum(corr_s) / n_valid
    ppl = jnp.exp(loss)
    return loss, acc, ppl


def make_forward(cfg):
    """Jit the whole forward so device scalars are pulled to host exactly once."""
    def _fwd(params, eouts, elens, ys_in_pad, ys_out_pad, ylens):
        loss_att, acc_att, ppl_att = forward_att(
            params, cfg, eouts, elens, ys_in_pad, ys_out_pad, ylens)
        loss = loss_att * (cfg["global_weight"] - cfg["ctc_weight"])
        return loss, loss_att, acc_att, ppl_att
    return jax.jit(_fwd)


def transformer_decoder_forward(fwd_fn, params, eouts, elens, ys_in_pad,
                                ys_out_pad, ylens):
    """Top-level forward(): ctc_weight=0, global_weight=1, task='all'."""
    # TODO(synk): warpctc CTCLoss / adaptive softmax / beam+greedy decode loops
    # are host-side or external-library paths and are not translated.
    loss, loss_att, acc_att, ppl_att = fwd_fn(
        params, eouts, elens, ys_in_pad, ys_out_pad, ylens)
    jax.block_until_ready(loss)  # single host sync point for all metrics
    observation = {
        "loss": float(loss), "loss_att": float(loss_att), "loss_ctc": None,
        "loss_lmobj": None, "acc_att": float(acc_att), "acc_lmobj": None,
        "ppl_att": float(ppl_att), "ppl_lmobj": None,
    }
    return loss, observation


# --------------------------- deterministic init ------------------------------
def init_params(key, cfg):
    vocab, d_model, d_ff = cfg["vocab"], cfg["d_model"], cfg["d_ff"]
    n_layers, n_heads, pad = cfg["n_layers"], cfg["n_heads"], cfg["pad"]
    dk = d_model // n_heads

    def dense(k, shape, scale=0.05):
        # matmul weights stored in bf16 (MXU operands); accumulation stays f32
        return (scale * jax.random.normal(k, shape, jnp.float32)).astype(COMPUTE_DTYPE)

    def ln():
        return (jnp.ones((1, d_model), jnp.float32),
                jnp.zeros((1, d_model), jnp.float32))

    keys = jax.random.split(key, 2 + n_layers)
    embed = 0.05 * jax.random.normal(keys[0], (vocab, d_model), jnp.float32)
    embed = embed.at[pad].set(0.0)  # nn.Embedding(padding_idx=pad)

    layers = []
    for i in range(n_layers):
        ks = jax.random.split(keys[2 + i], 7)
        g1, b1 = ln()
        g2, b2 = ln()
        g3, b3 = ln()
        layers.append({
            "self": {
                "ln_g": g1, "ln_b": b1,
                # fused [W_q | W_k | W_v] (all bias=False in the reference)
                "w_qkv": dense(ks[0], (d_model, 3 * d_model)),
                # output projection stored head-major: [H, dk, D]
                "w_out_h": dense(ks[1], (n_heads, dk, d_model)),
                "b_out": jnp.zeros((1, d_model), jnp.float32),
            },
            "src": {
                "ln_g": g2, "ln_b": b2,
                "w_q": dense(ks[2], (d_model, d_model)),
                "w_kv": dense(ks[3], (d_model, 2 * d_model)),   # [W_k | W_v]
                "w_out_h": dense(ks[4], (n_heads, dk, d_model)),
                "b_out": jnp.zeros((1, d_model), jnp.float32),
            },
            "ln3_g": g3, "ln3_b": b3,
            "ff_w1": dense(ks[5], (d_model, d_ff)),
            "ff_b1": jnp.zeros((1, d_ff), jnp.float32),
            "ff_w2": dense(ks[6], (d_ff, d_model)),
            "ff_b2": jnp.zeros((1, d_model), jnp.float32),
        })

    return {
        "embed": embed,
        "layers": layers,
        "ln_top_g": jnp.ones((1, d_model), jnp.float32),
        "ln_top_b": jnp.zeros((1, d_model), jnp.float32),
        "out_w": dense(keys[1], (d_model, vocab)),
        "out_b": jnp.zeros((1, vocab), jnp.float32),
    }


# --------------------------------- main --------------------------------------
if __name__ == "__main__":
    cfg = dict(eos=2, unk=1, pad=3, blank=0, vocab=50, d_model=32, d_ff=64,
               n_layers=2, n_heads=4, ln_eps=1e-6, ctc_weight=0.0, global_weight=1.0)

    B, T = 2, 16
    key = jax.random.PRNGKey(0)
    k_enc, k_tok, k_par = jax.random.split(key, 3)

    # encoder outputs [B, T, d_model] and lengths
    eouts = jax.random.normal(k_enc, (B, T, cfg["d_model"]), jnp.float32)
    elens = jnp.array([16, 12], jnp.int32)

    # target token sequences (ragged), values avoid special tokens
    ylens_list = [8, 5]
    Lmax = max(ylens_list)
    tok = jax.random.randint(k_tok, (B, Lmax), 4, cfg["vocab"])
    toks = [[int(tok[b, i]) for i in range(ylens_list[b])] for b in range(B)]
    ys_in = [[cfg["eos"]] + y + [cfg["pad"]] * (Lmax - len(y)) for y in toks]
    ys_out = [y + [cfg["eos"]] + [cfg["pad"]] * (Lmax - len(y)) for y in toks]
    ys_in_pad = jnp.array(ys_in, jnp.int32)    # [B, Lmax+1]
    ys_out_pad = jnp.array(ys_out, jnp.int32)  # [B, Lmax+1]
    ylens = jnp.array(ylens_list, jnp.int32)   # original lengths (as in reference)

    params = init_params(k_par, cfg)
    fwd_fn = make_forward(cfg)

    loss, observation = transformer_decoder_forward(
        fwd_fn, params, eouts, elens, ys_in_pad, ys_out_pad, ylens)
    loss = jax.block_until_ready(loss)
    assert bool(jnp.isfinite(loss)), "loss is not finite"
    print("KERNEL_OK")
</pallas_src>

<mosaic_0001>
module attributes {stable_mosaic.version = 11 : i64} {
  func.func @_head_kernel(%arg0: i32, %arg1: i32, %arg2: memref<24x32xbf16, #tpu.memory_space<vmem>>, %arg3: memref<24x1xi32, #tpu.memory_space<vmem>>, %arg4: memref<1x32xf32, #tpu.memory_space<vmem>>, %arg5: memref<1x32xf32, #tpu.memory_space<vmem>>, %arg6: memref<32x128xbf16, #tpu.memory_space<vmem>>, %arg7: memref<1x128xf32, #tpu.memory_space<vmem>>, %arg8: memref<1x1x1xf32, #tpu.memory_space<vmem>>, %arg9: memref<1x1x1xf32, #tpu.memory_space<vmem>>, %arg10: memref<24x32xbf16, #tpu.memory_space<vmem>>, %arg11: memref<24x1xf32, #tpu.memory_space<vmem>>, %arg12: memref<24x1xf32, #tpu.memory_space<vmem>>, %arg13: memref<24x1xf32, #tpu.memory_space<vmem>>, %arg14: memref<24x1xi32, #tpu.memory_space<vmem>>) attributes {dimension_semantics = [#tpu.dimension_semantics<parallel>, #tpu.dimension_semantics<arbitrary>], iteration_bounds = array<i64: 1, 1>, scalar_prefetch = 0 : i64, scratch_operands = 5 : i64, tpu.core_type = #tpu.core_type<tc>, window_params = [{transform_indices = @transform_0, window_bounds = array<i64: 24, 32>}, {transform_indices = @transform_1, window_bounds = array<i64: 24, 1>}, {pipeline_mode = #tpu.pipeline_mode<synchronous>, transform_indices = @transform_2, window_bounds = array<i64: 1, 32>}, {pipeline_mode = #tpu.pipeline_mode<synchronous>, transform_indices = @transform_3, window_bounds = array<i64: 1, 32>}, {transform_indices = @transform_4, window_bounds = array<i64: 32, 128>}, {transform_indices = @transform_5, window_bounds = array<i64: 1, 128>}, {transform_indices = @transform_6, window_bounds = array<i64: 1, 1, 1>}, {transform_indices = @transform_7, window_bounds = array<i64: 1, 1, 1>}]} {
    %c0_i32 = arith.constant 0 : i32
    %0 = arith.cmpi eq, %arg1, %c0_i32 : i32
    %1 = arith.extui %0 : i1 to i32
    %c0_i32_0 = arith.constant 0 : i32
    %2 = arith.cmpi ne, %1, %c0_i32_0 : i32
    scf.if %2 {
      %c0_31 = arith.constant 0 : index
      %c0_32 = arith.constant 0 : index
      %52 = vector.load %arg2[%c0_31, %c0_32] : memref<24x32xbf16, #tpu.memory_space<vmem>>, vector<24x32xbf16>
      %53 = arith.extf %52 : vector<24x32xbf16> to vector<24x32xf32>
      %c0_33 = arith.constant 0 : index
      %c0_34 = arith.constant 0 : index
      %54 = vector.load %arg4[%c0_33, %c0_34] : memref<1x32xf32, #tpu.memory_space<vmem>>, vector<1x32xf32>
      %c0_35 = arith.constant 0 : index
      %c0_36 = arith.constant 0 : index
      %55 = vector.load %arg5[%c0_35, %c0_36] : memref<1x32xf32, #tpu.memory_space<vmem>>, vector<1x32xf32>
      %cst_37 = arith.constant dense<0.000000e+00> : vector<24xf32>
      %56 = vector.multi_reduction <add>, %53, %cst_37 [1] : vector<24x32xf32> to vector<24xf32>
      %57 = vector.shape_cast %56 : vector<24xf32> to vector<24x1xf32>
      %cst_38 = arith.constant 3.200000e+01 : f32
      %58 = vector.broadcast %cst_38 : f32 to vector<24x1xf32>
      %59 = arith.divf %57, %58 : vector<24x1xf32>
      %60 = vector.broadcast %59 : vector<24x1xf32> to vector<24x32xf32>
      %61 = arith.subf %53, %60 : vector<24x32xf32>
      %62 = arith.mulf %61, %61 : vector<24x32xf32>
      %cst_39 = arith.constant dense<0.000000e+00> : vector<24xf32>
      %63 = vector.multi_reduction <add>, %62, %cst_39 [1] : vector<24x32xf32> to vector<24xf32>
      %64 = vector.shape_cast %63 : vector<24xf32> to vector<24x1xf32>
      %cst_40 = arith.constant 3.200000e+01 : f32
      %65 = vector.broadcast %cst_40 : f32 to vector<24x1xf32>
      %66 = arith.divf %64, %65 : vector<24x1xf32>
      %67 = vector.broadcast %59 : vector<24x1xf32> to vector<24x32xf32>
      %68 = arith.subf %53, %67 : vector<24x32xf32>
      %cst_41 = arith.constant 9.99999997E-7 : f32
      %69 = vector.broadcast %cst_41 : f32 to vector<24x1xf32>
      %70 = arith.addf %66, %69 : vector<24x1xf32>
      %71 = math.rsqrt %70 : vector<24x1xf32>
      %72 = vector.broadcast %71 : vector<24x1xf32> to vector<24x32xf32>
      %73 = arith.mulf %68, %72 : vector<24x32xf32>
      %74 = vector.broadcast %54 : vector<1x32xf32> to vector<24x32xf32>
      %75 = arith.mulf %73, %74 : vector<24x32xf32>
      %76 = vector.broadcast %55 : vector<1x32xf32> to vector<24x32xf32>
      %77 = arith.addf %75, %76 : vector<24x32xf32>
      %78 = arith.truncf %77 : vector<24x32xf32> to vector<24x32xbf16>
      %c0_42 = arith.constant 0 : index
      %c0_43 = arith.constant 0 : index
      %79 = vector.load %arg10[%c0_42, %c0_43] : memref<24x32xbf16, #tpu.memory_space<vmem>>, vector<24x32xbf16>
      tpu.vector_store %arg10[%c0_42, %c0_43], %78 {strides = array<i32>} : memref<24x32xbf16, #tpu.memory_space<vmem>>, vector<24x32xbf16>,
      %cst_44 = arith.constant 0xFF800000 : f32
      %80 = vector.broadcast %cst_44 : f32 to vector<24x1xf32>
      %c0_45 = arith.constant 0 : index
      %c0_46 = arith.constant 0 : index
      %81 = vector.load %arg11[%c0_45, %c0_46] : memref<24x1xf32, #tpu.memory_space<vmem>>, vector<24x1xf32>
      tpu.vector_store %arg11[%c0_45, %c0_46], %80 {strides = array<i32>} : memref<24x1xf32, #tpu.memory_space<vmem>>, vector<24x1xf32>,
      %cst_47 = arith.constant 0.000000e+00 : f32
      %82 = vector.broadcast %cst_47 : f32 to vector<24x1xf32>
      %c0_48 = arith.constant 0 : index
      %c0_49 = arith.constant 0 : index
      %83 = vector.load %arg12[%c0_48, %c0_49] : memref<24x1xf32, #tpu.memory_space<vmem>>, vector<24x1xf32>
      tpu.vector_store %arg12[%c0_48, %c0_49], %82 {strides = array<i32>} : memref<24x1xf32, #tpu.memory_space<vmem>>, vector<24x1xf32>,
      %cst_50 = arith.constant 0.000000e+00 : f32
      %84 = vector.broadcast %cst_50 : f32 to vector<24x1xf32>
      %c0_51 = arith.constant 0 : index
      %c0_52 = arith.constant 0 : index
      %85 = vector.load %arg13[%c0_51, %c0_52] : memref<24x1xf32, #tpu.memory_space<vmem>>, vector<24x1xf32>
      tpu.vector_store %arg13[%c0_51, %c0_52], %84 {strides = array<i32>} : memref<24x1xf32, #tpu.memory_space<vmem>>, vector<24x1xf32>,
      %c-1_i32 = arith.constant -1 : i32
      %86 = vector.broadcast %c-1_i32 : i32 to vector<24x1xi32>
      %c0_53 = arith.constant 0 : index
      %c0_54 = arith.constant 0 : index
      %87 = vector.load %arg14[%c0_53, %c0_54] : memref<24x1xi32, #tpu.memory_space<vmem>>, vector<24x1xi32>
      tpu.vector_store %arg14[%c0_53, %c0_54], %86 {strides = array<i32>} : memref<24x1xi32, #tpu.memory_space<vmem>>, vector<24x1xi32>,
    } else {
    }
    %c0 = arith.constant 0 : index
    %c0_1 = arith.constant 0 : index
    %3 = vector.load %arg10[%c0, %c0_1] : memref<24x32xbf16, #tpu.memory_space<vmem>>, vector<24x32xbf16>
    %c0_2 = arith.constant 0 : index
    %c0_3 = arith.constant 0 : index
    %4 = vector.load %arg6[%c0_2, %c0_3] : memref<32x128xbf16, #tpu.memory_space<vmem>>, vector<32x128xbf16>
    %cst = arith.constant dense<0.000000e+00> : vector<24x128xf32>
    %5 = tpu.matmul %3, %4, %cst {dimension_numbers = #tpu.dot_dimension_numbers<[1], [0], [0], [1], [0, 0, 1, 1], [], []>} : vector<24x32xbf16>, vector<32x128xbf16>, vector<24x128xf32> -> vector<24x128xf32>
    %c0_4 = arith.constant 0 : index
    %c0_5 = arith.constant 0 : index
    %6 = vector.load %arg7[%c0_4, %c0_5] : memref<1x128xf32, #tpu.memory_space<vmem>>, vector<1x128xf32>
    %7 = vector.broadcast %6 : vector<1x128xf32> to vector<24x128xf32>
    %8 = arith.addf %5, %7 : vector<24x128xf32>
    %c0_6 = arith.constant 0 : index
    %c0_7 = arith.constant 0 : index
    %9 = vector.load %arg3[%c0_6, %c0_7] : memref<24x1xi32, #tpu.memory_space<vmem>>, vector<24x1xi32>
    %10 = tpu.iota {dimensions = array<i32: 1>} : vector<24x128xi32>
    %c128_i32 = arith.constant 128 : i32
    %11 = arith.muli %arg1, %c128_i32 : i32
    %12 = vector.broadcast %11 : i32 to vector<24x128xi32>
    %13 = arith.addi %10, %12 : vector<24x128xi32>
    %c0_8 = arith.constant 0 : index
    %c0_9 = arith.constant 0 : index
    %14 = vector.load %arg13[%c0_8, %c0_9] : memref<24x1xf32, #tpu.memory_space<vmem>>, vector<24x1xf32>
    %15 = vector.broadcast %9 : vector<24x1xi32> to vector<24x128xi32>
    %16 = arith.cmpi eq, %13, %15 : vector<24x128xi32>
    %cst_10 = arith.constant 0.000000e+00 : f32
    %17 = vector.broadcast %cst_10 : f32 to vector<24x128xf32>
    %18 = arith.select %16, %8, %17 : vector<24x128xi1>, vector<24x128xf32>
    %cst_11 = arith.constant dense<0.000000e+00> : vector<24xf32>
    %19 = vector.multi_reduction <add>, %18, %cst_11 [1] : vector<24x128xf32> to vector<24xf32>
    %20 = vector.shape_cast %19 : vector<24xf32> to vector<24x1xf32>
    %21 = arith.addf %14, %20 : vector<24x1xf32>
    %c0_12 = arith.constant 0 : index
    %c0_13 = arith.constant 0 : index
    %22 = vector.load %arg13[%c0_12, %c0_13] : memref<24x1xf32, #tpu.memory_space<vmem>>, vector<24x1xf32>
    tpu.vector_store %arg13[%c0_12, %c0_13], %21 {strides = array<i32>} : memref<24x1xf32, #tpu.memory_space<vmem>>, vector<24x1xf32>,
    %cst_14 = arith.constant dense<0xFF800000> : vector<24xf32>
    %23 = vector.multi_reduction <maximumf>, %8, %cst_14 [1] : vector<24x128xf32> to vector<24xf32>
    %24 = vector.shape_cast %23 : vector<24xf32> to vector<24x1xf32>
    %25 = vector.broadcast %24 : vector<24x1xf32> to vector<24x128xf32>
    %26 = arith.cmpf oeq, %8, %25 : vector<24x128xf32>
    %c2147483647_i32 = arith.constant 2147483647 : i32
    %27 = vector.broadcast %c2147483647_i32 : i32 to vector<24x128xi32>
    %28 = arith.select %26, %13, %27 : vector<24x128xi1>, vector<24x128xi32>
    %cst_15 = arith.constant dense<2147483647> : vector<24xi32>
    %29 = vector.multi_reduction <minsi>, %28, %cst_15 [1] : vector<24x128xi32> to vector<24xi32>
    %30 = vector.shape_cast %29 : vector<24xi32> to vector<24x1xi32>
    %c0_16 = arith.constant 0 : index
    %c0_17 = arith.constant 0 : index
    %31 = vector.load %arg11[%c0_16, %c0_17] : memref<24x1xf32, #tpu.memory_space<vmem>>, vector<24x1xf32>
    %32 = arith.maximumf %31, %24 : vector<24x1xf32>
    %c0_18 = arith.constant 0 : index
    %c0_19 = arith.constant 0 : index
    %33 = vector.load %arg12[%c0_18, %c0_19] : memref<24x1xf32, #tpu.memory_space<vmem>>, vector<24x1xf32>
    %34 = arith.subf %31, %32 : vector<24x1xf32>
    %35 = math.exp %34 : vector<24x1xf32>
    %36 = arith.mulf %33, %35 : vector<24x1xf32>
    %37 = vector.broadcast %32 : vector<24x1xf32> to vector<24x128xf32>
    %38 = arith.subf %8, %37 : vector<24x128xf32>
    %39 = math.exp %38 : vector<24x128xf32>
    %cst_20 = arith.constant dense<0.000000e+00> : vector<24xf32>
    %40 = vector.multi_reduction <add>, %39, %cst_20 [1] : vector<24x128xf32> to vector<24xf32>
    %41 = vector.shape_cast %40 : vector<24xf32> to vector<24x1xf32>
    %42 = arith.addf %36, %41 : vector<24x1xf32>
    %c0_21 = arith.constant 0 : index
    %c0_22 = arith.constant 0 : index
    %43 = vector.load %arg12[%c0_21, %c0_22] : memref<24x1xf32, #tpu.memory_space<vmem>>, vector<24x1xf32>
    tpu.vector_store %arg12[%c0_21, %c0_22], %42 {strides = array<i32>} : memref<24x1xf32, #tpu.memory_space<vmem>>, vector<24x1xf32>,
    %44 = arith.cmpf ogt, %24, %31 : vector<24x1xf32>
    %c0_23 = arith.constant 0 : index
    %c0_24 = arith.constant 0 : index
    %45 = vector.load %arg14[%c0_23, %c0_24] : memref<24x1xi32, #tpu.memory_space<vmem>>, vector<24x1xi32>
    %46 = arith.select %44, %30, %45 : vector<24x1xi1>, vector<24x1xi32>
    %c0_25 = arith.constant 0 : index
    %c0_26 = arith.constant 0 : index
    %47 = vector.load %arg14[%c0_25, %c0_26] : memref<24x1xi32, #tpu.memory_space<vmem>>, vector<24x1xi32>
    tpu.vector_store %arg14[%c0_25, %c0_26], %46 {strides = array<i32>} : memref<24x1xi32, #tpu.memory_space<vmem>>, vector<24x1xi32>,
    %c0_27 = arith.constant 0 : index
    %c0_28 = arith.constant 0 : index
    %48 = vector.load %arg11[%c0_27, %c0_28] : memref<24x1xf32, #tpu.memory_space<vmem>>, vector<24x1xf32>
    tpu.vector_store %arg11[%c0_27, %c0_28], %32 {strides = array<i32>} : memref<24x1xf32, #tpu.memory_space<vmem>>, vector<24x1xf32>,
    %c0_i32_29 = arith.constant 0 : i32
    %49 = arith.cmpi eq, %arg1, %c0_i32_29 : i32
    %50 = arith.extui %49 : i1 to i32
    %c0_i32_30 = arith.constant 0 : i32
    %51 = arith.cmpi ne, %50, %c0_i32_30 : i32
    scf.if %51 {
      %c3_i32 = arith.constant 3 : i32
      %52 = vector.broadcast %c3_i32 : i32 to vector<24x1xi32>
      %53 = arith.cmpi ne, %9, %52 : vector<24x1xi32>
      %54 = arith.extui %53 : vector<24x1xi1> to vector<24x1xi32>
      %55 = arith.sitofp %54 : vector<24x1xi32> to vector<24x1xf32>
      %c0_31 = arith.constant 0 : index
      %c0_32 = arith.constant 0 : index
      %56 = vector.load %arg11[%c0_31, %c0_32] : memref<24x1xf32, #tpu.memory_space<vmem>>, vector<24x1xf32>
      %c0_33 = arith.constant 0 : index
      %c0_34 = arith.constant 0 : index
      %57 = vector.load %arg12[%c0_33, %c0_34] : memref<24x1xf32, #tpu.memory_space<vmem>>, vector<24x1xf32>
      %58 = math.log %57 : vector<24x1xf32>
      %59 = arith.addf %56, %58 : vector<24x1xf32>
      %c0_35 = arith.constant 0 : index
      %c0_36 = arith.constant 0 : index
      %60 = vector.load %arg13[%c0_35, %c0_36] : memref<24x1xf32, #tpu.memory_space<vmem>>, vector<24x1xf32>
      %61 = arith.subf %59, %60 : vector<24x1xf32>
      %62 = arith.mulf %61, %55 : vector<24x1xf32>
      %c0_37 = arith.constant 0 : index
      %c0_38 = arith.constant 0 : index
      %63 = vector.load %arg14[%c0_37, %c0_38] : memref<24x1xi32, #tpu.memory_space<vmem>>, vector<24x1xi32>
      %64 = arith.cmpi eq, %63, %9 : vector<24x1xi32>
      %65 = arith.extui %64 : vector<24x1xi1> to vector<24x1xi32>
      %66 = arith.sitofp %65 : vector<24x1xi32> to vector<24x1xf32>
      %67 = arith.mulf %66, %55 : vector<24x1xf32>
      %68 = vector.shape_cast %62 : vector<24x1xf32> to vector<1x24x1xf32>
      %cst_39 = arith.constant dense<0.000000e+00> : vector<1xf32>
      %69 = vector.multi_reduction <add>, %68, %cst_39 [1, 2] : vector<1x24x1xf32> to vector<1xf32>
      %70 = vector.shape_cast %69 : vector<1xf32> to vector<1x1x1xf32>
      %71 = vector.extract %70[0, 0, 0] : f32 from vector<1x1x1xf32>
      %72 = vector.broadcast %71 : f32 to vector<1x1xf32>
      %c0_40 = arith.constant 0 : index
      %c0_41 = arith.constant 0 : index
      %c0_42 = arith.constant 0 : index
      %73 = vector.load %arg8[%c0_40, %c0_41, %c0_42] : memref<1x1x1xf32, #tpu.memory_space<vmem>>, vector<1x1x1xf32>
      %74 = vector.shape_cast %73 : vector<1x1x1xf32> to vector<1x1xf32>
      %75 = vector.shape_cast %72 : vector<1x1xf32> to vector<1x1x1xf32>
      tpu.vector_store %arg8[%c0_40, %c0_41, %c0_42], %75 {strides = array<i32>} : memref<1x1x1xf32, #tpu.memory_space<vmem>>, vector<1x1x1xf32>,
      %76 = vector.shape_cast %67 : vector<24x1xf32> to vector<1x24x1xf32>
      %cst_43 = arith.constant dense<0.000000e+00> : vector<1xf32>
      %77 = vector.multi_reduction <add>, %76, %cst_43 [1, 2] : vector<1x24x1xf32> to vector<1xf32>
      %78 = vector.shape_cast %77 : vector<1xf32> to vector<1x1x1xf32>
      %79 = vector.extract %78[0, 0, 0] : f32 from vector<1x1x1xf32>
      %80 = vector.broadcast %79 : f32 to vector<1x1xf32>
      %c0_44 = arith.constant 0 : index
      %c0_45 = arith.constant 0 : index
      %c0_46 = arith.constant 0 : index
      %81 = vector.load %arg9[%c0_44, %c0_45, %c0_46] : memref<1x1x1xf32, #tpu.memory_space<vmem>>, vector<1x1x1xf32>
      %82 = vector.shape_cast %81 : vector<1x1x1xf32> to vector<1x1xf32>
      %83 = vector.shape_cast %80 : vector<1x1xf32> to vector<1x1x1xf32>
      tpu.vector_store %arg9[%c0_44, %c0_45, %c0_46], %83 {strides = array<i32>} : memref<1x1x1xf32, #tpu.memory_space<vmem>>, vector<1x1x1xf32>,
    } else {
    }
    return
  }
  func.func @transform_0(%arg0: i32, %arg1: i32) -> (i32, i32) {
    %c0_i32 = arith.constant 0 : i32
    %c0_i32_0 = arith.constant 0 : i32
    return %arg0, %c0_i32 : i32, i32
  }
  func.func @transform_1(%arg0: i32, %arg1: i32) -> (i32, i32) {
    %c0_i32 = arith.constant 0 : i32
    %c0_i32_0 = arith.constant 0 : i32
    return %arg0, %c0_i32 : i32, i32
  }
  func.func @transform_2(%arg0: i32, %arg1: i32) -> (i32, i32) {
    %c0_i32 = arith.constant 0 : i32
    %c0_i32_0 = arith.constant 0 : i32
    %c0_i32_1 = arith.constant 0 : i32
    return %c0_i32, %c0_i32_0 : i32, i32
  }
  func.func @transform_3(%arg0: i32, %arg1: i32) -> (i32, i32) {
    %c0_i32 = arith.constant 0 : i32
    %c0_i32_0 = arith.constant 0 : i32
    %c0_i32_1 = arith.constant 0 : i32
    return %c0_i32, %c0_i32_0 : i32, i32
  }
  func.func @transform_4(%arg0: i32, %arg1: i32) -> (i32, i32) {
    %c0_i32 = arith.constant 0 : i32
    %c0_i32_0 = arith.constant 0 : i32
    return %c0_i32, %arg1 : i32, i32
  }
  func.func @transform_5(%arg0: i32, %arg1: i32) -> (i32, i32) {
    %c0_i32 = arith.constant 0 : i32
    %c0_i32_0 = arith.constant 0 : i32
    return %c0_i32, %arg1 : i32, i32
  }
  func.func @transform_6(%arg0: i32, %arg1: i32) -> (i32, i32, i32) {
    %c0_i32 = arith.constant 0 : i32
    %c0_i32_0 = arith.constant 0 : i32
    %c0_i32_1 = arith.constant 0 : i32
    return %arg0, %c0_i32, %c0_i32_0 : i32, i32, i32
  }
  func.func @transform_7(%arg0: i32, %arg1: i32) -> (i32, i32, i32) {
    %c0_i32 = arith.constant 0 : i32
    %c0_i32_0 = arith.constant 0 : i32
    %c0_i32_1 = arith.constant 0 : i32
    return %arg0, %c0_i32, %c0_i32_0 : i32, i32, i32
  }
}

module attributes {stable_mosaic.version = 11 : i64} {
  func.func @_decoder_layer_kernel(%arg0: i32, %arg1: memref<2xi32, #tpu.memory_space<smem>>, %arg2: memref<2xi32, #tpu.memory_space<smem>>, %arg3: memref<1x9x32xbf16, #tpu.memory_space<vmem>>, %arg4: memref<1x16x32xbf16, #tpu.memory_space<vmem>>, %arg5: memref<1x32xf32, #tpu.memory_space<vmem>>, %arg6: memref<1x32xf32, #tpu.memory_space<vmem>>, %arg7: memref<32x96xbf16, #tpu.memory_space<vmem>>, %arg8: memref<4x8x32xbf16, #tpu.memory_space<vmem>>, %arg9: memref<1x32xf32, #tpu.memory_space<vmem>>, %arg10: memref<1x32xf32, #tpu.memory_space<vmem>>, %arg11: memref<1x32xf32, #tpu.memory_space<vmem>>, %arg12: memref<32x32xbf16, #tpu.memory_space<vmem>>, %arg13: memref<32x64xbf16, #tpu.memory_space<vmem>>, %arg14: memref<4x8x32xbf16, #tpu.memory_space<vmem>>, %arg15: memref<1x32xf32, #tpu.memory_space<vmem>>, %arg16: memref<1x32xf32, #tpu.memory_space<vmem>>, %arg17: memref<1x32xf32, #tpu.memory_space<vmem>>, %arg18: memref<32x64xbf16, #tpu.memory_space<vmem>>, %arg19: memref<1x64xf32, #tpu.memory_space<vmem>>, %arg20: memref<64x32xbf16, #tpu.memory_space<vmem>>, %arg21: memref<1x32xf32, #tpu.memory_space<vmem>>, %arg22: memref<1x9x32xbf16, #tpu.memory_space<vmem>>) attributes {dimension_semantics = [#tpu.dimension_semantics<parallel>], iteration_bounds = array<i64: 2>, scalar_prefetch = 2 : i64, scratch_operands = 0 : i64, tpu.core_type = #tpu.core_type<tc>, window_params = [{transform_indices = @transform_0, window_bounds = array<i64: 1, 9, 32>}, {transform_indices = @transform_1, window_bounds = array<i64: 1, 16, 32>}, {pipeline_mode = #tpu.pipeline_mode<synchronous>, transform_indices = @transform_2, window_bounds = array<i64: 1, 32>}, {pipeline_mode = #tpu.pipeline_mode<synchronous>, transform_indices = @transform_3, window_bounds = array<i64: 1, 32>}, {pipeline_mode = #tpu.pipeline_mode<synchronous>, transform_indices = @transform_4, window_bounds = array<i64: 32, 96>}, {pipeline_mode = #tpu.pipeline_mode<synchronous>, transform_indices = @transform_5, window_bounds = array<i64: 4, 8, 32>}, {pipeline_mode = #tpu.pipeline_mode<synchronous>, transform_indices = @transform_6, window_bounds = array<i64: 1, 32>}, {pipeline_mode = #tpu.pipeline_mode<synchronous>, transform_indices = @transform_7, window_bounds = array<i64: 1, 32>}, {pipeline_mode = #tpu.pipeline_mode<synchronous>, transform_indices = @transform_8, window_bounds = array<i64: 1, 32>}, {pipeline_mode = #tpu.pipeline_mode<synchronous>, transform_indices = @transform_9, window_bounds = array<i64: 32, 32>}, {pipeline_mode = #tpu.pipeline_mode<synchronous>, transform_indices = @transform_10, window_bounds = array<i64: 32, 64>}, {pipeline_mode = #tpu.pipeline_mode<synchronous>, transform_indices = @transform_11, window_bounds = array<i64: 4, 8, 32>}, {pipeline_mode = #tpu.pipeline_mode<synchronous>, transform_indices = @transform_12, window_bounds = array<i64: 1, 32>}, {pipeline_mode = #tpu.pipeline_mode<synchronous>, transform_indices = @transform_13, window_bounds = array<i64: 1, 32>}, {pipeline_mode = #tpu.pipeline_mode<synchronous>, transform_indices = @transform_14, window_bounds = array<i64: 1, 32>}, {pipeline_mode = #tpu.pipeline_mode<synchronous>, transform_indices = @transform_15, window_bounds = array<i64: 32, 64>}, {pipeline_mode = #tpu.pipeline_mode<synchronous>, transform_indices = @transform_16, window_bounds = array<i64: 1, 64>}, {pipeline_mode = #tpu.pipeline_mode<synchronous>, transform_indices = @transform_17, window_bounds = array<i64: 64, 32>}, {pipeline_mode = #tpu.pipeline_mode<synchronous>, transform_indices = @transform_18, window_bounds = array<i64: 1, 32>}, {transform_indices = @transform_19, window_bounds = array<i64: 1, 9, 32>}]} {
    %0 = arith.index_cast %arg0 : i32 to index
    %1 = memref.load %arg1[%0] : memref<2xi32, #tpu.memory_space<smem>>
    %2 = arith.index_cast %arg0 : i32 to index
    %3 = memref.load %arg2[%2] : memref<2xi32, #tpu.memory_space<smem>>
    %c0 = arith.constant 0 : index
    %c0_0 = arith.constant 0 : index
    %c0_1 = arith.constant 0 : index
    %4 = vector.load %arg3[%c0, %c0_0, %c0_1] : memref<1x9x32xbf16, #tpu.memory_space<vmem>>, vector<1x9x32xbf16>
    %5 = vector.shape_cast %4 : vector<1x9x32xbf16> to vector<9x32xbf16>
    %6 = arith.extf %5 : vector<9x32xbf16> to vector<9x32xf32>
    %c0_2 = arith.constant 0 : index
    %c0_3 = arith.constant 0 : index
    %c0_4 = arith.constant 0 : index
    %7 = vector.load %arg4[%c0_2, %c0_3, %c0_4] : memref<1x16x32xbf16, #tpu.memory_space<vmem>>, vector<1x16x32xbf16>
    %8 = vector.shape_cast %7 : vector<1x16x32xbf16> to vector<16x32xbf16>
    %c0_5 = arith.constant 0 : index
    %c0_6 = arith.constant 0 : index
    %9 = vector.load %arg5[%c0_5, %c0_6] : memref<1x32xf32, #tpu.memory_space<vmem>>, vector<1x32xf32>
    %c0_7 = arith.constant 0 : index
    %c0_8 = arith.constant 0 : index
    %10 = vector.load %arg6[%c0_7, %c0_8] : memref<1x32xf32, #tpu.memory_space<vmem>>, vector<1x32xf32>
    %cst = arith.constant dense<0.000000e+00> : vector<9xf32>
    %11 = vector.multi_reduction <add>, %6, %cst [1] : vector<9x32xf32> to vector<9xf32>
    %12 = vector.shape_cast %11 : vector<9xf32> to vector<9x1xf32>
    %cst_9 = arith.constant 3.200000e+01 : f32
    %13 = vector.broadcast %cst_9 : f32 to vector<9x1xf32>
    %14 = arith.divf %12, %13 : vector<9x1xf32>
    %15 = vector.broadcast %14 : vector<9x1xf32> to vector<9x32xf32>
    %16 = arith.subf %6, %15 : vector<9x32xf32>
    %17 = arith.mulf %16, %16 : vector<9x32xf32>
    %cst_10 = arith.constant dense<0.000000e+00> : vector<9xf32>
    %18 = vector.multi_reduction <add>, %17, %cst_10 [1] : vector<9x32xf32> to vector<9xf32>
    %19 = vector.shape_cast %18 : vector<9xf32> to vector<9x1xf32>
    %cst_11 = arith.constant 3.200000e+01 : f32
    %20 = vector.broadcast %cst_11 : f32 to vector<9x1xf32>
    %21 = arith.divf %19, %20 : vector<9x1xf32>
    %22 = vector.broadcast %14 : vector<9x1xf32> to vector<9x32xf32>
    %23 = arith.subf %6, %22 : vector<9x32xf32>
    %cst_12 = arith.constant 9.99999997E-7 : f32
    %24 = vector.broadcast %cst_12 : f32 to vector<9x1xf32>
    %25 = arith.addf %21, %24 : vector<9x1xf32>
    %26 = math.rsqrt %25 : vector<9x1xf32>
    %27 = vector.broadcast %26 : vector<9x1xf32> to vector<9x32xf32>
    %28 = arith.mulf %23, %27 : vector<9x32xf32>
    %29 = vector.broadcast %9 : vector<1x32xf32> to vector<9x32xf32>
    %30 = arith.mulf %28, %29 : vector<9x32xf32>
    %31 = vector.broadcast %10 : vector<1x32xf32> to vector<9x32xf32>
    %32 = arith.addf %30, %31 : vector<9x32xf32>
    %33 = arith.truncf %32 : vector<9x32xf32> to vector<9x32xbf16>
    %c0_13 = arith.constant 0 : index
    %c0_14 = arith.constant 0 : index
    %34 = vector.load %arg7[%c0_13, %c0_14] : memref<32x96xbf16, #tpu.memory_space<vmem>>, vector<32x96xbf16>
    %cst_15 = arith.constant dense<0.000000e+00> : vector<9x96xf32>
    %35 = tpu.matmul %33, %34, %cst_15 {dimension_numbers = #tpu.dot_dimension_numbers<[1], [0], [0], [1], [0, 0, 1, 1], [], []>} : vector<9x32xbf16>, vector<32x96xbf16>, vector<9x96xf32> -> vector<9x96xf32>
    %36 = tpu.iota {dimensions = array<i32: 1>} : vector<9x9xi32>
    %37 = tpu.iota {dimensions = array<i32: 0>} : vector<9x9xi32>
    %38 = vector.broadcast %1 : i32 to vector<9x9xi32>
    %39 = arith.cmpi slt, %36, %38 : vector<9x9xi32>
    %40 = arith.cmpi sle, %36, %37 : vector<9x9xi32>
    %41 = arith.andi %39, %40 : vector<9x9xi1>
    %42 = vector.extract_strided_slice %35 {offsets = [0, 0], sizes = [9, 32], strides = [1, 1]} : vector<9x96xf32> to vector<9x32xf32>
    %43 = vector.extract_strided_slice %35 {offsets = [0, 32], sizes = [9, 32], strides = [1, 1]} : vector<9x96xf32> to vector<9x32xf32>
    %44 = vector.extract_strided_slice %35 {offsets = [0, 64], sizes = [9, 32], strides = [1, 1]} : vector<9x96xf32> to vector<9x32xf32>
    %c0_16 = arith.constant 0 : index
    %c0_17 = arith.constant 0 : index
    %45 = vector.load %arg9[%c0_16, %c0_17] : memref<1x32xf32, #tpu.memory_space<vmem>>, vector<1x32xf32>
    %cst_18 = arith.constant 0.000000e+00 : f32
    %46 = vector.broadcast %cst_18 : f32 to vector<9x32xf32>
    %47 = vector.extract_strided_slice %42 {offsets = [0, 0], sizes = [9, 8], strides = [1, 1]} : vector<9x32xf32> to vector<9x8xf32>
    %48 = arith.truncf %47 : vector<9x8xf32> to vector<9x8xbf16>
    %49 = vector.extract_strided_slice %43 {offsets = [0, 0], sizes = [9, 8], strides = [1, 1]} : vector<9x32xf32> to vector<9x8xf32>
    %50 = arith.truncf %49 : vector<9x8xf32> to vector<9x8xbf16>
    %51 = vector.extract_strided_slice %44 {offsets = [0, 0], sizes = [9, 8], strides = [1, 1]} : vector<9x32xf32> to vector<9x8xf32>
    %52 = arith.truncf %51 : vector<9x8xf32> to vector<9x8xbf16>
    %53 = tpu.transpose %50, [1, 0] : vector<9x8xbf16> -> vector<8x9xbf16>
    %cst_19 = arith.constant dense<0.000000e+00> : vector<9x9xf32>
    %54 = tpu.matmul %48, %53, %cst_19 {dimension_numbers = #tpu.dot_dimension_numbers<[1], [0], [0], [1], [0, 0, 1, 1], [], []>} : vector<9x8xbf16>, vector<8x9xbf16>, vector<9x9xf32> -> vector<9x9xf32>
    %cst_20 = arith.constant 0.353553385 : f32
    %55 = vector.broadcast %cst_20 : f32 to vector<9x9xf32>
    %56 = arith.mulf %54, %55 : vector<9x9xf32>
    %cst_21 = arith.constant -3.40282347E+38 : f32
    %57 = vector.broadcast %cst_21 : f32 to vector<9x9xf32>
    %58 = arith.select %41, %56, %57 : vector<9x9xi1>, vector<9x9xf32>
    %cst_22 = arith.constant dense<0xFF800000> : vector<9xf32>
    %59 = vector.multi_reduction <maximumf>, %58, %cst_22 [1] : vector<9x9xf32> to vector<9xf32>
    %60 = vector.shape_cast %59 : vector<9xf32> to vector<9x1xf32>
    %61 = vector.broadcast %60 : vector<9x1xf32> to vector<9x9xf32>
    %62 = arith.subf %58, %61 : vector<9x9xf32>
    %63 = math.exp %62 : vector<9x9xf32>
    %cst_23 = arith.constant dense<0.000000e+00> : vector<9xf32>
    %64 = vector.multi_reduction <add>, %63, %cst_23 [1] : vector<9x9xf32> to vector<9xf32>
    %65 = vector.shape_cast %64 : vector<9xf32> to vector<9x1xf32>
    %66 = tpu.reciprocal %65 {approx = true} : vector<9x1xf32> -> vector<9x1xf32>
    %67 = vector.broadcast %66 : vector<9x1xf32> to vector<9x9xf32>
    %68 = arith.mulf %63, %67 : vector<9x9xf32>
    %69 = arith.truncf %68 : vector<9x9xf32> to vector<9x9xbf16>
    %cst_24 = arith.constant dense<0.000000e+00> : vector<9x8xf32>
    %70 = tpu.matmul %69, %52, %cst_24 {dimension_numbers = #tpu.dot_dimension_numbers<[1], [0], [0], [1], [0, 0, 1, 1], [], []>} : vector<9x9xbf16>, vector<9x8xbf16>, vector<9x8xf32> -> vector<9x8xf32>
    %71 = arith.truncf %70 : vector<9x8xf32> to vector<9x8xbf16>
    %c0_25 = arith.constant 0 : index
    %c0_26 = arith.constant 0 : index
    %c0_27 = arith.constant 0 : index
    %72 = vector.load %arg8[%c0_25, %c0_26, %c0_27] : memref<4x8x32xbf16, #tpu.memory_space<vmem>>, vector<1x8x32xbf16>
    %73 = vector.shape_cast %72 : vector<1x8x32xbf16> to vector<8x32xbf16>
    %cst_28 = arith.constant dense<0.000000e+00> : vector<9x32xf32>
    %74 = tpu.matmul %71, %73, %cst_28 {dimension_numbers = #tpu.dot_dimension_numbers<[1], [0], [0], [1], [0, 0, 1, 1], [], []>} : vector<9x8xbf16>, vector<8x32xbf16>, vector<9x32xf32> -> vector<9x32xf32>
    %75 = arith.addf %46, %74 : vector<9x32xf32>
    %76 = vector.extract_strided_slice %42 {offsets = [0, 8], sizes = [9, 8], strides = [1, 1]} : vector<9x32xf32> to vector<9x8xf32>
    %77 = arith.truncf %76 : vector<9x8xf32> to vector<9x8xbf16>
    %78 = vector.extract_strided_slice %43 {offsets = [0, 8], sizes = [9, 8], strides = [1, 1]} : vector<9x32xf32> to vector<9x8xf32>
    %79 = arith.truncf %78 : vector<9x8xf32> to vector<9x8xbf16>
    %80 = vector.extract_strided_slice %44 {offsets = [0, 8], sizes = [9, 8], strides = [1, 1]} : vector<9x32xf32> to vector<9x8xf32>
    %81 = arith.truncf %80 : vector<9x8xf32> to vector<9x8xbf16>
    %82 = tpu.transpose %79, [1, 0] : vector<9x8xbf16> -> vector<8x9xbf16>
    %cst_29 = arith.constant dense<0.000000e+00> : vector<9x9xf32>
    %83 = tpu.matmul %77, %82, %cst_29 {dimension_numbers = #tpu.dot_dimension_numbers<[1], [0], [0], [1], [0, 0, 1, 1], [], []>} : vector<9x8xbf16>, vector<8x9xbf16>, vector<9x9xf32> -> vector<9x9xf32>
    %cst_30 = arith.constant 0.353553385 : f32
    %84 = vector.broadcast %cst_30 : f32 to vector<9x9xf32>
    %85 = arith.mulf %83, %84 : vector<9x9xf32>
    %cst_31 = arith.constant -3.40282347E+38 : f32
    %86 = vector.broadcast %cst_31 : f32 to vector<9x9xf32>
    %87 = arith.select %41, %85, %86 : vector<9x9xi1>, vector<9x9xf32>
    %cst_32 = arith.constant dense<0xFF800000> : vector<9xf32>
    %88 = vector.multi_reduction <maximumf>, %87, %cst_32 [1] : vector<9x9xf32> to vector<9xf32>
    %89 = vector.shape_cast %88 : vector<9xf32> to vector<9x1xf32>
    %90 = vector.broadcast %89 : vector<9x1xf32> to vector<9x9xf32>
    %91 = arith.subf %87, %90 : vector<9x9xf32>
    %92 = math.exp %91 : vector<9x9xf32>
    %cst_33 = arith.constant dense<0.000000e+00> : vector<9xf32>
    %93 = vector.multi_reduction <add>, %92, %cst_33 [1] : vector<9x9xf32> to vector<9xf32>
    %94 = vector.shape_cast %93 : vector<9xf32> to vector<9x1xf32>
    %95 = tpu.reciprocal %94 {approx = true} : vector<9x1xf32> -> vector<9x1xf32>
    %96 = vector.broadcast %95 : vector<9x1xf32> to vector<9x9xf32>
    %97 = arith.mulf %92, %96 : vector<9x9xf32>
    %98 = arith.truncf %97 : vector<9x9xf32> to vector<9x9xbf16>
    %cst_34 = arith.constant dense<0.000000e+00> : vector<9x8xf32>
    %99 = tpu.matmul %98, %81, %cst_34 {dimension_numbers = #tpu.dot_dimension_numbers<[1], [0], [0], [1], [0, 0, 1, 1], [], []>} : vector<9x9xbf16>, vector<9x8xbf16>, vector<9x8xf32> -> vector<9x8xf32>
    %100 = arith.truncf %99 : vector<9x8xf32> to vector<9x8xbf16>
    %c1 = arith.constant 1 : index
    %c0_35 = arith.constant 0 : index
    %c0_36 = arith.constant 0 : index
    %101 = vector.load %arg8[%c1, %c0_35, %c0_36] : memref<4x8x32xbf16, #tpu.memory_space<vmem>>, vector<1x8x32xbf16>
    %102 = vector.shape_cast %101 : vector<1x8x32xbf16> to vector<8x32xbf16>
    %cst_37 = arith.constant dense<0.000000e+00> : vector<9x32xf32>
    %103 = tpu.matmul %100, %102, %cst_37 {dimension_numbers = #tpu.dot_dimension_numbers<[1], [0], [0], [1], [0, 0, 1, 1], [], []>} : vector<9x8xbf16>, vector<8x32xbf16>, vector<9x32xf32> -> vector<9x32xf32>
    %104 = arith.addf %75, %103 : vector<9x32xf32>
    %105 = vector.extract_strided_slice %42 {offsets = [0, 16], sizes = [9, 8], strides = [1, 1]} : vector<9x32xf32> to vector<9x8xf32>
    %106 = arith.truncf %105 : vector<9x8xf32> to vector<9x8xbf16>
    %107 = vector.extract_strided_slice %43 {offsets = [0, 16], sizes = [9, 8], strides = [1, 1]} : vector<9x32xf32> to vector<9x8xf32>
    %108 = arith.truncf %107 : vector<9x8xf32> to vector<9x8xbf16>
    %109 = vector.extract_strided_slice %44 {offsets = [0, 16], sizes = [9, 8], strides = [1, 1]} : vector<9x32xf32> to vector<9x8xf32>
    %110 = arith.truncf %109 : vector<9x8xf32> to vector<9x8xbf16>
    %111 = tpu.transpose %108, [1, 0] : vector<9x8xbf16> -> vector<8x9xbf16>
    %cst_38 = arith.constant dense<0.000000e+00> : vector<9x9xf32>
    %112 = tpu.matmul %106, %111, %cst_38 {dimension_numbers = #tpu.dot_dimension_numbers<[1], [0], [0], [1], [0, 0, 1, 1], [], []>} : vector<9x8xbf16>, vector<8x9xbf16>, vector<9x9xf32> -> vector<9x9xf32>
    %cst_39 = arith.constant 0.353553385 : f32
    %113 = vector.broadcast %cst_39 : f32 to vector<9x9xf32>
    %114 = arith.mulf %112, %113 : vector<9x9xf32>
    %cst_40 = arith.constant -3.40282347E+38 : f32
    %115 = vector.broadcast %cst_40 : f32 to vector<9x9xf32>
    %116 = arith.select %41, %114, %115 : vector<9x9xi1>, vector<9x9xf32>
    %cst_41 = arith.constant dense<0xFF800000> : vector<9xf32>
    %117 = vector.multi_reduction <maximumf>, %116, %cst_41 [1] : vector<9x9xf32> to vector<9xf32>
    %118 = vector.shape_cast %117 : vector<9xf32> to vector<9x1xf32>
    %119 = vector.broadcast %118 : vector<9x1xf32> to vector<9x9xf32>
    %120 = arith.subf %116, %119 : vector<9x9xf32>
    %121 = math.exp %120 : vector<9x9xf32>
    %cst_42 = arith.constant dense<0.000000e+00> : vector<9xf32>
    %122 = vector.multi_reduction <add>, %121, %cst_42 [1] : vector<9x9xf32> to vector<9xf32>
    %123 = vector.shape_cast %122 : vector<9xf32> to vector<9x1xf32>
    %124 = tpu.reciprocal %123 {approx = true} : vector<9x1xf32> -> vector<9x1xf32>
    %125 = vector.broadcast %124 : vector<9x1xf32> to vector<9x9xf32>
    %126 = arith.mulf %121, %125 : vector<9x9xf32>
    %127 = arith.truncf %126 : vector<9x9xf32> to vector<9x9xbf16>
    %cst_43 = arith.constant dense<0.000000e+00> : vector<9x8xf32>
    %128 = tpu.matmul %127, %110, %cst_43 {dimension_numbers = #tpu.dot_dimension_numbers<[1], [0], [0], [1], [0, 0, 1, 1], [], []>} : vector<9x9xbf16>, vector<9x8xbf16>, vector<9x8xf32> -> vector<9x8xf32>
    %129 = arith.truncf %128 : vector<9x8xf32> to vector<9x8xbf16>
    %c2 = arith.constant 2 : index
    %c0_44 = arith.constant 0 : index
    %c0_45 = arith.constant 0 : index
    %130 = vector.load %arg8[%c2, %c0_44, %c0_45] : memref<4x8x32xbf16, #tpu.memory_space<vmem>>, vector<1x8x32xbf16>
    %131 = vector.shape_cast %130 : vector<1x8x32xbf16> to vector<8x32xbf16>
    %cst_46 = arith.constant dense<0.000000e+00> : vector<9x32xf32>
    %132 = tpu.matmul %129, %131, %cst_46 {dimension_numbers = #tpu.dot_dimension_numbers<[1], [0], [0], [1], [0, 0, 1, 1], [], []>} : vector<9x8xbf16>, vector<8x32xbf16>, vector<9x32xf32> -> vector<9x32xf32>
    %133 = arith.addf %104, %132 : vector<9x32xf32>
    %134 = vector.extract_strided_slice %42 {offsets = [0, 24], sizes = [9, 8], strides = [1, 1]} : vector<9x32xf32> to vector<9x8xf32>
    %135 = arith.truncf %134 : vector<9x8xf32> to vector<9x8xbf16>
    %136 = vector.extract_strided_slice %43 {offsets = [0, 24], sizes = [9, 8], strides = [1, 1]} : vector<9x32xf32> to vector<9x8xf32>
    %137 = arith.truncf %136 : vector<9x8xf32> to vector<9x8xbf16>
    %138 = vector.extract_strided_slice %44 {offsets = [0, 24], sizes = [9, 8], strides = [1, 1]} : vector<9x32xf32> to vector<9x8xf32>
    %139 = arith.truncf %138 : vector<9x8xf32> to vector<9x8xbf16>
    %140 = tpu.transpose %137, [1, 0] : vector<9x8xbf16> -> vector<8x9xbf16>
    %cst_47 = arith.constant dense<0.000000e+00> : vector<9x9xf32>
    %141 = tpu.matmul %135, %140, %cst_47 {dimension_numbers = #tpu.dot_dimension_numbers<[1], [0], [0], [1], [0, 0, 1, 1], [], []>} : vector<9x8xbf16>, vector<8x9xbf16>, vector<9x9xf32> -> vector<9x9xf32>
    %cst_48 = arith.constant 0.353553385 : f32
    %142 = vector.broadcast %cst_48 : f32 to vector<9x9xf32>
    %143 = arith.mulf %141, %142 : vector<9x9xf32>
    %cst_49 = arith.constant -3.40282347E+38 : f32
    %144 = vector.broadcast %cst_49 : f32 to vector<9x9xf32>
    %145 = arith.select %41, %143, %144 : vector<9x9xi1>, vector<9x9xf32>
    %cst_50 = arith.constant dense<0xFF800000> : vector<9xf32>
    %146 = vector.multi_reduction <maximumf>, %145, %cst_50 [1] : vector<9x9xf32> to vector<9xf32>
    %147 = vector.shape_cast %146 : vector<9xf32> to vector<9x1xf32>
    %148 = vector.broadcast %147 : vector<9x1xf32> to vector<9x9xf32>
    %149 = arith.subf %145, %148 : vector<9x9xf32>
    %150 = math.exp %149 : vector<9x9xf32>
    %cst_51 = arith.constant dense<0.000000e+00> : vector<9xf32>
    %151 = vector.multi_reduction <add>, %150, %cst_51 [1] : vector<9x9xf32> to vector<9xf32>
    %152 = vector.shape_cast %151 : vector<9xf32> to vector<9x1xf32>
    %153 = tpu.reciprocal %152 {approx = true} : vector<9x1xf32> -> vector<9x1xf32>
    %154 = vector.broadcast %153 : vector<9x1xf32> to vector<9x9xf32>
    %155 = arith.mulf %150, %154 : vector<9x9xf32>
    %156 = arith.truncf %155 : vector<9x9xf32> to vector<9x9xbf16>
    %cst_52 = arith.constant dense<0.000000e+00> : vector<9x8xf32>
    %157 = tpu.matmul %156, %139, %cst_52 {dimension_numbers = #tpu.dot_dimension_numbers<[1], [0], [0], [1], [0, 0, 1, 1], [], []>} : vector<9x9xbf16>, vector<9x8xbf16>, vector<9x8xf32> -> vector<9x8xf32>
    %158 = arith.truncf %157 : vector<9x8xf32> to vector<9x8xbf16>
    %c3 = arith.constant 3 : index
    %c0_53 = arith.constant 0 : index
    %c0_54 = arith.constant 0 : index
    %159 = vector.load %arg8[%c3, %c0_53, %c0_54] : memref<4x8x32xbf16, #tpu.memory_space<vmem>>, vector<1x8x32xbf16>
    %160 = vector.shape_cast %159 : vector<1x8x32xbf16> to vector<8x32xbf16>
    %cst_55 = arith.constant dense<0.000000e+00> : vector<9x32xf32>
    %161 = tpu.matmul %158, %160, %cst_55 {dimension_numbers = #tpu.dot_dimension_numbers<[1], [0], [0], [1], [0, 0, 1, 1], [], []>} : vector<9x8xbf16>, vector<8x32xbf16>, vector<9x32xf32> -> vector<9x32xf32>
    %162 = arith.addf %133, %161 : vector<9x32xf32>
    %163 = vector.broadcast %45 : vector<1x32xf32> to vector<9x32xf32>
    %164 = arith.addf %162, %163 : vector<9x32xf32>
    %165 = arith.addf %6, %164 : vector<9x32xf32>
    %c0_56 = arith.constant 0 : index
    %c0_57 = arith.constant 0 : index
    %166 = vector.load %arg10[%c0_56, %c0_57] : memref<1x32xf32, #tpu.memory_space<vmem>>, vector<1x32xf32>
    %c0_58 = arith.constant 0 : index
    %c0_59 = arith.constant 0 : index
    %167 = vector.load %arg11[%c0_58, %c0_59] : memref<1x32xf32, #tpu.memory_space<vmem>>, vector<1x32xf32>
    %cst_60 = arith.constant dense<0.000000e+00> : vector<9xf32>
    %168 = vector.multi_reduction <add>, %165, %cst_60 [1] : vector<9x32xf32> to vector<9xf32>
    %169 = vector.shape_cast %168 : vector<9xf32> to vector<9x1xf32>
    %cst_61 = arith.constant 3.200000e+01 : f32
    %170 = vector.broadcast %cst_61 : f32 to vector<9x1xf32>
    %171 = arith.divf %169, %170 : vector<9x1xf32>
    %172 = vector.broadcast %171 : vector<9x1xf32> to vector<9x32xf32>
    %173 = arith.subf %165, %172 : vector<9x32xf32>
    %174 = arith.mulf %173, %173 : vector<9x32xf32>
    %cst_62 = arith.constant dense<0.000000e+00> : vector<9xf32>
    %175 = vector.multi_reduction <add>, %174, %cst_62 [1] : vector<9x32xf32> to vector<9xf32>
    %176 = vector.shape_cast %175 : vector<9xf32> to vector<9x1xf32>
    %cst_63 = arith.constant 3.200000e+01 : f32
    %177 = vector.broadcast %cst_63 : f32 to vector<9x1xf32>
    %178 = arith.divf %176, %177 : vector<9x1xf32>
    %179 = vector.broadcast %171 : vector<9x1xf32> to vector<9x32xf32>
    %180 = arith.subf %165, %179 : vector<9x32xf32>
    %cst_64 = arith.constant 9.99999997E-7 : f32
    %181 = vector.broadcast %cst_64 : f32 to vector<9x1xf32>
    %182 = arith.addf %178, %181 : vector<9x1xf32>
    %183 = math.rsqrt %182 : vector<9x1xf32>
    %184 = vector.broadcast %183 : vector<9x1xf32> to vector<9x32xf32>
    %185 = arith.mulf %180, %184 : vector<9x32xf32>
    %186 = vector.broadcast %166 : vector<1x32xf32> to vector<9x32xf32>
    %187 = arith.mulf %185, %186 : vector<9x32xf32>
    %188 = vector.broadcast %167 : vector<1x32xf32> to vector<9x32xf32>
    %189 = arith.addf %187, %188 : vector<9x32xf32>
    %190 = arith.truncf %189 : vector<9x32xf32> to vector<9x32xbf16>
    %c0_65 = arith.constant 0 : index
    %c0_66 = arith.constant 0 : index
    %191 = vector.load %arg12[%c0_65, %c0_66] : memref<32x32xbf16, #tpu.memory_space<vmem>>, vector<32x32xbf16>
    %cst_67 = arith.constant dense<0.000000e+00> : vector<9x32xf32>
    %192 = tpu.matmul %190, %191, %cst_67 {dimension_numbers = #tpu.dot_dimension_numbers<[1], [0], [0], [1], [0, 0, 1, 1], [], []>} : vector<9x32xbf16>, vector<32x32xbf16>, vector<9x32xf32> -> vector<9x32xf32>
    %c0_68 = arith.constant 0 : index
    %c0_69 = arith.constant 0 : index
    %193 = vector.load %arg13[%c0_68, %c0_69] : memref<32x64xbf16, #tpu.memory_space<vmem>>, vector<32x64xbf16>
    %cst_70 = arith.constant dense<0.000000e+00> : vector<16x64xf32>
    %194 = tpu.matmul %8, %193, %cst_70 {dimension_numbers = #tpu.dot_dimension_numbers<[1], [0], [0], [1], [0, 0, 1, 1], [], []>} : vector<16x32xbf16>, vector<32x64xbf16>, vector<16x64xf32> -> vector<16x64xf32>
    %195 = tpu.iota {dimensions = array<i32: 1>} : vector<9x16xi32>
    %196 = vector.broadcast %3 : i32 to vector<9x16xi32>
    %197 = arith.cmpi slt, %195, %196 : vector<9x16xi32>
    %198 = vector.extract_strided_slice %194 {offsets = [0, 0], sizes = [16, 32], strides = [1, 1]} : vector<16x64xf32> to vector<16x32xf32>
    %199 = vector.extract_strided_slice %194 {offsets = [0, 32], sizes = [16, 32], strides = [1, 1]} : vector<16x64xf32> to vector<16x32xf32>
    %c0_71 = arith.constant 0 : index
    %c0_72 = arith.constant 0 : index
    %200 = vector.load %arg15[%c0_71, %c0_72] : memref<1x32xf32, #tpu.memory_space<vmem>>, vector<1x32xf32>
    %cst_73 = arith.constant 0.000000e+00 : f32
    %201 = vector.broadcast %cst_73 : f32 to vector<9x32xf32>
    %202 = vector.extract_strided_slice %192 {offsets = [0, 0], sizes = [9, 8], strides = [1, 1]} : vector<9x32xf32> to vector<9x8xf32>
    %203 = arith.truncf %202 : vector<9x8xf32> to vector<9x8xbf16>
    %204 = vector.extract_strided_slice %198 {offsets = [0, 0], sizes = [16, 8], strides = [1, 1]} : vector<16x32xf32> to vector<16x8xf32>
    %205 = arith.truncf %204 : vector<16x8xf32> to vector<16x8xbf16>
    %206 = vector.extract_strided_slice %199 {offsets = [0, 0], sizes = [16, 8], strides = [1, 1]} : vector<16x32xf32> to vector<16x8xf32>
    %207 = arith.truncf %206 : vector<16x8xf32> to vector<16x8xbf16>
    %208 = tpu.transpose %205, [1, 0] : vector<16x8xbf16> -> vector<8x16xbf16>
    %cst_74 = arith.constant dense<0.000000e+00> : vector<9x16xf32>
    %209 = tpu.matmul %203, %208, %cst_74 {dimension_numbers = #tpu.dot_dimension_numbers<[1], [0], [0], [1], [0, 0, 1, 1], [], []>} : vector<9x8xbf16>, vector<8x16xbf16>, vector<9x16xf32> -> vector<9x16xf32>
    %cst_75 = arith.constant 0.353553385 : f32
    %210 = vector.broadcast %cst_75 : f32 to vector<9x16xf32>
    %211 = arith.mulf %209, %210 : vector<9x16xf32>
    %cst_76 = arith.constant -3.40282347E+38 : f32
    %212 = vector.broadcast %cst_76 : f32 to vector<9x16xf32>
    %213 = arith.select %197, %211, %212 : vector<9x16xi1>, vector<9x16xf32>
    %cst_77 = arith.constant dense<0xFF800000> : vector<9xf32>
    %214 = vector.multi_reduction <maximumf>, %213, %cst_77 [1] : vector<9x16xf32> to vector<9xf32>
    %215 = vector.shape_cast %214 : vector<9xf32> to vector<9x1xf32>
    %216 = vector.broadcast %215 : vector<9x1xf32> to vector<9x16xf32>
    %217 = arith.subf %213, %216 : vector<9x16xf32>
    %218 = math.exp %217 : vector<9x16xf32>
    %cst_78 = arith.constant dense<0.000000e+00> : vector<9xf32>
    %219 = vector.multi_reduction <add>, %218, %cst_78 [1] : vector<9x16xf32> to vector<9xf32>
    %220 = vector.shape_cast %219 : vector<9xf32> to vector<9x1xf32>
    %221 = tpu.reciprocal %220 {approx = true} : vector<9x1xf32> -> vector<9x1xf32>
    %222 = vector.broadcast %221 : vector<9x1xf32> to vector<9x16xf32>
    %223 = arith.mulf %218, %222 : vector<9x16xf32>
    %224 = arith.truncf %223 : vector<9x16xf32> to vector<9x16xbf16>
    %cst_79 = arith.constant dense<0.000000e+00> : vector<9x8xf32>
    %225 = tpu.matmul %224, %207, %cst_79 {dimension_numbers = #tpu.dot_dimension_numbers<[1], [0], [0], [1], [0, 0, 1, 1], [], []>} : vector<9x16xbf16>, vector<16x8xbf16>, vector<9x8xf32> -> vector<9x8xf32>
    %226 = arith.truncf %225 : vector<9x8xf32> to vector<9x8xbf16>
    %c0_80 = arith.constant 0 : index
    %c0_81 = arith.constant 0 : index
    %c0_82 = arith.constant 0 : index
    %227 = vector.load %arg14[%c0_80, %c0_81, %c0_82] : memref<4x8x32xbf16, #tpu.memory_space<vmem>>, vector<1x8x32xbf16>
    %228 = vector.shape_cast %227 : vector<1x8x32xbf16> to vector<8x32xbf16>
    %cst_83 = arith.constant dense<0.000000e+00> : vector<9x32xf32>
    %229 = tpu.matmul %226, %228, %cst_83 {dimension_numbers = #tpu.dot_dimension_numbers<[1], [0], [0], [1], [0, 0, 1, 1], [], []>} : vector<9x8xbf16>, vector<8x32xbf16>, vector<9x32xf32> -> vector<9x32xf32>
    %230 = arith.addf %201, %229 : vector<9x32xf32>
    %231 = vector.extract_strided_slice %192 {offsets = [0, 8], sizes = [9, 8], strides = [1, 1]} : vector<9x32xf32> to vector<9x8xf32>
    %232 = arith.truncf %231 : vector<9x8xf32> to vector<9x8xbf16>
    %233 = vector.extract_strided_slice %198 {offsets = [0, 8], sizes = [16, 8], strides = [1, 1]} : vector<16x32xf32> to vector<16x8xf32>
    %234 = arith.truncf %233 : vector<16x8xf32> to vector<16x8xbf16>
    %235 = vector.extract_strided_slice %199 {offsets = [0, 8], sizes = [16, 8], strides = [1, 1]} : vector<16x32xf32> to vector<16x8xf32>
    %236 = arith.truncf %235 : vector<16x8xf32> to vector<16x8xbf16>
    %237 = tpu.transpose %234, [1, 0] : vector<16x8xbf16> -> vector<8x16xbf16>
    %cst_84 = arith.constant dense<0.000000e+00> : vector<9x16xf32>
    %238 = tpu.matmul %232, %237, %cst_84 {dimension_numbers = #tpu.dot_dimension_numbers<[1], [0], [0], [1], [0, 0, 1, 1], [], []>} : vector<9x8xbf16>, vector<8x16xbf16>, vector<9x16xf32> -> vector<9x16xf32>
    %cst_85 = arith.constant 0.353553385 : f32
    %239 = vector.broadcast %cst_85 : f32 to vector<9x16xf32>
    %240 = arith.mulf %238, %239 : vector<9x16xf32>
    %cst_86 = arith.constant -3.40282347E+38 : f32
    %241 = vector.broadcast %cst_86 : f32 to vector<9x16xf32>
    %242 = arith.select %197, %240, %241 : vector<9x16xi1>, vector<9x16xf32>
    %cst_87 = arith.constant dense<0xFF800000> : vector<9xf32>
    %243 = vector.multi_reduction <maximumf>, %242, %cst_87 [1] : vector<9x16xf32> to vector<9xf32>
    %244 = vector.shape_cast %243 : vector<9xf32> to vector<9x1xf32>
    %245 = vector.broadcast %244 : vector<9x1xf32> to vector<9x16xf32>
    %246 = arith.subf %242, %245 : vector<9x16xf32>
    %247 = math.exp %246 : vector<9x16xf32>
    %cst_88 = arith.constant dense<0.000000e+00> : vector<9xf32>
    %248 = vector.multi_reduction <add>, %247, %cst_88 [1] : vector<9x16xf32> to vector<9xf32>
    %249 = vector.shape_cast %248 : vector<9xf32> to vector<9x1xf32>
    %250 = tpu.reciprocal %249 {approx = true} : vector<9x1xf32> -> vector<9x1xf32>
    %251 = vector.broadcast %250 : vector<9x1xf32> to vector<9x16xf32>
    %252 = arith.mulf %247, %251 : vector<9x16xf32>
    %253 = arith.truncf %252 : vector<9x16xf32> to vector<9x16xbf16>
    %cst_89 = arith.constant dense<0.000000e+00> : vector<9x8xf32>
    %254 = tpu.matmul %253, %236, %cst_89 {dimension_numbers = #tpu.dot_dimension_numbers<[1], [0], [0], [1], [0, 0, 1, 1], [], []>} : vector<9x16xbf16>, vector<16x8xbf16>, vector<9x8xf32> -> vector<9x8xf32>
    %255 = arith.truncf %254 : vector<9x8xf32> to vector<9x8xbf16>
    %c1_90 = arith.constant 1 : index
    %c0_91 = arith.constant 0 : index
    %c0_92 = arith.constant 0 : index
    %256 = vector.load %arg14[%c1_90, %c0_91, %c0_92] : memref<4x8x32xbf16, #tpu.memory_space<vmem>>, vector<1x8x32xbf16>
    %257 = vector.shape_cast %256 : vector<1x8x32xbf16> to vector<8x32xbf16>
    %cst_93 = arith.constant dense<0.000000e+00> : vector<9x32xf32>
    %258 = tpu.matmul %255, %257, %cst_93 {dimension_numbers = #tpu.dot_dimension_numbers<[1], [0], [0], [1], [0, 0, 1, 1], [], []>} : vector<9x8xbf16>, vector<8x32xbf16>, vector<9x32xf32> -> vector<9x32xf32>
    %259 = arith.addf %230, %258 : vector<9x32xf32>
    %260 = vector.extract_strided_slice %192 {offsets = [0, 16], sizes = [9, 8], strides = [1, 1]} : vector<9x32xf32> to vector<9x8xf32>
    %261 = arith.truncf %260 : vector<9x8xf32> to vector<9x8xbf16>
    %262 = vector.extract_strided_slice %198 {offsets = [0, 16], sizes = [16, 8], strides = [1, 1]} : vector<16x32xf32> to vector<16x8xf32>
    %263 = arith.truncf %262 : vector<16x8xf32> to vector<16x8xbf16>
    %264 = vector.extract_strided_slice %199 {offsets = [0, 16], sizes = [16, 8], strides = [1, 1]} : vector<16x32xf32> to vector<16x8xf32>
    %265 = arith.truncf %264 : vector<16x8xf32> to vector<16x8xbf16>
    %266 = tpu.transpose %263, [1, 0] : vector<16x8xbf16> -> vector<8x16xbf16>
    %cst_94 = arith.constant dense<0.000000e+00> : vector<9x16xf32>
    %267 = tpu.matmul %261, %266, %cst_94 {dimension_numbers = #tpu.dot_dimension_numbers<[1], [0], [0], [1], [0, 0, 1, 1], [], []>} : vector<9x8xbf16>, vector<8x16xbf16>, vector<9x16xf32> -> vector<9x16xf32>
    %cst_95 = arith.constant 0.353553385 : f32
    %268 = vector.broadcast %cst_95 : f32 to vector<9x16xf32>
    %269 = arith.mulf %267, %268 : vector<9x16xf32>
    %cst_96 = arith.constant -3.40282347E+38 : f32
    %270 = vector.broadcast %cst_96 : f32 to vector<9x16xf32>
    %271 = arith.select %197, %269, %270 : vector<9x16xi1>, vector<9x16xf32>
    %cst_97 = arith.constant dense<0xFF800000> : vector<9xf32>
    %272 = vector.multi_reduction <maximumf>, %271, %cst_97 [1] : vector<9x16xf32> to vector<9xf32>
    %273 = vector.shape_cast %272 : vector<9xf32> to vector<9x1xf32>
    %274 = vector.broadcast %273 : vector<9x1xf32> to vector<9x16xf32>
    %275 = arith.subf %271, %274 : vector<9x16xf32>
    %276 = math.exp %275 : vector<9x16xf32>
    %cst_98 = arith.constant dense<0.000000e+00> : vector<9xf32>
    %277 = vector.multi_reduction <add>, %276, %cst_98 [1] : vector<9x16xf32> to vector<9xf32>
    %278 = vector.shape_cast %277 : vector<9xf32> to vector<9x1xf32>
    %279 = tpu.reciprocal %278 {approx = true} : vector<9x1xf32> -> vector<9x1xf32>
    %280 = vector.broadcast %279 : vector<9x1xf32> to vector<9x16xf32>
    %281 = arith.mulf %276, %280 : vector<9x16xf32>
    %282 = arith.truncf %281 : vector<9x16xf32> to vector<9x16xbf16>
    %cst_99 = arith.constant dense<0.000000e+00> : vector<9x8xf32>
    %283 = tpu.matmul %282, %265, %cst_99 {dimension_numbers = #tpu.dot_dimension_numbers<[1], [0], [0], [1], [0, 0, 1, 1], [], []>} : vector<9x16xbf16>, vector<16x8xbf16>, vector<9x8xf32> -> vector<9x8xf32>
    %284 = arith.truncf %283 : vector<9x8xf32> to vector<9x8xbf16>
    %c2_100 = arith.constant 2 : index
    %c0_101 = arith.constant 0 : index
    %c0_102 = arith.constant 0 : index
    %285 = vector.load %arg14[%c2_100, %c0_101, %c0_102] : memref<4x8x32xbf16, #tpu.memory_space<vmem>>, vector<1x8x32xbf16>
    %286 = vector.shape_cast %285 : vector<1x8x32xbf16> to vector<8x32xbf16>
    %cst_103 = arith.constant dense<0.000000e+00> : vector<9x32xf32>
    %287 = tpu.matmul %284, %286, %cst_103 {dimension_numbers = #tpu.dot_dimension_numbers<[1], [0], [0], [1], [0, 0, 1, 1], [], []>} : vector<9x8xbf16>, vector<8x32xbf16>, vector<9x32xf32> -> vector<9x32xf32>
    %288 = arith.addf %259, %287 : vector<9x32xf32>
    %289 = vector.extract_strided_slice %192 {offsets = [0, 24], sizes = [9, 8], strides = [1, 1]} : vector<9x32xf32> to vector<9x8xf32>
    %290 = arith.truncf %289 : vector<9x8xf32> to vector<9x8xbf16>
    %291 = vector.extract_strided_slice %198 {offsets = [0, 24], sizes = [16, 8], strides = [1, 1]} : vector<16x32xf32> to vector<16x8xf32>
    %292 = arith.truncf %291 : vector<16x8xf32> to vector<16x8xbf16>
    %293 = vector.extract_strided_slice %199 {offsets = [0, 24], sizes = [16, 8], strides = [1, 1]} : vector<16x32xf32> to vector<16x8xf32>
    %294 = arith.truncf %293 : vector<16x8xf32> to vector<16x8xbf16>
    %295 = tpu.transpose %292, [1, 0] : vector<16x8xbf16> -> vector<8x16xbf16>
    %cst_104 = arith.constant dense<0.000000e+00> : vector<9x16xf32>
    %296 = tpu.matmul %290, %295, %cst_104 {dimension_numbers = #tpu.dot_dimension_numbers<[1], [0], [0], [1], [0, 0, 1, 1], [], []>} : vector<9x8xbf16>, vector<8x16xbf16>, vector<9x16xf32> -> vector<9x16xf32>
    %cst_105 = arith.constant 0.353553385 : f32
    %297 = vector.broadcast %cst_105 : f32 to vector<9x16xf32>
    %298 = arith.mulf %296, %297 : vector<9x16xf32>
    %cst_106 = arith.constant -3.40282347E+38 : f32
    %299 = vector.broadcast %cst_106 : f32 to vector<9x16xf32>
    %300 = arith.select %197, %298, %299 : vector<9x16xi1>, vector<9x16xf32>
    %cst_107 = arith.constant dense<0xFF800000> : vector<9xf32>
    %301 = vector.multi_reduction <maximumf>, %300, %cst_107 [1] : vector<9x16xf32> to vector<9xf32>
    %302 = vector.shape_cast %301 : vector<9xf32> to vector<9x1xf32>
    %303 = vector.broadcast %302 : vector<9x1xf32> to vector<9x16xf32>
    %304 = arith.subf %300, %303 : vector<9x16xf32>
    %305 = math.exp %304 : vector<9x16xf32>
    %cst_108 = arith.constant dense<0.000000e+00> : vector<9xf32>
    %306 = vector.multi_reduction <add>, %305, %cst_108 [1] : vector<9x16xf32> to vector<9xf32>
    %307 = vector.shape_cast %306 : vector<9xf32> to vector<9x1xf32>
    %308 = tpu.reciprocal %307 {approx = true} : vector<9x1xf32> -> vector<9x1xf32>
    %309 = vector.broadcast %308 : vector<9x1xf32> to vector<9x16xf32>
    %310 = arith.mulf %305, %309 : vector<9x16xf32>
    %311 = arith.truncf %310 : vector<9x16xf32> to vector<9x16xbf16>
    %cst_109 = arith.constant dense<0.000000e+00> : vector<9x8xf32>
    %312 = tpu.matmul %311, %294, %cst_109 {dimension_numbers = #tpu.dot_dimension_numbers<[1], [0], [0], [1], [0, 0, 1, 1], [], []>} : vector<9x16xbf16>, vector<16x8xbf16>, vector<9x8xf32> -> vector<9x8xf32>
    %313 = arith.truncf %312 : vector<9x8xf32> to vector<9x8xbf16>
    %c3_110 = arith.constant 3 : index
    %c0_111 = arith.constant 0 : index
    %c0_112 = arith.constant 0 : index
    %314 = vector.load %arg14[%c3_110, %c0_111, %c0_112] : memref<4x8x32xbf16, #tpu.memory_space<vmem>>, vector<1x8x32xbf16>
    %315 = vector.shape_cast %314 : vector<1x8x32xbf16> to vector<8x32xbf16>
    %cst_113 = arith.constant dense<0.000000e+00> : vector<9x32xf32>
    %316 = tpu.matmul %313, %315, %cst_113 {dimension_numbers = #tpu.dot_dimension_numbers<[1], [0], [0], [1], [0, 0, 1, 1], [], []>} : vector<9x8xbf16>, vector<8x32xbf16>, vector<9x32xf32> -> vector<9x32xf32>
    %317 = arith.addf %288, %316 : vector<9x32xf32>
    %318 = vector.broadcast %200 : vector<1x32xf32> to vector<9x32xf32>
    %319 = arith.addf %317, %318 : vector<9x32xf32>
    %320 = arith.addf %165, %319 : vector<9x32xf32>
    %c0_114 = arith.constant 0 : index
    %c0_115 = arith.constant 0 : index
    %321 = vector.load %arg16[%c0_114, %c0_115] : memref<1x32xf32, #tpu.memory_space<vmem>>, vector<1x32xf32>
    %c0_116 = arith.constant 0 : index
    %c0_117 = arith.constant 0 : index
    %322 = vector.load %arg17[%c0_116, %c0_117] : memref<1x32xf32, #tpu.memory_space<vmem>>, vector<1x32xf32>
    %cst_118 = arith.constant dense<0.000000e+00> : vector<9xf32>
    %323 = vector.multi_reduction <add>, %320, %cst_118 [1] : vector<9x32xf32> to vector<9xf32>
    %324 = vector.shape_cast %323 : vector<9xf32> to vector<9x1xf32>
    %cst_119 = arith.constant 3.200000e+01 : f32
    %325 = vector.broadcast %cst_119 : f32 to vector<9x1xf32>
    %326 = arith.divf %324, %325 : vector<9x1xf32>
    %327 = vector.broadcast %326 : vector<9x1xf32> to vector<9x32xf32>
    %328 = arith.subf %320, %327 : vector<9x32xf32>
    %329 = arith.mulf %328, %328 : vector<9x32xf32>
    %cst_120 = arith.constant dense<0.000000e+00> : vector<9xf32>
    %330 = vector.multi_reduction <add>, %329, %cst_120 [1] : vector<9x32xf32> to vector<9xf32>
    %331 = vector.shape_cast %330 : vector<9xf32> to vector<9x1xf32>
    %cst_121 = arith.constant 3.200000e+01 : f32
    %332 = vector.broadcast %cst_121 : f32 to vector<9x1xf32>
    %333 = arith.divf %331, %332 : vector<9x1xf32>
    %334 = vector.broadcast %326 : vector<9x1xf32> to vector<9x32xf32>
    %335 = arith.subf %320, %334 : vector<9x32xf32>
    %cst_122 = arith.constant 9.99999997E-7 : f32
    %336 = vector.broadcast %cst_122 : f32 to vector<9x1xf32>
    %337 = arith.addf %333, %336 : vector<9x1xf32>
    %338 = math.rsqrt %337 : vector<9x1xf32>
    %339 = vector.broadcast %338 : vector<9x1xf32> to vector<9x32xf32>
    %340 = arith.mulf %335, %339 : vector<9x32xf32>
    %341 = vector.broadcast %321 : vector<1x32xf32> to vector<9x32xf32>
    %342 = arith.mulf %340, %341 : vector<9x32xf32>
    %343 = vector.broadcast %322 : vector<1x32xf32> to vector<9x32xf32>
    %344 = arith.addf %342, %343 : vector<9x32xf32>
    %345 = arith.truncf %344 : vector<9x32xf32> to vector<9x32xbf16>
    %c0_123 = arith.constant 0 : index
    %c0_124 = arith.constant 0 : index
    %346 = vector.load %arg18[%c0_123, %c0_124] : memref<32x64xbf16, #tpu.memory_space<vmem>>, vector<32x64xbf16>
    %cst_125 = arith.constant dense<0.000000e+00> : vector<9x64xf32>
    %347 = tpu.matmul %345, %346, %cst_125 {dimension_numbers = #tpu.dot_dimension_numbers<[1], [0], [0], [1], [0, 0, 1, 1], [], []>} : vector<9x32xbf16>, vector<32x64xbf16>, vector<9x64xf32> -> vector<9x64xf32>
    %c0_126 = arith.constant 0 : index
    %c0_127 = arith.constant 0 : index
    %348 = vector.load %arg19[%c0_126, %c0_127] : memref<1x64xf32, #tpu.memory_space<vmem>>, vector<1x64xf32>
    %349 = vector.broadcast %348 : vector<1x64xf32> to vector<9x64xf32>
    %350 = arith.addf %347, %349 : vector<9x64xf32>
    %cst_128 = arith.constant 0.000000e+00 : f32
    %351 = vector.broadcast %cst_128 : f32 to vector<9x64xf32>
    %352 = arith.maximumf %350, %351 : vector<9x64xf32>
    %353 = arith.truncf %352 : vector<9x64xf32> to vector<9x64xbf16>
    %c0_129 = arith.constant 0 : index
    %c0_130 = arith.constant 0 : index
    %354 = vector.load %arg20[%c0_129, %c0_130] : memref<64x32xbf16, #tpu.memory_space<vmem>>, vector<64x32xbf16>
    %cst_131 = arith.constant dense<0.000000e+00> : vector<9x32xf32>
    %355 = tpu.matmul %353, %354, %cst_131 {dimension_numbers = #tpu.dot_dimension_numbers<[1], [0], [0], [1], [0, 0, 1, 1], [], []>} : vector<9x64xbf16>, vector<64x32xbf16>, vector<9x32xf32> -> vector<9x32xf32>
    %c0_132 = arith.constant 0 : index
    %c0_133 = arith.constant 0 : index
    %356 = vector.load %arg21[%c0_132, %c0_133] : memref<1x32xf32, #tpu.memory_space<vmem>>, vector<1x32xf32>
    %357 = vector.broadcast %356 : vector<1x32xf32> to vector<9x32xf32>
    %358 = arith.addf %355, %357 : vector<9x32xf32>
    %359 = arith.addf %320, %358 : vector<9x32xf32>
    %360 = arith.truncf %359 : vector<9x32xf32> to vector<9x32xbf16>
    %c0_134 = arith.constant 0 : index
    %c0_135 = arith.constant 0 : index
    %c0_136 = arith.constant 0 : index
    %361 = vector.load %arg22[%c0_134, %c0_135, %c0_136] : memref<1x9x32xbf16, #tpu.memory_space<vmem>>, vector<1x9x32xbf16>
    %362 = vector.shape_cast %361 : vector<1x9x32xbf16> to vector<9x32xbf16>
    %363 = vector.shape_cast %360 : vector<9x32xbf16> to vector<1x9x32xbf16>
    tpu.vector_store %arg22[%c0_134, %c0_135, %c0_136], %363 {strides = array<i32>} : memref<1x9x32xbf16, #tpu.memory_space<vmem>>, vector<1x9x32xbf16>,
    return
  }
  func.func @transform_0(%arg0: i32, %arg1: memref<2xi32, #tpu.memory_space<smem>>, %arg2: memref<2xi32, #tpu.memory_space<smem>>) -> (i32, i32, i32) {
    %c0_i32 = arith.constant 0 : i32
    %c0_i32_0 = arith.constant 0 : i32
    %c0_i32_1 = arith.constant 0 : i32
    return %arg0, %c0_i32, %c0_i32_0 : i32, i32, i32
  }
  func.func @transform_1(%arg0: i32, %arg1: memref<2xi32, #tpu.memory_space<smem>>, %arg2: memref<2xi32, #tpu.memory_space<smem>>) -> (i32, i32, i32) {
    %c0_i32 = arith.constant 0 : i32
    %c0_i32_0 = arith.constant 0 : i32
    %c0_i32_1 = arith.constant 0 : i32
    return %arg0, %c0_i32, %c0_i32_0 : i32, i32, i32
  }
  func.func @transform_2(%arg0: i32, %arg1: memref<2xi32, #tpu.memory_space<smem>>, %arg2: memref<2xi32, #tpu.memory_space<smem>>) -> (i32, i32) {
    %c0_i32 = arith.constant 0 : i32
    %c0_i32_0 = arith.constant 0 : i32
    %c0_i32_1 = arith.constant 0 : i32
    return %c0_i32, %c0_i32_0 : i32, i32
  }
  func.func @transform_3(%arg0: i32, %arg1: memref<2xi32, #tpu.memory_space<smem>>, %arg2: memref<2xi32, #tpu.memory_space<smem>>) -> (i32, i32) {
    %c0_i32 = arith.constant 0 : i32
    %c0_i32_0 = arith.constant 0 : i32
    %c0_i32_1 = arith.constant 0 : i32
    return %c0_i32, %c0_i32_0 : i32, i32
  }
  func.func @transform_4(%arg0: i32, %arg1: memref<2xi32, #tpu.memory_space<smem>>, %arg2: memref<2xi32, #tpu.memory_space<smem>>) -> (i32, i32) {
    %c0_i32 = arith.constant 0 : i32
    %c0_i32_0 = arith.constant 0 : i32
    %c0_i32_1 = arith.constant 0 : i32
    return %c0_i32, %c0_i32_0 : i32, i32
  }
  func.func @transform_5(%arg0: i32, %arg1: memref<2xi32, #tpu.memory_space<smem>>, %arg2: memref<2xi32, #tpu.memory_space<smem>>) -> (i32, i32, i32) {
    %c0_i32 = arith.constant 0 : i32
    %c0_i32_0 = arith.constant 0 : i32
    %c0_i32_1 = arith.constant 0 : i32
    %c0_i32_2 = arith.constant 0 : i32
    return %c0_i32, %c0_i32_0, %c0_i32_1 : i32, i32, i32
  }
  func.func @transform_6(%arg0: i32, %arg1: memref<2xi32, #tpu.memory_space<smem>>, %arg2: memref<2xi32, #tpu.memory_space<smem>>) -> (i32, i32) {
    %c0_i32 = arith.constant 0 : i32
    %c0_i32_0 = arith.constant 0 : i32
    %c0_i32_1 = arith.constant 0 : i32
    return %c0_i32, %c0_i32_0 : i32, i32
  }
  func.func @transform_7(%arg0: i32, %arg1: memref<2xi32, #tpu.memory_space<smem>>, %arg2: memref<2xi32, #tpu.memory_space<smem>>) -> (i32, i32) {
    %c0_i32 = arith.constant 0 : i32
    %c0_i32_0 = arith.constant 0 : i32
    %c0_i32_1 = arith.constant 0 : i32
    return %c0_i32, %c0_i32_0 : i32, i32
  }
  func.func @transform_8(%arg0: i32, %arg1: memref<2xi32, #tpu.memory_space<smem>>, %arg2: memref<2xi32, #tpu.memory_space<smem>>) -> (i32, i32) {
    %c0_i32 = arith.constant 0 : i32
    %c0_i32_0 = arith.constant 0 : i32
    %c0_i32_1 = arith.constant 0 : i32
    return %c0_i32, %c0_i32_0 : i32, i32
  }
  func.func @transform_9(%arg0: i32, %arg1: memref<2xi32, #tpu.memory_space<smem>>, %arg2: memref<2xi32, #tpu.memory_space<smem>>) -> (i32, i32) {
    %c0_i32 = arith.constant 0 : i32
    %c0_i32_0 = arith.constant 0 : i32
    %c0_i32_1 = arith.constant 0 : i32
    return %c0_i32, %c0_i32_0 : i32, i32
  }
  func.func @transform_10(%arg0: i32, %arg1: memref<2xi32, #tpu.memory_space<smem>>, %arg2: memref<2xi32, #tpu.memory_space<smem>>) -> (i32, i32) {
    %c0_i32 = arith.constant 0 : i32
    %c0_i32_0 = arith.constant 0 : i32
    %c0_i32_1 = arith.constant 0 : i32
    return %c0_i32, %c0_i32_0 : i32, i32
  }
  func.func @transform_11(%arg0: i32, %arg1: memref<2xi32, #tpu.memory_space<smem>>, %arg2: memref<2xi32, #tpu.memory_space<smem>>) -> (i32, i32, i32) {
    %c0_i32 = arith.constant 0 : i32
    %c0_i32_0 = arith.constant 0 : i32
    %c0_i32_1 = arith.constant 0 : i32
    %c0_i32_2 = arith.constant 0 : i32
    return %c0_i32, %c0_i32_0, %c0_i32_1 : i32, i32, i32
  }
  func.func @transform_12(%arg0: i32, %arg1: memref<2xi32, #tpu.memory_space<smem>>, %arg2: memref<2xi32, #tpu.memory_space<smem>>) -> (i32, i32) {
    %c0_i32 = arith.constant 0 : i32
    %c0_i32_0 = arith.constant 0 : i32
    %c0_i32_1 = arith.constant 0 : i32
    return %c0_i32, %c0_i32_0 : i32, i32
  }
  func.func @transform_13(%arg0: i32, %arg1: memref<2xi32, #tpu.memory_space<smem>>, %arg2: memref<2xi32, #tpu.memory_space<smem>>) -> (i32, i32) {
    %c0_i32 = arith.constant 0 : i32
    %c0_i32_0 = arith.constant 0 : i32
    %c0_i32_1 = arith.constant 0 : i32
    return %c0_i32, %c0_i32_0 : i32, i32
  }
  func.func @transform_14(%arg0: i32, %arg1: memref<2xi32, #tpu.memory_space<smem>>, %arg2: memref<2xi32, #tpu.memory_space<smem>>) -> (i32, i32) {
    %c0_i32 = arith.constant 0 : i32
    %c0_i32_0 = arith.constant 0 : i32
    %c0_i32_1 = arith.constant 0 : i32
    return %c0_i32, %c0_i32_0 : i32, i32
  }
  func.func @transform_15(%arg0: i32, %arg1: memref<2xi32, #tpu.memory_space<smem>>, %arg2: memref<2xi32, #tpu.memory_space<smem>>) -> (i32, i32) {
    %c0_i32 = arith.constant 0 : i32
    %c0_i32_0 = arith.constant 0 : i32
    %c0_i32_1 = arith.constant 0 : i32
    return %c0_i32, %c0_i32_0 : i32, i32
  }
  func.func @transform_16(%arg0: i32, %arg1: memref<2xi32, #tpu.memory_space<smem>>, %arg2: memref<2xi32, #tpu.memory_space<smem>>) -> (i32, i32) {
    %c0_i32 = arith.constant 0 : i32
    %c0_i32_0 = arith.constant 0 : i32
    %c0_i32_1 = arith.constant 0 : i32
    return %c0_i32, %c0_i32_0 : i32, i32
  }
  func.func @transform_17(%arg0: i32, %arg1: memref<2xi32, #tpu.memory_space<smem>>, %arg2: memref<2xi32, #tpu.memory_space<smem>>) -> (i32, i32) {
    %c0_i32 = arith.constant 0 : i32
    %c0_i32_0 = arith.constant 0 : i32
    %c0_i32_1 = arith.constant 0 : i32
    return %c0_i32, %c0_i32_0 : i32, i32
  }
  func.func @transform_18(%arg0: i32, %arg1: memref<2xi32, #tpu.memory_space<smem>>, %arg2: memref<2xi32, #tpu.memory_space<smem>>) -> (i32, i32) {
    %c0_i32 = arith.constant 0 : i32
    %c0_i32_0 = arith.constant 0 : i32
    %c0_i32_1 = arith.constant 0 : i32
    return %c0_i32, %c0_i32_0 : i32, i32
  }
  func.func @transform_19(%arg0: i32, %arg1: memref<2xi32, #tpu.memory_space<smem>>, %arg2: memref<2xi32, #tpu.memory_space<smem>>) -> (i32, i32, i32) {
    %c0_i32 = arith.constant 0 : i32
    %c0_i32_0 = arith.constant 0 : i32
    %c0_i32_1 = arith.constant 0 : i32
    return %arg0, %c0_i32, %c0_i32_0 : i32, i32, i32
  }
}

</mosaic_0001>

<llo_original>
// kernel: _fwd.5
$region0: #{_fwd.5}
  #allocation0 [shape = 'u32[]', space=smem, size = 0x4, offset = 0x4, fixed_abs, tag = 'smem constant byte address 0x4 - core index']
  #allocation1 [shape = 'u32[144,128]{1,0:T(1,128)}', space=vmem, size = 0x12000, scoped, tag = 'internal scratch']
  #allocation2 [shape = 'bf16[24,32]{1,0:T(8,128)(2,1)}', space=vmem, size = 0x1800, scoped, tag = 'scratch operand']
  #allocation3 [shape = 'f32[24,1]{1,0:T(8,128)}', space=vmem, size = 0x3000, scoped, tag = 'scratch operand']
  #allocation4 [shape = 'f32[24,1]{1,0:T(8,128)}', space=vmem, size = 0x3000, scoped, tag = 'scratch operand']
  #allocation5 [shape = 'f32[24,1]{1,0:T(8,128)}', space=vmem, size = 0x3000, scoped, tag = 'scratch operand']
  #allocation6 [shape = 's32[24,1]{1,0:T(8,128)}', space=vmem, size = 0x3000, scoped, tag = 'scratch operand']
  %s0 = inlined_call_operand.vmem [shape: bf16[24,32], index: 0, kind: input, shape index: {}]
  %s1 = inlined_call_operand.vmem [shape: s32[24,1], index: 1, kind: input, shape index: {}]
  %s2 = inlined_call_operand.vmem [shape: f32[1,32], index: 2, kind: input, shape index: {}]
  %s3 = inlined_call_operand.vmem [shape: f32[1,32], index: 3, kind: input, shape index: {}]
  %s4 = inlined_call_operand.vmem [shape: bf16[32,128], index: 4, kind: input, shape index: {}]
  %s5 = inlined_call_operand.vmem [shape: f32[1,128], index: 5, kind: input, shape index: {}]
  %s6 = inlined_call_operand.hbm [shape: f32[1,1,1], index: 6, kind: output, shape index: {0}]
  %s7 = inlined_call_operand.hbm [shape: f32[1,1,1], index: 7, kind: output, shape index: {1}]
  %8 = xla_tuple %s6, %s7
  %s9 = sld [smem:[#allocation0]]
  $region50: #{_fwd.5} parent=0
    _
  %s11 = ssub.s32 1, %s9
  %s12 = scalar_select 0, %s11, %s9
  $region1: #{_fwd.5} parent=0
    #allocation7 [shape = 'u8[512]{0}', space=vmem, size = 0x400, scoped, tag = 'output window, operand 0, single buffered']
    #allocation8 [shape = 's32[1]{0}', space=sflag, size = 0x4, scoped, tag = 'scoped memory for _fwd.5']
    #allocation9 [shape = 'u8[512]{0}', space=vmem, size = 0x400, scoped, tag = 'output window, operand 1, single buffered']
    #allocation10 [shape = 's32[1]{0}', space=sflag, size = 0x4, scoped, tag = 'scoped memory for _fwd.5']
    %13 = vsyncpa [#allocation8], 0
    %14 = vsyncpa [#allocation10], 0
    // Predicated region
    $region2: #{_fwd.5} parent=1 // pred_check
      _
    $region3: #{_fwd.5} parent=1 // pred_check_branch
      %16 = sbr.rel (0) target = $region5
    $region4: #{_fwd.5} parent=1 // pred_region
      _
    $region5: #{_fwd.5} parent=1 // pred_fallthru
      _
    // Predicated region
    $region6: #{_fwd.5} parent=1 // pred_check
      _
    $region7: #{_fwd.5} parent=1 // pred_check_branch
      %18 = sbr.rel (0) target = $region9
    $region8: #{_fwd.5} parent=1 // pred_region
      _
    $region9: #{_fwd.5} parent=1 // pred_fallthru
      _
    // Predicated region
    $region10: #{_fwd.5} parent=1 // pred_check
      _
    $region11: #{_fwd.5} parent=1 // pred_check_branch
      %20 = sbr.rel (0) target = $region13
    $region12: #{_fwd.5} parent=1 // pred_region
      _
    $region13: #{_fwd.5} parent=1 // pred_fallthru
      _
    // Predicated region
    $region14: #{_fwd.5} parent=1 // pred_check
      _
    $region15: #{_fwd.5} parent=1 // pred_check_branch
      %22 = sbr.rel (0) target = $region17
    $region16: #{_fwd.5} parent=1 // pred_region
      _
    $region17: #{_fwd.5} parent=1 // pred_fallthru
      _
    // Predicated region
    $region18: #{_fwd.5} parent=1 // pred_check
      _
    $region19: #{_fwd.5} parent=1 // pred_check_branch
      %24 = sbr.rel (0) target = $region21
    $region20: #{_fwd.5} parent=1 // pred_region
      _
    $region21: #{_fwd.5} parent=1 // pred_fallthru
      _
    // Predicated region
    $region22: #{_fwd.5} parent=1 // pred_check
      _
    $region23: #{_fwd.5} parent=1 // pred_check_branch
      %26 = sbr.rel (0) target = $region25
    $region24: #{_fwd.5} parent=1 // pred_region
      _
    $region25: #{_fwd.5} parent=1 // pred_fallthru
      _
    %p28 = scmp.eq.s32.totalorder 0, 0
    // Predicated region
    $region26: #{_fwd.5} parent=1 // pred_check
      %p29 = pneg %p28
    $region27: #{_fwd.5} parent=1 // pred_check_branch
      %31 = sbr.rel (%p29) target = $region29
    $region28: #{_fwd.5} parent=1 // pred_region
      %v32 = vld [vmem:[%s0] sm:$0xf]
      %v33 = vld [vmem:[%s0 + $0x4] sm:$0xf]
      %v34 = vld [vmem:[%s0 + $0x8] sm:$0xf]
      %v35 = vunpack.c.l.bf16 %v32
      %v36 = vunpack.c.l.bf16 %v33
      %v37 = vunpack.c.l.bf16 %v34
      %v38 = vld [vmem:[%s2] sm:$0x1]
      %v39 = vld [vmem:[%s3] sm:$0x1]
      %vm40 = vcmask 261120
      %v41 = vsel %vm40, %v35, 0.0
      %42 = vadd.xlane.f32.xlu0 %v41
      %v43 = vpop.xlane.xlu0 %42
      %v44 = vsel %vm40, %v36, 0.0
      %45 = vadd.xlane.f32.xlu0 %v44
      %v46 = vpop.xlane.xlu0 %45
      %v47 = vsel %vm40, %v37, 0.0
      %48 = vadd.xlane.f32.xlu0 %v47
      %v49 = vpop.xlane.xlu0 %48
      %v50 = vrcp.pop 32.0
      %v51 = vmul.f32 %v43, %v50
      %v52 = vmul.f32 %v46, %v50
      %v53 = vmul.f32 %v49, %v50
      %v54 = vsub.f32 %v35, %v51
      %v55 = vsub.f32 %v36, %v52
      %v56 = vsub.f32 %v37, %v53
      %v57 = vmul.f32 %v54, %v54
      %v58 = vmul.f32 %v55, %v55
      %v59 = vmul.f32 %v56, %v56
      %v60 = vsel %vm40, %v57, 0.0
      %61 = vadd.xlane.f32.xlu0 %v60
      %v62 = vpop.xlane.xlu0 %61
      %v63 = vsel %vm40, %v58, 0.0
      %64 = vadd.xlane.f32.xlu0 %v63
      %v65 = vpop.xlane.xlu0 %64
      %v66 = vsel %vm40, %v59, 0.0
      %67 = vadd.xlane.f32.xlu0 %v66
      %v68 = vpop.xlane.xlu0 %67
      %v69 = vmul.f32 %v62, %v50
      %v70 = vmul.f32 %v65, %v50
      %v71 = vmul.f32 %v68, %v50
      %v72 = vadd.f32 %v69, 1e-06
      %v73 = vadd.f32 %v70, 1e-06
      %v74 = vadd.f32 %v71, 1e-06
      %v75 = vrsqrt.pop %v72
      %v76 = vrsqrt.pop %v73
      %v77 = vrsqrt.pop %v74
      %v78 = vmul.f32 %v54, %v75
      %v79 = vmul.f32 %v55, %v76
      %v80 = vmul.f32 %v56, %v77
      %v82 = vlaneseq
      %v83 = vshrl.u32 %v82, 7
      %v84 = vsub.s32 0, %v83
      %v85 = vrot.slane %v38, %v84
      %v87 = vmul.f32 %v78, %v85
      %v88 = vmul.f32 %v79, %v85
      %v89 = vmul.f32 %v80, %v85
      %v91 = vlaneseq
      %v92 = vshrl.u32 %v91, 7
      %v93 = vsub.s32 0, %v92
      %v94 = vrot.slane %v39, %v93
      %v96 = vadd.f32 %v87, %v94
      %v97 = vadd.f32 %v88, %v94
      %v98 = vadd.f32 %v89, %v94
      %v99 = vpack.c.bf16 %v97, %v96
      %v100 = vpack.c.bf16 %v98, %v98
      %v103 = vunpack.c.l.b16 %v99
      %v104 = vunpack.c.h.b16 %v99
      %v105 = vunpack.c.l.b16 %v100
      %v106 = vpack.c.b16 %v103, %v103
      %v107 = vpack.c.b16 %v104, %v104
      %v108 = vpack.c.b16 %v105, %v105
      %vm112 = vcmask 257024
      %113 = vst.msk [vmem:[#allocation2] sm:$0xf] %vm112, %v106
      %114 = vst.msk [vmem:[#allocation2 + $0x4] sm:$0xf] %vm112, %v107
      %115 = vst.msk [vmem:[#allocation2 + $0x8] sm:$0xf] %vm112, %v108
      %vm116 = vcmask 7168
      %117 = vst.msk [vmem:[#allocation3] sm:$0xff] %vm116, -inf
      %118 = vst.msk [vmem:[#allocation3 + $0x8] sm:$0xff] %vm116, -inf
      %119 = vst.msk [vmem:[#allocation3 + $0x10] sm:$0xff] %vm116, -inf
      %120 = vst.msk [vmem:[#allocation4] sm:$0xff] %vm116, 0.0
      %121 = vst.msk [vmem:[#allocation4 + $0x8] sm:$0xff] %vm116, 0.0
      %122 = vst.msk [vmem:[#allocation4 + $0x10] sm:$0xff] %vm116, 0.0
      %123 = vst.msk [vmem:[#allocation5] sm:$0xff] %vm116, 0.0
      %124 = vst.msk [vmem:[#allocation5 + $0x8] sm:$0xff] %vm116, 0.0
      %125 = vst.msk [vmem:[#allocation5 + $0x10] sm:$0xff] %vm116, 0.0
      %126 = vst.msk [vmem:[#allocation6] sm:$0xff] %vm116, 4294967295
      %127 = vst.msk [vmem:[#allocation6 + $0x8] sm:$0xff] %vm116, 4294967295
      %128 = vst.msk [vmem:[#allocation6 + $0x10] sm:$0xff] %vm116, 4294967295
    $region29: #{_fwd.5} parent=1 // pred_fallthru
      _
    %v129 = vld [vmem:[#allocation2] sm:$0xf]
    %v130 = vld [vmem:[#allocation2 + $0x4] sm:$0xf]
    %v131 = vld [vmem:[#allocation2 + $0x8] sm:$0xf]
    %v132 = vld [vmem:[%s4] sm:$0xf]
    %v133 = vld [vmem:[%s4 + $0x4] sm:$0xf]
    %v134 = vld [vmem:[%s4 + $0x8] sm:$0xf]
    %v135 = vld [vmem:[%s4 + $0xc] sm:$0xf]
    %v136 = vld [vmem:[%s5] sm:$0x1]
    %v138 = vlaneseq
    %v139 = vshrl.u32 %v138, 7
    %v140 = vsub.s32 0, %v139
    %v141 = vrot.slane %v136, %v140
    %v146 = vunpack.c.l.b16 %v129
    %v147 = vunpack.c.l.b16 %v130
    %v148 = vunpack.c.l.b16 %v131
    %v149 = vpack.c.b16 %v147, %v146
    %v150 = vpack.c.b16 %v148, %v148
    %v155 = vunpack.c.l.b16 %v132
    %v156 = vunpack.c.l.b16 %v133
    %v157 = vunpack.c.l.b16 %v134
    %v158 = vunpack.c.l.b16 %v135
    %v159 = vpack.c.b16 %v156, %v155
    %v160 = vpack.c.b16 %v158, %v157
    %vm163 = vcmask 261120
    %v165 = vsel %vm163, %v149, 0
    %v168 = vsel %vm163, %v150, 0
    %170 = vmatprep.subr.bf16.mxu0 0
    %171 = vmatpush1.bf16.msra.mxu0 0
    %172 = vmatprep.subr.bf16.mxu0 0
    %173 = vmatpush1.bf16.msra.mxu0 0
    %174 = vmatprep.subr.bf16.mxu0 0
    %175 = vmatpush1.bf16.msra.mxu0 0
    %176 = vmatprep.subr.bf16.mxu0 0
    %177 = vmatpush1.bf16.msra.mxu0 0
    %178 = vmatprep.subr.bf16.mxu0 0
    %179 = vmatpush1.bf16.msra.mxu0 0
    %180 = vmatprep.subr.bf16.mxu0 0
    %181 = vmatpush1.bf16.msra.mxu0 0
    %182 = vmatprep.subr.bf16.mxu0 0
    %183 = vmatpush1.bf16.msra.mxu0 %v160
    %184 = vmatprep.subr.bf16.mxu0 0
    %185 = vmatpush1.bf16.msra.mxu0 %v159
    %186 = vmatprep.subr.bf16.mxu0 0
    %187 = vmatpush2.bf16.msra.mxu0 0
    %188 = vmatprep.subr.bf16.mxu0 0
    %189 = vmatpush2.bf16.msra.mxu0 0
    %190 = vmatprep.subr.bf16.mxu0 0
    %191 = vmatpush2.bf16.msra.mxu0 0
    %192 = vmatprep.subr.bf16.mxu0 0
    %193 = vmatpush2.bf16.msra.mxu0 0
    %194 = vmatprep.subr.bf16.mxu0 0
    %195 = vmatpush2.bf16.msra.mxu0 0
    %196 = vmatprep.subr.bf16.mxu0 0
    %197 = vmatpush2.bf16.msra.mxu0 0
    %198 = vmatprep.subr.bf16.mxu0 0
    %199 = vmatpush2.bf16.msra.mxu0 0
    %200 = vmatprep.subr.bf16.mxu0 0
    %201 = vmatpush2.bf16.msra.mxu0 0
    %202 = vmatprep.mubr.bf16.mxu0 0
    %203 = vmatmul.mubr.bf16.gmra.mxu0 %v165
    %v204 = vpop.f32.mrf.mxu0
    %v205 = vadd.f32 %v141, %v204
    %v206 = vpop.f32.mrf.mxu0
    %v207 = vpop.f32.mrf.mxu0
    %v208 = vadd.f32 %v141, %v207
    %v209 = vpop.f32.mrf.mxu0
    %210 = vmatprep.mubr.bf16.mxu0 0
    %211 = vmatmul.mubr.bf16.gmra.mxu0 %v168
    %v212 = vpop.f32.mrf.mxu0
    %v213 = vadd.f32 %v141, %v212
    %v214 = vpop.f32.mrf.mxu0
    %v215 = vpop.f32.mrf.mxu0
    %v216 = vpop.f32.mrf.mxu0
    %217 = vdwg.mxu0
    %v218 = vld [vmem:[%s1] sm:$0xff]
    %v219 = vld [vmem:[%s1 + $0x8] sm:$0xff]
    %v220 = vld [vmem:[%s1 + $0x10] sm:$0xff]
    %v221 = vlaneseq
    %v222 = vand.u32 %v221, 127
    %s223 = smul.u32 0, 128
    %v224 = vstv %s223
    %v225 = vadd.s32 %v222, %v224
    %v226 = vld [vmem:[#allocation5] sm:$0xff]
    %v227 = vld [vmem:[#allocation5 + $0x8] sm:$0xff]
    %v228 = vld [vmem:[#allocation5 + $0x10] sm:$0xff]
    %229 = vset.pattern.permute.xlu0 0
    %230 = vperm.xlu0 %229, %v218
    %v231 = vpop.permute.xlu0 %230
    %232 = vset.pattern.permute.xlu0 0
    %233 = vperm.xlu0 %232, %v219
    %v234 = vpop.permute.xlu0 %233
    %235 = vset.pattern.permute.xlu0 0
    %236 = vperm.xlu0 %235, %v220
    %v237 = vpop.permute.xlu0 %236
    %vm238 = vcmp.eq.s32.totalorder %v225, %v231
    %vm239 = vcmp.eq.s32.totalorder %v225, %v234
    %vm240 = vcmp.eq.s32.totalorder %v225, %v237
    %v241 = vsel %vm238, %v205, 0.0
    %v242 = vsel %vm239, %v208, 0.0
    %v243 = vsel %vm240, %v213, 0.0
    %244 = vadd.xlane.f32.xlu0 %v241
    %v245 = vpop.xlane.xlu0 %244
    %246 = vadd.xlane.f32.xlu0 %v242
    %v247 = vpop.xlane.xlu0 %246
    %248 = vadd.xlane.f32.xlu0 %v243
    %v249 = vpop.xlane.xlu0 %248
    %v250 = vadd.f32 %v226, %v245
    %v251 = vadd.f32 %v227, %v247
    %v252 = vadd.f32 %v228, %v249
    %vm253 = vcmask 7168
    %254 = vst.msk [vmem:[#allocation5] sm:$0xff] %vm253, %v250
    %255 = vst.msk [vmem:[#allocation5 + $0x8] sm:$0xff] %vm253, %v251
    %256 = vst.msk [vmem:[#allocation5 + $0x10] sm:$0xff] %vm253, %v252
    %257 = vmax.xlane.f32.xlu0 %v205
    %v258 = vpop.xlane.xlu0 %257
    %259 = vmax.xlane.f32.xlu0 %v208
    %v260 = vpop.xlane.xlu0 %259
    %261 = vmax.xlane.f32.xlu0 %v213
    %v262 = vpop.xlane.xlu0 %261
    %vm263 = vcmp.eq.f32.partialorder %v205, %v258
    %vm264 = vcmp.eq.f32.partialorder %v208, %v260
    %vm265 = vcmp.eq.f32.partialorder %v213, %v262
    %v266 = vsel %vm263, %v225, 2147483647
    %v267 = vsel %vm264, %v225, 2147483647
    %v268 = vsel %vm265, %v225, 2147483647
    %v269 = vand.u32 %v266, 65535
    %v270 = vshra.s32 %v266, 16
    %v271 = vcvt.s32.f32 %v269
    %v272 = vcvt.s32.f32 %v270
    %273 = vmin.xlane.f32.xlu0 %v272
    %v274 = vpop.xlane.xlu0 %273
    %vm275 = vcmp.eq.f32.partialorder %v272, %v274
    %v276 = vsel %vm275, %v271, inf
    %277 = vmin.xlane.f32.xlu0 %v276
    %v278 = vpop.xlane.xlu0 %277
    %v279 = vcvt.f32.s32 %v278
    %v280 = vcvt.f32.s32 %v274
    %v281 = vshll.u32 %v280, 16
    %v282 = vadd.s32 %v281, %v279
    %v283 = vand.u32 %v267, 65535
    %v284 = vshra.s32 %v267, 16
    %v285 = vcvt.s32.f32 %v283
    %v286 = vcvt.s32.f32 %v284
    %287 = vmin.xlane.f32.xlu0 %v286
    %v288 = vpop.xlane.xlu0 %287
    %vm289 = vcmp.eq.f32.partialorder %v286, %v288
    %v290 = vsel %vm289, %v285, inf
    %291 = vmin.xlane.f32.xlu0 %v290
    %v292 = vpop.xlane.xlu0 %291
    %v293 = vcvt.f32.s32 %v292
    %v294 = vcvt.f32.s32 %v288
    %v295 = vshll.u32 %v294, 16
    %v296 = vadd.s32 %v295, %v293
    %v297 = vand.u32 %v268, 65535
    %v298 = vshra.s32 %v268, 16
    %v299 = vcvt.s32.f32 %v297
    %v300 = vcvt.s32.f32 %v298
    %301 = vmin.xlane.f32.xlu0 %v300
    %v302 = vpop.xlane.xlu0 %301
    %vm303 = vcmp.eq.f32.partialorder %v300, %v302
    %v304 = vsel %vm303, %v299, inf
    %305 = vmin.xlane.f32.xlu0 %v304
    %v306 = vpop.xlane.xlu0 %305
    %v307 = vcvt.f32.s32 %v306
    %v308 = vcvt.f32.s32 %v302
    %v309 = vshll.u32 %v308, 16
    %v310 = vadd.s32 %v309, %v307
    %v311 = vld [vmem:[#allocation3] sm:$0xff]
    %v312 = vld [vmem:[#allocation3 + $0x8] sm:$0xff]
    %v313 = vld [vmem:[#allocation3 + $0x10] sm:$0xff]
    %v314 = vmax.f32 %v311, %v258
    %v315 = vmax.f32 %v312, %v260
    %v316 = vmax.f32 %v313, %v262
    %v317 = vld [vmem:[#allocation4] sm:$0xff]
    %v318 = vld [vmem:[#allocation4 + $0x8] sm:$0xff]
    %v319 = vld [vmem:[#allocation4 + $0x10] sm:$0xff]
    %v320 = vsub.f32 %v311, %v314
    %v321 = vsub.f32 %v312, %v315
    %v322 = vsub.f32 %v313, %v316
    %v323 = vmul.f32 %v320, 1.442695
    %v324 = vpow.pop %v323
    %v325 = vmul.f32 %v321, 1.442695
    %v326 = vpow.pop %v325
    %v327 = vmul.f32 %v322, 1.442695
    %v328 = vpow.pop %v327
    %v329 = vmul.f32 %v317, %v324
    %v330 = vmul.f32 %v318, %v326
    %v331 = vmul.f32 %v319, %v328
    %333 = vset.pattern.permute.xlu0 0
    %334 = vperm.xlu0 %333, %v314
    %v335 = vpop.permute.xlu0 %334
    %338 = vset.pattern.permute.xlu0 0
    %339 = vperm.xlu0 %338, %v315
    %v340 = vpop.permute.xlu0 %339
    %343 = vset.pattern.permute.xlu0 0
    %344 = vperm.xlu0 %343, %v316
    %v345 = vpop.permute.xlu0 %344
    %v347 = vsub.f32 %v205, %v335
    %v348 = vsub.f32 %v208, %v340
    %v349 = vsub.f32 %v213, %v345
    %v350 = vmul.f32 %v347, 1.442695
    %v351 = vpow.pop %v350
    %v352 = vmul.f32 %v348, 1.442695
    %v353 = vpow.pop %v352
    %v354 = vmul.f32 %v349, 1.442695
    %v355 = vpow.pop %v354
    %356 = vadd.xlane.f32.xlu0 %v351
    %v357 = vpop.xlane.xlu0 %356
    %358 = vadd.xlane.f32.xlu0 %v353
    %v359 = vpop.xlane.xlu0 %358
    %360 = vadd.xlane.f32.xlu0 %v355
    %v361 = vpop.xlane.xlu0 %360
    %v362 = vadd.f32 %v329, %v357
    %v363 = vadd.f32 %v330, %v359
    %v364 = vadd.f32 %v331, %v361
    %365 = vst.msk [vmem:[#allocation4] sm:$0xff] %vm253, %v362
    %366 = vst.msk [vmem:[#allocation4 + $0x8] sm:$0xff] %vm253, %v363
    %367 = vst.msk [vmem:[#allocation4 + $0x10] sm:$0xff] %vm253, %v364
    %vm368 = vcmp.gt.f32.partialorder %v258, %v311
    %vm369 = vcmp.gt.f32.partialorder %v260, %v312
    %vm370 = vcmp.gt.f32.partialorder %v262, %v313
    %v371 = vld [vmem:[#allocation6] sm:$0xff]
    %v372 = vld [vmem:[#allocation6 + $0x8] sm:$0xff]
    %v373 = vld [vmem:[#allocation6 + $0x10] sm:$0xff]
    %v374 = vsel %vm368, %v282, %v371
    %v375 = vsel %vm369, %v296, %v372
    %v376 = vsel %vm370, %v310, %v373
    %377 = vst.msk [vmem:[#allocation6] sm:$0xff] %vm253, %v374
    %378 = vst.msk [vmem:[#allocation6 + $0x8] sm:$0xff] %vm253, %v375
    %379 = vst.msk [vmem:[#allocation6 + $0x10] sm:$0xff] %vm253, %v376
    %380 = vst.msk [vmem:[#allocation3] sm:$0xff] %vm253, %v314
    %381 = vst.msk [vmem:[#allocation3 + $0x8] sm:$0xff] %vm253, %v315
    %382 = vst.msk [vmem:[#allocation3 + $0x10] sm:$0xff] %vm253, %v316
    // Predicated region
    $region30: #{_fwd.5} parent=1 // pred_check
      %p383 = pneg %p28
    $region31: #{_fwd.5} parent=1 // pred_check_branch
      %385 = sbr.rel (%p383) target = $region33
    $region32: #{_fwd.5} parent=1 // pred_region
      %vm386 = vcmp.ne.s32.totalorder %v218, 3
      %vm387 = vcmp.ne.s32.totalorder %v219, 3
      %vm388 = vcmp.ne.s32.totalorder %v220, 3
      %v389 = vsel %vm386, 1, 0
      %v390 = vsel %vm387, 1, 0
      %v391 = vsel %vm388, 1, 0
      %v392 = vcvt.s32.f32 %v389
      %v393 = vcvt.s32.f32 %v390
      %v394 = vcvt.s32.f32 %v391
      %v395 = vld [vmem:[#allocation3] sm:$0xff]
      %v396 = vld [vmem:[#allocation3 + $0x8] sm:$0xff]
      %v397 = vld [vmem:[#allocation3 + $0x10] sm:$0xff]
      %v398 = vld [vmem:[#allocation4] sm:$0xff]
      %v399 = vld [vmem:[#allocation4 + $0x8] sm:$0xff]
      %v400 = vld [vmem:[#allocation4 + $0x10] sm:$0xff]
      %v401 = vlog2.pop %v398
      %v402 = vmul.f32 %v401, 0.6931472
      %v403 = vlog2.pop %v399
      %v404 = vmul.f32 %v403, 0.6931472
      %v405 = vlog2.pop %v400
      %v406 = vmul.f32 %v405, 0.6931472
      %v407 = vadd.f32 %v395, %v402
      %v408 = vadd.f32 %v396, %v404
      %v409 = vadd.f32 %v397, %v406
      %v410 = vld [vmem:[#allocation5] sm:$0xff]
      %v411 = vld [vmem:[#allocation5 + $0x8] sm:$0xff]
      %v412 = vld [vmem:[#allocation5 + $0x10] sm:$0xff]
      %v413 = vsub.f32 %v407, %v410
      %v414 = vsub.f32 %v408, %v411
      %v415 = vsub.f32 %v409, %v412
      %v416 = vmul.f32 %v413, %v392
      %v417 = vmul.f32 %v414, %v393
      %v418 = vmul.f32 %v415, %v394
      %v419 = vld [vmem:[#allocation6] sm:$0xff]
      %v420 = vld [vmem:[#allocation6 + $0x8] sm:$0xff]
      %v421 = vld [vmem:[#allocation6 + $0x10] sm:$0xff]
      %vm422 = vcmp.eq.s32.totalorder %v419, %v218
      %vm423 = vcmp.eq.s32.totalorder %v420, %v219
      %vm424 = vcmp.eq.s32.totalorder %v421, %v220
      %v425 = vsel %vm422, 1, 0
      %v426 = vsel %vm423, 1, 0
      %v427 = vsel %vm424, 1, 0
      %v428 = vcvt.s32.f32 %v425
      %v429 = vcvt.s32.f32 %v426
      %v430 = vcvt.s32.f32 %v427
      %v431 = vmul.f32 %v428, %v392
      %v432 = vmul.f32 %v429, %v393
      %v433 = vmul.f32 %v430, %v394
      %v434 = vsel %vm253, %v416, 0.0
      %v435 = vsel %vm253, %v417, 0.0
      %v436 = vadd.f32 %v434, %v435
      %v437 = vsel %vm253, %v418, 0.0
      %v438 = vadd.f32 %v436, %v437
      %439 = vadd.xlane.f32.xlu0 %v438
      %v440 = vpop.xlane.xlu0 %439
      %v441 = vrot.slane %v440, 4
      %v442 = vadd.f32 %v440, %v441
      %v443 = vrot.slane %v442, 2
      %v444 = vadd.f32 %v442, %v443
      %v445 = vrot.slane %v444, 1
      %v446 = vadd.f32 %v444, %v445
      %s447 = vtos %v446
      %v448 = vstv %s447
      %vm449 = vcmask 0
      %450 = vst.msk [vmem:[#allocation7] sm:$0x1] %vm449, %v448
      %v451 = vsel %vm253, %v431, 0.0
      %v452 = vsel %vm253, %v432, 0.0
      %v453 = vadd.f32 %v451, %v452
      %v454 = vsel %vm253, %v433, 0.0
      %v455 = vadd.f32 %v453, %v454
      %456 = vadd.xlane.f32.xlu0 %v455
      %v457 = vpop.xlane.xlu0 %456
      %v458 = vrot.slane %v457, 4
      %v459 = vadd.f32 %v457, %v458
      %v460 = vrot.slane %v459, 2
      %v461 = vadd.f32 %v459, %v460
      %v462 = vrot.slane %v461, 1
      %v463 = vadd.f32 %v461, %v462
      %s464 = vtos %v463
      %v465 = vstv %s464
      %466 = vst.msk [vmem:[#allocation9] sm:$0x1] %vm449, %v465
    $region33: #{_fwd.5} parent=1 // pred_fallthru
      _
    // Predicated region
    $region34: #{_fwd.5} parent=1 // pred_check
      _
    $region35: #{_fwd.5} parent=1 // pred_check_branch
      %468 = sbr.rel (0) target = $region37
    $region36: #{_fwd.5} parent=1 // pred_region
      %s470 = ssub.s32 16, 16
      %471 = vsyncadd [#allocation8], %s470
      %s473 = sshll.u32 [#allocation7], 4
      %s474 = int_to_ptr.vmem [resolvable:$true] %s473
      %476 = dma.vmem_to_hbm [thread:$0]  %s474, 16, %s6, [#allocation8]
    $region37: #{_fwd.5} parent=1 // pred_fallthru
      _
    // Predicated region
    $region38: #{_fwd.5} parent=1 // pred_check
      _
    $region39: #{_fwd.5} parent=1 // pred_check_branch
      %478 = sbr.rel (0) target = $region41
    $region40: #{_fwd.5} parent=1 // pred_region
      %s480 = ssub.s32 16, 16
      %481 = vsyncadd [#allocation10], %s480
      %s483 = sshll.u32 [#allocation9], 4
      %s484 = int_to_ptr.vmem [resolvable:$true] %s483
      %486 = dma.vmem_to_hbm [thread:$0]  %s484, 16, %s7, [#allocation10]
    $region41: #{_fwd.5} parent=1 // pred_fallthru
      _
    // Predicated region
    $region42: #{_fwd.5} parent=1 // pred_check
      _
    $region43: #{_fwd.5} parent=1 // pred_check_branch
      %488 = sbr.rel (0) target = $region45
    $region44: #{_fwd.5} parent=1 // pred_region
      %489 = dma.done [#allocation8], 16
    $region45: #{_fwd.5} parent=1 // pred_fallthru
      _
    // Predicated region
    $region46: #{_fwd.5} parent=1 // pred_check
      _
    $region47: #{_fwd.5} parent=1 // pred_check_branch
      %491 = sbr.rel (0) target = $region49
    $region48: #{_fwd.5} parent=1 // pred_region
      %492 = dma.done [#allocation10], 16
    $region49: #{_fwd.5} parent=1 // pred_fallthru
      _
    %493 = vsyncpa [#allocation8], 1
    %494 = vsyncpa [#allocation10], 1

// kernel: _fwd.3
$region0: #{_fwd.3}
  #allocation0 [shape = 'u32[]', space=smem, size = 0x4, offset = 0x4, fixed_abs, tag = 'smem constant byte address 0x4 - core index']
  #allocation1 [shape = 'u32[144,128]{1,0:T(1,128)}', space=vmem, size = 0x12000, scoped, tag = 'internal scratch']
  #allocation2 [shape = 's32[1]{0}', space=sflag, size = 0x4, scoped, tag = 'scoped memory for _fwd.3']
  #allocation3 [shape = 'u8[512]{0}', space=smem, size = 0x200, scoped, tag = 'prefetched SMEM operand 0']
  #allocation4 [shape = 'u8[512]{0}', space=smem, size = 0x200, scoped, tag = 'prefetched SMEM operand 1']
  %s0 = inlined_call_operand.vmem [shape: s32[2], index: 0, kind: input, shape index: {}]
  %s1 = inlined_call_operand.vmem [shape: s32[2], index: 1, kind: input, shape index: {}]
  %s2 = inlined_call_operand.vmem [shape: bf16[2,9,32], index: 2, kind: input, shape index: {}]
  %s3 = inlined_call_operand.vmem [shape: bf16[2,16,32], index: 3, kind: input, shape index: {}]
  %s4 = inlined_call_operand.vmem [shape: f32[1,32], index: 4, kind: input, shape index: {}]
  %s5 = inlined_call_operand.vmem [shape: f32[1,32], index: 5, kind: input, shape index: {}]
  %s6 = inlined_call_operand.vmem [shape: bf16[32,96], index: 6, kind: input, shape index: {}]
  %s7 = inlined_call_operand.vmem [shape: bf16[4,8,32], index: 7, kind: input, shape index: {}]
  %s8 = inlined_call_operand.vmem [shape: f32[1,32], index: 8, kind: input, shape index: {}]
  %s9 = inlined_call_operand.vmem [shape: f32[1,32], index: 9, kind: input, shape index: {}]
  %s10 = inlined_call_operand.vmem [shape: f32[1,32], index: 10, kind: input, shape index: {}]
  %s11 = inlined_call_operand.vmem [shape: bf16[32,32], index: 11, kind: input, shape index: {}]
  %s12 = inlined_call_operand.vmem [shape: bf16[32,64], index: 12, kind: input, shape index: {}]
  %s13 = inlined_call_operand.vmem [shape: bf16[4,8,32], index: 13, kind: input, shape index: {}]
  %s14 = inlined_call_operand.vmem [shape: f32[1,32], index: 14, kind: input, shape index: {}]
  %s15 = inlined_call_operand.vmem [shape: f32[1,32], index: 15, kind: input, shape index: {}]
  %s16 = inlined_call_operand.vmem [shape: f32[1,32], index: 16, kind: input, shape index: {}]
  %s17 = inlined_call_operand.vmem [shape: bf16[32,64], index: 17, kind: input, shape index: {}]
  %s18 = inlined_call_operand.vmem [shape: f32[1,64], index: 18, kind: input, shape index: {}]
  %s19 = inlined_call_operand.vmem [shape: bf16[64,32], index: 19, kind: input, shape index: {}]
  %s20 = inlined_call_operand.vmem [shape: f32[1,32], index: 20, kind: input, shape index: {}]
  %s21 = inlined_call_operand.vmem [shape: bf16[2,9,32], index: 21, kind: output, shape index: {}]
  %s22 = sld [smem:[#allocation0]]
  $region109: #{_fwd.3} parent=0
    _
  %s24 = ssub.s32 1, %s22
  %s25 = scalar_select 0, %s24, %s22
  %s26 = sshll.u32 %s0, 4
  %s27 = int_to_ptr.vmem [resolvable:$true] %s26
  %29 = dma.vmem_to_smem %s27, 16, [#allocation3], [#allocation2]
  %s30 = sshll.u32 %s1, 4
  %s31 = int_to_ptr.vmem [resolvable:$true] %s30
  %33 = dma.vmem_to_smem %s31, 16, [#allocation4], [#allocation2]
  %34 = dma.done [#allocation2], 32
  %35 = sfence
  loop: start=0, step=1, limit=4
  $region2: #{_fwd.3} parent=0 // loop_pre_header
    _
  $region3: #{_fwd.3} parent=0 // loop_header
    %s37 = sphi 0, %s41
    %p38 = scmp.ge.s32.totalorder %s37, 4
    %s47 = sphi 0, %s49
    %s50 = sphi 0, %s47
    %s51 = sphi 0, %s50
    %s67 = sphi 0, %s51
    %s73 = sphi 0, %s75
    %s76 = sphi 0, %s73
    %s77 = sphi 0, %s76
    %s93 = sphi 0, %s77
    %s97 = sphi 0, %s97
    %s99 = sphi 0, %s97
    %s100 = sphi 0, %s99
    %s114 = sphi 0, %s100
    %s118 = sphi 0, %s118
    %s120 = sphi 0, %s118
    %s121 = sphi 0, %s120
    %s135 = sphi 0, %s121
    %s139 = sphi 0, %s139
    %s141 = sphi 0, %s139
    %s142 = sphi 0, %s141
    %s156 = sphi 0, %s142
    %s160 = sphi 0, %s160
    %s162 = sphi 0, %s160
    %s163 = sphi 0, %s162
    %s177 = sphi 0, %s163
    %s181 = sphi 0, %s181
    %s183 = sphi 0, %s181
    %s184 = sphi 0, %s183
    %s198 = sphi 0, %s184
    %s202 = sphi 0, %s202
    %s204 = sphi 0, %s202
    %s205 = sphi 0, %s204
    %s219 = sphi 0, %s205
    %s223 = sphi 0, %s223
    %s225 = sphi 0, %s223
    %s226 = sphi 0, %s225
    %s240 = sphi 0, %s226
    %s244 = sphi 0, %s244
    %s246 = sphi 0, %s244
    %s247 = sphi 0, %s246
    %s261 = sphi 0, %s247
    %s265 = sphi 0, %s265
    %s267 = sphi 0, %s265
    %s268 = sphi 0, %s267
    %s282 = sphi 0, %s268
    %s286 = sphi 0, %s286
    %s288 = sphi 0, %s286
    %s289 = sphi 0, %s288
    %s303 = sphi 0, %s289
    %s307 = sphi 0, %s307
    %s309 = sphi 0, %s307
    %s310 = sphi 0, %s309
    %s324 = sphi 0, %s310
    %s328 = sphi 0, %s328
    %s330 = sphi 0, %s328
    %s331 = sphi 0, %s330
    %s345 = sphi 0, %s331
    %s349 = sphi 0, %s349
    %s351 = sphi 0, %s349
    %s352 = sphi 0, %s351
    %s366 = sphi 0, %s352
    %s370 = sphi 0, %s370
    %s372 = sphi 0, %s370
    %s373 = sphi 0, %s372
    %s387 = sphi 0, %s373
    %s391 = sphi 0, %s391
    %s393 = sphi 0, %s391
    %s394 = sphi 0, %s393
    %s408 = sphi 0, %s394
    %s412 = sphi 0, %s412
    %s414 = sphi 0, %s412
    %s415 = sphi 0, %s414
    %s429 = sphi 0, %s415
    %s433 = sphi 0, %s433
    %s435 = sphi 0, %s433
    %s436 = sphi 0, %s435
    %s450 = sphi 0, %s436
    %s456 = sphi 0, %s458
    %s459 = sphi 0, %s456
    %s460 = sphi 0, %s459
    %s476 = sphi 0, %s460
  $region4: #{_fwd.3} parent=0 // loop_header_branch
    %40 = sbr.rel (%p38) target = $region8
  $region5: #{_fwd.3} parent=0 // loop_body
    %s42 = ssub.s32 %s37, 1
    %s43 = ssub.s32 %s37, 2
    %s44 = sadd.s32 %s37, 1
    %s45 = ssub.s32 %s37, %s44
    %p46 = scmp.eq.s32.totalorder %s45, 0
    %s48 = sadd.s32 %s47, 1
    %s49 = scalar_select %p46, %s47, %s48
    %p52 = pneg %p46
    %p53 = scmp.eq.s32.totalorder %s37, 1
    %p54 = por %p52, %p53
    %p55 = scmp.ne.s32.totalorder %s47, %s50
    %p56 = scmp.eq.s32.totalorder %s37, 0
    %p57 = por %p55, %p56
    %p58 = scmp.ne.s32.totalorder %s47, %s50
    %p59 = scmp.eq.s32.totalorder %s42, 1
    %p60 = por %p58, %p59
    %p61 = scmp.ne.s32.totalorder %s50, %s51
    %p62 = scmp.eq.s32.totalorder %s42, 0
    %p63 = por %p61, %p62
    %p64 = scmp.ne.s32.totalorder %s50, %s51
    %p65 = scmp.eq.s32.totalorder %s43, 1
    %p66 = por %p64, %p65
    %p68 = scmp.ne.s32.totalorder %s51, %s67
    %p69 = scmp.eq.s32.totalorder %s43, 0
    %p70 = por %p68, %p69
    %s71 = ssub.s32 %s37, %s44
    %p72 = scmp.eq.s32.totalorder %s71, 0
    %s74 = sadd.s32 %s73, 1
    %s75 = scalar_select %p72, %s73, %s74
    %p78 = pneg %p72
    %p79 = scmp.eq.s32.totalorder %s37, 1
    %p80 = por %p78, %p79
    %p81 = scmp.ne.s32.totalorder %s73, %s76
    %p82 = scmp.eq.s32.totalorder %s37, 0
    %p83 = por %p81, %p82
    %p84 = scmp.ne.s32.totalorder %s73, %s76
    %p85 = scmp.eq.s32.totalorder %s42, 1
    %p86 = por %p84, %p85
    %p87 = scmp.ne.s32.totalorder %s76, %s77
    %p88 = scmp.eq.s32.totalorder %s42, 0
    %p89 = por %p87, %p88
    %p90 = scmp.ne.s32.totalorder %s76, %s77
    %p91 = scmp.eq.s32.totalorder %s43, 1
    %p92 = por %p90, %p91
    %p94 = scmp.ne.s32.totalorder %s77, %s93
    %p95 = scmp.eq.s32.totalorder %s43, 0
    %p96 = por %p94, %p95
    %s98 = sadd.s32 %s97, 1
    %p101 = scmp.eq.s32.totalorder %s37, 1
    %p102 = scmp.ne.s32.totalorder %s97, %s99
    %p103 = scmp.eq.s32.totalorder %s37, 0
    %p104 = por %p102, %p103
    %p105 = scmp.ne.s32.totalorder %s97, %s99
    %p106 = scmp.eq.s32.totalorder %s42, 1
    %p107 = por %p105, %p106
    %p108 = scmp.ne.s32.totalorder %s99, %s100
    %p109 = scmp.eq.s32.totalorder %s42, 0
    %p110 = por %p108, %p109
    %p111 = scmp.ne.s32.totalorder %s99, %s100
    %p112 = scmp.eq.s32.totalorder %s43, 1
    %p113 = por %p111, %p112
    %p115 = scmp.ne.s32.totalorder %s100, %s114
    %p116 = scmp.eq.s32.totalorder %s43, 0
    %p117 = por %p115, %p116
    %s119 = sadd.s32 %s118, 1
    %p122 = scmp.eq.s32.totalorder %s37, 1
    %p123 = scmp.ne.s32.totalorder %s118, %s120
    %p124 = scmp.eq.s32.totalorder %s37, 0
    %p125 = por %p123, %p124
    %p126 = scmp.ne.s32.totalorder %s118, %s120
    %p127 = scmp.eq.s32.totalorder %s42, 1
    %p128 = por %p126, %p127
    %p129 = scmp.ne.s32.totalorder %s120, %s121
    %p130 = scmp.eq.s32.totalorder %s42, 0
    %p131 = por %p129, %p130
    %p132 = scmp.ne.s32.totalorder %s120, %s121
    %p133 = scmp.eq.s32.totalorder %s43, 1
    %p134 = por %p132, %p133
    %p136 = scmp.ne.s32.totalorder %s121, %s135
    %p137 = scmp.eq.s32.totalorder %s43, 0
    %p138 = por %p136, %p137
    %s140 = sadd.s32 %s139, 1
    %p143 = scmp.eq.s32.totalorder %s37, 1
    %p144 = scmp.ne.s32.totalorder %s139, %s141
    %p145 = scmp.eq.s32.totalorder %s37, 0
    %p146 = por %p144, %p145
    %p147 = scmp.ne.s32.totalorder %s139, %s141
    %p148 = scmp.eq.s32.totalorder %s42, 1
    %p149 = por %p147, %p148
    %p150 = scmp.ne.s32.totalorder %s141, %s142
    %p151 = scmp.eq.s32.totalorder %s42, 0
    %p152 = por %p150, %p151
    %p153 = scmp.ne.s32.totalorder %s141, %s142
    %p154 = scmp.eq.s32.totalorder %s43, 1
    %p155 = por %p153, %p154
    %p157 = scmp.ne.s32.totalorder %s142, %s156
    %p158 = scmp.eq.s32.totalorder %s43, 0
    %p159 = por %p157, %p158
    %s161 = sadd.s32 %s160, 1
    %p164 = scmp.eq.s32.totalorder %s37, 1
    %p165 = scmp.ne.s32.totalorder %s160, %s162
    %p166 = scmp.eq.s32.totalorder %s37, 0
    %p167 = por %p165, %p166
    %p168 = scmp.ne.s32.totalorder %s160, %s162
    %p169 = scmp.eq.s32.totalorder %s42, 1
    %p170 = por %p168, %p169
    %p171 = scmp.ne.s32.totalorder %s162, %s163
    %p172 = scmp.eq.s32.totalorder %s42, 0
    %p173 = por %p171, %p172
    %p174 = scmp.ne.s32.totalorder %s162, %s163
    %p175 = scmp.eq.s32.totalorder %s43, 1
    %p176 = por %p174, %p175
    %p178 = scmp.ne.s32.totalorder %s163, %s177
    %p179 = scmp.eq.s32.totalorder %s43, 0
    %p180 = por %p178, %p179
    %s182 = sadd.s32 %s181, 1
    %p185 = scmp.eq.s32.totalorder %s37, 1
    %p186 = scmp.ne.s32.totalorder %s181, %s183
    %p187 = scmp.eq.s32.totalorder %s37, 0
    %p188 = por %p186, %p187
    %p189 = scmp.ne.s32.totalorder %s181, %s183
    %p190 = scmp.eq.s32.totalorder %s42, 1
    %p191 = por %p189, %p190
    %p192 = scmp.ne.s32.totalorder %s183, %s184
    %p193 = scmp.eq.s32.totalorder %s42, 0
    %p194 = por %p192, %p193
    %p195 = scmp.ne.s32.totalorder %s183, %s184
    %p196 = scmp.eq.s32.totalorder %s43, 1
    %p197 = por %p195, %p196
    %p199 = scmp.ne.s32.totalorder %s184, %s198
    %p200 = scmp.eq.s32.totalorder %s43, 0
    %p201 = por %p199, %p200
    %s203 = sadd.s32 %s202, 1
    %p206 = scmp.eq.s32.totalorder %s37, 1
    %p207 = scmp.ne.s32.totalorder %s202, %s204
    %p208 = scmp.eq.s32.totalorder %s37, 0
    %p209 = por %p207, %p208
    %p210 = scmp.ne.s32.totalorder %s202, %s204
    %p211 = scmp.eq.s32.totalorder %s42, 1
    %p212 = por %p210, %p211
    %p213 = scmp.ne.s32.totalorder %s204, %s205
    %p214 = scmp.eq.s32.totalorder %s42, 0
    %p215 = por %p213, %p214
    %p216 = scmp.ne.s32.totalorder %s204, %s205
    %p217 = scmp.eq.s32.totalorder %s43, 1
    %p218 = por %p216, %p217
    %p220 = scmp.ne.s32.totalorder %s205, %s219
    %p221 = scmp.eq.s32.totalorder %s43, 0
    %p222 = por %p220, %p221
    %s224 = sadd.s32 %s223, 1
    %p227 = scmp.eq.s32.totalorder %s37, 1
    %p228 = scmp.ne.s32.totalorder %s223, %s225
    %p229 = scmp.eq.s32.totalorder %s37, 0
    %p230 = por %p228, %p229
    %p231 = scmp.ne.s32.totalorder %s223, %s225
    %p232 = scmp.eq.s32.totalorder %s42, 1
    %p233 = por %p231, %p232
    %p234 = scmp.ne.s32.totalorder %s225, %s226
    %p235 = scmp.eq.s32.totalorder %s42, 0
    %p236 = por %p234, %p235
    %p237 = scmp.ne.s32.totalorder %s225, %s226
    %p238 = scmp.eq.s32.totalorder %s43, 1
    %p239 = por %p237, %p238
    %p241 = scmp.ne.s32.totalorder %s226, %s240
    %p242 = scmp.eq.s32.totalorder %s43, 0
    %p243 = por %p241, %p242
    %s245 = sadd.s32 %s244, 1
    %p248 = scmp.eq.s32.totalorder %s37, 1
    %p249 = scmp.ne.s32.totalorder %s244, %s246
    %p250 = scmp.eq.s32.totalorder %s37, 0
    %p251 = por %p249, %p250
    %p252 = scmp.ne.s32.totalorder %s244, %s246
    %p253 = scmp.eq.s32.totalorder %s42, 1
    %p254 = por %p252, %p253
    %p255 = scmp.ne.s32.totalorder %s246, %s247
    %p256 = scmp.eq.s32.totalorder %s42, 0
    %p257 = por %p255, %p256
    %p258 = scmp.ne.s32.totalorder %s246, %s247
    %p259 = scmp.eq.s32.totalorder %s43, 1
    %p260 = por %p258, %p259
    %p262 = scmp.ne.s32.totalorder %s247, %s261
    %p263 = scmp.eq.s32.totalorder %s43, 0
    %p264 = por %p262, %p263
    %s266 = sadd.s32 %s265, 1
    %p269 = scmp.eq.s32.totalorder %s37, 1
    %p270 = scmp.ne.s32.totalorder %s265, %s267
    %p271 = scmp.eq.s32.totalorder %s37, 0
    %p272 = por %p270, %p271
    %p273 = scmp.ne.s32.totalorder %s265, %s267
    %p274 = scmp.eq.s32.totalorder %s42, 1
    %p275 = por %p273, %p274
    %p276 = scmp.ne.s32.totalorder %s267, %s268
    %p277 = scmp.eq.s32.totalorder %s42, 0
    %p278 = por %p276, %p277
    %p279 = scmp.ne.s32.totalorder %s267, %s268
    %p280 = scmp.eq.s32.totalorder %s43, 1
    %p281 = por %p279, %p280
    %p283 = scmp.ne.s32.totalorder %s268, %s282
    %p284 = scmp.eq.s32.totalorder %s43, 0
    %p285 = por %p283, %p284
    %s287 = sadd.s32 %s286, 1
    %p290 = scmp.eq.s32.totalorder %s37, 1
    %p291 = scmp.ne.s32.totalorder %s286, %s288
    %p292 = scmp.eq.s32.totalorder %s37, 0
    %p293 = por %p291, %p292
    %p294 = scmp.ne.s32.totalorder %s286, %s288
    %p295 = scmp.eq.s32.totalorder %s42, 1
    %p296 = por %p294, %p295
    %p297 = scmp.ne.s32.totalorder %s288, %s289
    %p298 = scmp.eq.s32.totalorder %s42, 0
    %p299 = por %p297, %p298
    %p300 = scmp.ne.s32.totalorder %s288, %s289
    %p301 = scmp.eq.s32.totalorder %s43, 1
    %p302 = por %p300, %p301
    %p304 = scmp.ne.s32.totalorder %s289, %s303
    %p305 = scmp.eq.s32.totalorder %s43, 0
    %p306 = por %p304, %p305
    %s308 = sadd.s32 %s307, 1
    %p311 = scmp.eq.s32.totalorder %s37, 1
    %p312 = scmp.ne.s32.totalorder %s307, %s309
    %p313 = scmp.eq.s32.totalorder %s37, 0
    %p314 = por %p312, %p313
    %p315 = scmp.ne.s32.totalorder %s307, %s309
    %p316 = scmp.eq.s32.totalorder %s42, 1
    %p317 = por %p315, %p316
    %p318 = scmp.ne.s32.totalorder %s309, %s310
    %p319 = scmp.eq.s32.totalorder %s42, 0
    %p320 = por %p318, %p319
    %p321 = scmp.ne.s32.totalorder %s309, %s310
    %p322 = scmp.eq.s32.totalorder %s43, 1
    %p323 = por %p321, %p322
    %p325 = scmp.ne.s32.totalorder %s310, %s324
    %p326 = scmp.eq.s32.totalorder %s43, 0
    %p327 = por %p325, %p326
    %s329 = sadd.s32 %s328, 1
    %p332 = scmp.eq.s32.totalorder %s37, 1
    %p333 = scmp.ne.s32.totalorder %s328, %s330
    %p334 = scmp.eq.s32.totalorder %s37, 0
    %p335 = por %p333, %p334
    %p336 = scmp.ne.s32.totalorder %s328, %s330
    %p337 = scmp.eq.s32.totalorder %s42, 1
    %p338 = por %p336, %p337
    %p339 = scmp.ne.s32.totalorder %s330, %s331
    %p340 = scmp.eq.s32.totalorder %s42, 0
    %p341 = por %p339, %p340
    %p342 = scmp.ne.s32.totalorder %s330, %s331
    %p343 = scmp.eq.s32.totalorder %s43, 1
    %p344 = por %p342, %p343
    %p346 = scmp.ne.s32.totalorder %s331, %s345
    %p347 = scmp.eq.s32.totalorder %s43, 0
    %p348 = por %p346, %p347
    %s350 = sadd.s32 %s349, 1
    %p353 = scmp.eq.s32.totalorder %s37, 1
    %p354 = scmp.ne.s32.totalorder %s349, %s351
    %p355 = scmp.eq.s32.totalorder %s37, 0
    %p356 = por %p354, %p355
    %p357 = scmp.ne.s32.totalorder %s349, %s351
    %p358 = scmp.eq.s32.totalorder %s42, 1
    %p359 = por %p357, %p358
    %p360 = scmp.ne.s32.totalorder %s351, %s352
    %p361 = scmp.eq.s32.totalorder %s42, 0
    %p362 = por %p360, %p361
    %p363 = scmp.ne.s32.totalorder %s351, %s352
    %p364 = scmp.eq.s32.totalorder %s43, 1
    %p365 = por %p363, %p364
    %p367 = scmp.ne.s32.totalorder %s352, %s366
    %p368 = scmp.eq.s32.totalorder %s43, 0
    %p369 = por %p367, %p368
    %s371 = sadd.s32 %s370, 1
    %p374 = scmp.eq.s32.totalorder %s37, 1
    %p375 = scmp.ne.s32.totalorder %s370, %s372
    %p376 = scmp.eq.s32.totalorder %s37, 0
    %p377 = por %p375, %p376
    %p378 = scmp.ne.s32.totalorder %s370, %s372
    %p379 = scmp.eq.s32.totalorder %s42, 1
    %p380 = por %p378, %p379
    %p381 = scmp.ne.s32.totalorder %s372, %s373
    %p382 = scmp.eq.s32.totalorder %s42, 0
    %p383 = por %p381, %p382
    %p384 = scmp.ne.s32.totalorder %s372, %s373
    %p385 = scmp.eq.s32.totalorder %s43, 1
    %p386 = por %p384, %p385
    %p388 = scmp.ne.s32.totalorder %s373, %s387
    %p389 = scmp.eq.s32.totalorder %s43, 0
    %p390 = por %p388, %p389
    %s392 = sadd.s32 %s391, 1
    %p395 = scmp.eq.s32.totalorder %s37, 1
    %p396 = scmp.ne.s32.totalorder %s391, %s393
    %p397 = scmp.eq.s32.totalorder %s37, 0
    %p398 = por %p396, %p397
    %p399 = scmp.ne.s32.totalorder %s391, %s393
    %p400 = scmp.eq.s32.totalorder %s42, 1
    %p401 = por %p399, %p400
    %p402 = scmp.ne.s32.totalorder %s393, %s394
    %p403 = scmp.eq.s32.totalorder %s42, 0
    %p404 = por %p402, %p403
    %p405 = scmp.ne.s32.totalorder %s393, %s394
    %p406 = scmp.eq.s32.totalorder %s43, 1
    %p407 = por %p405, %p406
    %p409 = scmp.ne.s32.totalorder %s394, %s408
    %p410 = scmp.eq.s32.totalorder %s43, 0
    %p411 = por %p409, %p410
    %s413 = sadd.s32 %s412, 1
    %p416 = scmp.eq.s32.totalorder %s37, 1
    %p417 = scmp.ne.s32.totalorder %s412, %s414
    %p418 = scmp.eq.s32.totalorder %s37, 0
    %p419 = por %p417, %p418
    %p420 = scmp.ne.s32.totalorder %s412, %s414
    %p421 = scmp.eq.s32.totalorder %s42, 1
    %p422 = por %p420, %p421
    %p423 = scmp.ne.s32.totalorder %s414, %s415
    %p424 = scmp.eq.s32.totalorder %s42, 0
    %p425 = por %p423, %p424
    %p426 = scmp.ne.s32.totalorder %s414, %s415
    %p427 = scmp.eq.s32.totalorder %s43, 1
    %p428 = por %p426, %p427
    %p430 = scmp.ne.s32.totalorder %s415, %s429
    %p431 = scmp.eq.s32.totalorder %s43, 0
    %p432 = por %p430, %p431
    %s434 = sadd.s32 %s433, 1
    %p437 = scmp.eq.s32.totalorder %s37, 1
    %p438 = scmp.ne.s32.totalorder %s433, %s435
    %p439 = scmp.eq.s32.totalorder %s37, 0
    %p440 = por %p438, %p439
    %p441 = scmp.ne.s32.totalorder %s433, %s435
    %p442 = scmp.eq.s32.totalorder %s42, 1
    %p443 = por %p441, %p442
    %p444 = scmp.ne.s32.totalorder %s435, %s436
    %p445 = scmp.eq.s32.totalorder %s42, 0
    %p446 = por %p444, %p445
    %p447 = scmp.ne.s32.totalorder %s435, %s436
    %p448 = scmp.eq.s32.totalorder %s43, 1
    %p449 = por %p447, %p448
    %p451 = scmp.ne.s32.totalorder %s436, %s450
    %p452 = scmp.eq.s32.totalorder %s43, 0
    %p453 = por %p451, %p452
    %s454 = ssub.s32 %s37, %s44
    %p455 = scmp.eq.s32.totalorder %s454, 0
    %s457 = sadd.s32 %s456, 1
    %s458 = scalar_select %p455, %s456, %s457
    %p461 = pneg %p455
    %p462 = scmp.eq.s32.totalorder %s37, 1
    %p463 = por %p461, %p462
    %p464 = scmp.ne.s32.totalorder %s456, %s459
    %p465 = scmp.eq.s32.totalorder %s37, 0
    %p466 = por %p464, %p465
    %p467 = scmp.ne.s32.totalorder %s456, %s459
    %p468 = scmp.eq.s32.totalorder %s42, 1
    %p469 = por %p467, %p468
    %p470 = scmp.ne.s32.totalorder %s459, %s460
    %p471 = scmp.eq.s32.totalorder %s42, 0
    %p472 = por %p470, %p471
    %p473 = scmp.ne.s32.totalorder %s459, %s460
    %p474 = scmp.eq.s32.totalorder %s43, 1
    %p475 = por %p473, %p474
    %p477 = scmp.ne.s32.totalorder %s460, %s476
    %p478 = scmp.eq.s32.totalorder %s43, 0
    %p479 = por %p477, %p478
    %p480 = scmp.le.s32.totalorder 1, %s37
    %p481 = scmp.lt.s32.totalorder %s37, 3
    %p482 = pnand %p480, %p481
    %p483 = pneg %p482
    // Predicated region
    $region9: #{_fwd.3} parent=5 // pred_check
      _
    $region10: #{_fwd.3} parent=5 // pred_check_branch
      %485 = sbr.rel (%p482) target = $region12
    $region11: #{_fwd.3} parent=5 // pred_region
      %s486 = ssub.s32 %s37, 1
      // Predicated region
      $region13: #{_fwd.3} parent=11 // pred_check
        %p487 = pneg %p110
      $region14: #{_fwd.3} parent=11 // pred_check_branch
        %489 = sbr.rel (%p487) target = $region16
      $region15: #{_fwd.3} parent=11 // pred_region
        _
      $region16: #{_fwd.3} parent=11 // pred_fallthru
        _
      // Predicated region
      $region17: #{_fwd.3} parent=11 // pred_check
        %p490 = pneg %p131
      $region18: #{_fwd.3} parent=11 // pred_check_branch
        %492 = sbr.rel (%p490) target = $region20
      $region19: #{_fwd.3} parent=11 // pred_region
        _
      $region20: #{_fwd.3} parent=11 // pred_fallthru
        _
      // Predicated region
      $region21: #{_fwd.3} parent=11 // pred_check
        %p493 = pneg %p152
      $region22: #{_fwd.3} parent=11 // pred_check_branch
        %495 = sbr.rel (%p493) target = $region24
      $region23: #{_fwd.3} parent=11 // pred_region
        _
      $region24: #{_fwd.3} parent=11 // pred_fallthru
        _
      // Predicated region
      $region25: #{_fwd.3} parent=11 // pred_check
        %p496 = pneg %p173
      $region26: #{_fwd.3} parent=11 // pred_check_branch
        %498 = sbr.rel (%p496) target = $region28
      $region27: #{_fwd.3} parent=11 // pred_region
        _
      $region28: #{_fwd.3} parent=11 // pred_fallthru
        _
      // Predicated region
      $region29: #{_fwd.3} parent=11 // pred_check
        %p499 = pneg %p194
      $region30: #{_fwd.3} parent=11 // pred_check_branch
        %501 = sbr.rel (%p499) target = $region32
      $region31: #{_fwd.3} parent=11 // pred_region
        _
      $region32: #{_fwd.3} parent=11 // pred_fallthru
        _
      // Predicated region
      $region33: #{_fwd.3} parent=11 // pred_check
        %p502 = pneg %p215
      $region34: #{_fwd.3} parent=11 // pred_check_branch
        %504 = sbr.rel (%p502) target = $region36
      $region35: #{_fwd.3} parent=11 // pred_region
        _
      $region36: #{_fwd.3} parent=11 // pred_fallthru
        _
      // Predicated region
      $region37: #{_fwd.3} parent=11 // pred_check
        %p505 = pneg %p236
      $region38: #{_fwd.3} parent=11 // pred_check_branch
        %507 = sbr.rel (%p505) target = $region40
      $region39: #{_fwd.3} parent=11 // pred_region
        _
      $region40: #{_fwd.3} parent=11 // pred_fallthru
        _
      // Predicated region
      $region41: #{_fwd.3} parent=11 // pred_check
        %p508 = pneg %p257
      $region42: #{_fwd.3} parent=11 // pred_check_branch
        %510 = sbr.rel (%p508) target = $region44
      $region43: #{_fwd.3} parent=11 // pred_region
        _
      $region44: #{_fwd.3} parent=11 // pred_fallthru
        _
      // Predicated region
      $region45: #{_fwd.3} parent=11 // pred_check
        %p511 = pneg %p278
      $region46: #{_fwd.3} parent=11 // pred_check_branch
        %513 = sbr.rel (%p511) target = $region48
      $region47: #{_fwd.3} parent=11 // pred_region
        _
      $region48: #{_fwd.3} parent=11 // pred_fallthru
        _
      // Predicated region
      $region49: #{_fwd.3} parent=11 // pred_check
        %p514 = pneg %p299
      $region50: #{_fwd.3} parent=11 // pred_check_branch
        %516 = sbr.rel (%p514) target = $region52
      $region51: #{_fwd.3} parent=11 // pred_region
        _
      $region52: #{_fwd.3} parent=11 // pred_fallthru
        _
      // Predicated region
      $region53: #{_fwd.3} parent=11 // pred_check
        %p517 = pneg %p320
      $region54: #{_fwd.3} parent=11 // pred_check_branch
        %519 = sbr.rel (%p517) target = $region56
      $region55: #{_fwd.3} parent=11 // pred_region
        _
      $region56: #{_fwd.3} parent=11 // pred_fallthru
        _
      // Predicated region
      $region57: #{_fwd.3} parent=11 // pred_check
        %p520 = pneg %p341
      $region58: #{_fwd.3} parent=11 // pred_check_branch
        %522 = sbr.rel (%p520) target = $region60
      $region59: #{_fwd.3} parent=11 // pred_region
        _
      $region60: #{_fwd.3} parent=11 // pred_fallthru
        _
      // Predicated region
      $region61: #{_fwd.3} parent=11 // pred_check
        %p523 = pneg %p362
      $region62: #{_fwd.3} parent=11 // pred_check_branch
        %525 = sbr.rel (%p523) target = $region64
      $region63: #{_fwd.3} parent=11 // pred_region
        _
      $region64: #{_fwd.3} parent=11 // pred_fallthru
        _
      // Predicated region
      $region65: #{_fwd.3} parent=11 // pred_check
        %p526 = pneg %p383
      $region66: #{_fwd.3} parent=11 // pred_check_branch
        %528 = sbr.rel (%p526) target = $region68
      $region67: #{_fwd.3} parent=11 // pred_region
        _
      $region68: #{_fwd.3} parent=11 // pred_fallthru
        _
      // Predicated region
      $region69: #{_fwd.3} parent=11 // pred_check
        %p529 = pneg %p404
      $region70: #{_fwd.3} parent=11 // pred_check_branch
        %531 = sbr.rel (%p529) target = $region72
      $region71: #{_fwd.3} parent=11 // pred_region
        _
      $region72: #{_fwd.3} parent=11 // pred_fallthru
        _
      // Predicated region
      $region73: #{_fwd.3} parent=11 // pred_check
        %p532 = pneg %p425
      $region74: #{_fwd.3} parent=11 // pred_check_branch
        %534 = sbr.rel (%p532) target = $region76
      $region75: #{_fwd.3} parent=11 // pred_region
        _
      $region76: #{_fwd.3} parent=11 // pred_fallthru
        _
      // Predicated region
      $region77: #{_fwd.3} parent=11 // pred_check
        %p535 = pneg %p446
      $region78: #{_fwd.3} parent=11 // pred_check_branch
        %537 = sbr.rel (%p535) target = $region80
      $region79: #{_fwd.3} parent=11 // pred_region
        _
      $region80: #{_fwd.3} parent=11 // pred_fallthru
        _
    $region12: #{_fwd.3} parent=5 // pred_fallthru
      _
    %p538 = scmp.lt.s32.totalorder %s37, 2
    // Predicated region
    $region81: #{_fwd.3} parent=5 // pred_check
      %p539 = pneg %p538
    $region82: #{_fwd.3} parent=5 // pred_check_branch
      %541 = sbr.rel (%p539) target = $region84
    $region83: #{_fwd.3} parent=5 // pred_region
      // Predicated region
      $region85: #{_fwd.3} parent=83 // pred_check
        %p542 = pneg %p57
      $region86: #{_fwd.3} parent=83 // pred_check_branch
        %544 = sbr.rel (%p542) target = $region88
      $region87: #{_fwd.3} parent=83 // pred_region
        %p545 = scmp.lt.s32.totalorder %s37, 1
        %s546 = scalar_select %p545, %s37, 1
        %s547 = smul.addr %s546, 2
        %s548 = smul.addr %s547, 4
        %s549 = scalar_lea.vmem %s2, %s548
      $region88: #{_fwd.3} parent=83 // pred_fallthru
        _
      // Predicated region
      $region89: #{_fwd.3} parent=83 // pred_check
        %p550 = pneg %p83
      $region90: #{_fwd.3} parent=83 // pred_check_branch
        %552 = sbr.rel (%p550) target = $region92
      $region91: #{_fwd.3} parent=83 // pred_region
        %p553 = scmp.lt.s32.totalorder %s37, 1
        %s554 = scalar_select %p553, %s37, 1
        %s555 = smul.addr %s554, 2
        %s556 = smul.addr %s555, 4
        %s557 = scalar_lea.vmem %s3, %s556
      $region92: #{_fwd.3} parent=83 // pred_fallthru
        _
    $region84: #{_fwd.3} parent=5 // pred_fallthru
      _
    %p558 = scmp.le.s32.totalorder 1, %s37
    %p559 = scmp.lt.s32.totalorder %s37, 3
    %p560 = pnand %p558, %p559
    %p561 = pneg %p560
    // Predicated region
    $region93: #{_fwd.3} parent=5 // pred_check
      _
    $region94: #{_fwd.3} parent=5 // pred_check_branch
      %563 = sbr.rel (%p560) target = $region96
    $region95: #{_fwd.3} parent=5 // pred_region
      %s564 = ssub.s32 %s37, 1
      %p565 = scmp.lt.s32.totalorder %s42, 1
      %s566 = scalar_select %p565, %s42, 1
      %s567 = smul.addr %s566, 2
      %s568 = smul.addr %s567, 4
      %s569 = scalar_lea.vmem %s2, %s568
      %p570 = pneg %p63
      %p571 = pneg %p60
      %p572 = scmp.lt.s32.totalorder %s42, 1
      %s573 = scalar_select %p572, %s42, 1
      %s574 = smul.addr %s573, 2
      %s575 = smul.addr %s574, 4
      %s576 = scalar_lea.vmem %s3, %s575
      %p577 = pneg %p89
      %p578 = pneg %p86
      %p579 = pneg %p110
      %p580 = pneg %p107
      %p581 = pneg %p131
      %p582 = pneg %p128
      %p583 = pneg %p152
      %p584 = pneg %p149
      %p585 = pneg %p173
      %p586 = pneg %p170
      %p587 = pneg %p194
      %p588 = pneg %p191
      %p589 = pneg %p215
      %p590 = pneg %p212
      %p591 = pneg %p236
      %p592 = pneg %p233
      %p593 = pneg %p257
      %p594 = pneg %p254
      %p595 = pneg %p278
      %p596 = pneg %p275
      %p597 = pneg %p299
      %p598 = pneg %p296
      %p599 = pneg %p320
      %p600 = pneg %p317
      %p601 = pneg %p341
      %p602 = pneg %p338
      %p603 = pneg %p362
      %p604 = pneg %p359
      %p605 = pneg %p383
      %p606 = pneg %p380
      %p607 = pneg %p404
      %p608 = pneg %p401
      %p609 = pneg %p425
      %p610 = pneg %p422
      %p611 = pneg %p446
      %p612 = pneg %p443
      %p613 = pneg %p472
      %p614 = pneg %p469
      %p615 = scmp.lt.s32.totalorder %s42, 1
      %s616 = scalar_select %p615, %s42, 1
      %s617 = smul.addr %s616, 2
      %s618 = smul.addr %s617, 4
      %s619 = scalar_lea.vmem %s21, %s618
      %p620 = scmp.lt.s32.totalorder %s42, 1
      %s621 = scalar_select %p620, %s42, 1
      %s622 = smul.addr %s621, 2
      %s623 = smul.addr %s622, 4
      %s624 = scalar_lea.vmem %s2, %s623
      %p625 = scmp.lt.s32.totalorder %s42, 1
      %s626 = scalar_select %p625, %s42, 1
      %s627 = smul.addr %s626, 2
      %s628 = smul.addr %s627, 4
      %s629 = scalar_lea.vmem %s3, %s628
      %p630 = scmp.lt.s32.totalorder %s42, 1
      %s631 = scalar_select %p630, %s42, 1
      %s632 = smul.addr %s631, 2
      %s633 = smul.addr %s632, 4
      %s634 = scalar_lea.vmem %s21, %s633
      %s636 = sld [smem:[#allocation3 + %s42]]
      %s637 = sld [smem:[#allocation4 + %s42]]
      %v638 = vld [vmem:[%s624] sm:$0xf]
      %v639 = vld [vmem:[%s624 + $0x4] sm:$0x1]
      %v640 = vunpack.c.l.bf16 %v638
      %v641 = vunpack.c.l.bf16 %v639
      %v642 = vld [vmem:[%s629] sm:$0xf]
      %v643 = vld [vmem:[%s629 + $0x4] sm:$0xf]
      %v644 = vld [vmem:[%s4] sm:$0x1]
      %v645 = vld [vmem:[%s5] sm:$0x1]
      %vm646 = vcmask 261120
      %v647 = vsel %vm646, %v640, 0.0
      %648 = vadd.xlane.f32.xlu0 %v647
      %v649 = vpop.xlane.xlu0 %648
      %vm650 = vcmask 253952
      %v651 = vsel %vm650, %v641, 0.0
      %652 = vadd.xlane.f32.xlu0 %v651
      %v653 = vpop.xlane.xlu0 %652
      %v654 = vrcp.pop 32.0
      %v655 = vmul.f32 %v649, %v654
      %v656 = vmul.f32 %v653, %v654
      %v657 = vsub.f32 %v640, %v655
      %v658 = vsub.f32 %v641, %v656
      %v659 = vmul.f32 %v657, %v657
      %v660 = vmul.f32 %v658, %v658
      %v661 = vsel %vm646, %v659, 0.0
      %662 = vadd.xlane.f32.xlu0 %v661
      %v663 = vpop.xlane.xlu0 %662
      %v664 = vsel %vm650, %v660, 0.0
      %665 = vadd.xlane.f32.xlu0 %v664
      %v666 = vpop.xlane.xlu0 %665
      %v667 = vmul.f32 %v663, %v654
      %v668 = vmul.f32 %v666, %v654
      %v669 = vadd.f32 %v667, 1e-06
      %v670 = vadd.f32 %v668, 1e-06
      %v671 = vrsqrt.pop %v669
      %v672 = vrsqrt.pop %v670
      %v673 = vmul.f32 %v657, %v671
      %v674 = vmul.f32 %v658, %v672
      %v676 = vlaneseq
      %v677 = vshrl.u32 %v676, 7
      %v678 = vsub.s32 0, %v677
      %v679 = vrot.slane %v644, %v678
      %v681 = vmul.f32 %v673, %v679
      %v682 = vmul.f32 %v674, %v679
      %v684 = vlaneseq
      %v685 = vshrl.u32 %v684, 7
      %v686 = vsub.s32 0, %v685
      %v687 = vrot.slane %v645, %v686
      %v689 = vadd.f32 %v681, %v687
      %v690 = vadd.f32 %v682, %v687
      %v691 = vpack.c.bf16 %v690, %v689
      %v692 = vld [vmem:[%s6] sm:$0xf]
      %v693 = vld [vmem:[%s6 + $0x4] sm:$0xf]
      %v694 = vld [vmem:[%s6 + $0x8] sm:$0xf]
      %v695 = vld [vmem:[%s6 + $0xc] sm:$0xf]
      %v700 = vunpack.c.l.b16 %v692
      %v701 = vunpack.c.l.b16 %v693
      %v702 = vunpack.c.l.b16 %v694
      %v703 = vunpack.c.l.b16 %v695
      %v704 = vpack.c.b16 %v701, %v700
      %v705 = vpack.c.b16 %v703, %v702
      %v709 = vsel %vm646, %v691, 0
      %711 = vmatprep.subr.bf16.mxu0 0
      %712 = vmatpush1.bf16.msra.mxu0 0
      %713 = vmatprep.subr.bf16.mxu0 0
      %714 = vmatpush1.bf16.msra.mxu0 0
      %715 = vmatprep.subr.bf16.mxu0 0
      %716 = vmatpush1.bf16.msra.mxu0 0
      %717 = vmatprep.subr.bf16.mxu0 0
      %718 = vmatpush1.bf16.msra.mxu0 0
      %719 = vmatprep.subr.bf16.mxu0 0
      %720 = vmatpush1.bf16.msra.mxu0 0
      %721 = vmatprep.subr.bf16.mxu0 0
      %722 = vmatpush1.bf16.msra.mxu0 0
      %723 = vmatprep.subr.bf16.mxu0 0
      %724 = vmatpush1.bf16.msra.mxu0 %v705
      %725 = vmatprep.subr.bf16.mxu0 0
      %726 = vmatpush1.bf16.msra.mxu0 %v704
      %727 = vmatprep.subr.bf16.mxu0 0
      %728 = vmatpush2.bf16.msra.mxu0 0
      %729 = vmatprep.subr.bf16.mxu0 0
      %730 = vmatpush2.bf16.msra.mxu0 0
      %731 = vmatprep.subr.bf16.mxu0 0
      %732 = vmatpush2.bf16.msra.mxu0 0
      %733 = vmatprep.subr.bf16.mxu0 0
      %734 = vmatpush2.bf16.msra.mxu0 0
      %735 = vmatprep.subr.bf16.mxu0 0
      %736 = vmatpush2.bf16.msra.mxu0 0
      %737 = vmatprep.subr.bf16.mxu0 0
      %738 = vmatpush2.bf16.msra.mxu0 0
      %739 = vmatprep.subr.bf16.mxu0 0
      %740 = vmatpush2.bf16.msra.mxu0 0
      %741 = vmatprep.subr.bf16.mxu0 0
      %742 = vmatpush2.bf16.msra.mxu0 0
      %743 = vmatprep.mubr.bf16.mxu0 0
      %744 = vmatmul.mubr.bf16.gmra.mxu0 %v709
      %v745 = vpop.f32.mrf.mxu0
      %v746 = vadd.f32 0.0, %v745
      %v747 = vpop.f32.mrf.mxu0
      %v748 = vpop.f32.mrf.mxu0
      %v749 = vadd.f32 0.0, %v748
      %v750 = vpop.f32.mrf.mxu0
      %751 = vdwg.mxu0
      %v752 = vlaneseq
      %v753 = vand.u32 %v752, 127
      %v754 = vlaneseq
      %v755 = vshrl.u32 %v754, 7
      %v756 = vadd.s32 %v755, 8
      %v757 = vstv %s636
      %vm758 = vcmp.lt.s32.totalorder %v753, %v757
      %vm759 = vcmp.le.s32.totalorder %v753, %v755
      %vm760 = vcmp.le.s32.totalorder %v753, %v756
      %vm761 = vmand %vm758, %vm759
      %vm762 = vmand %vm758, %vm760
      %v763 = vld [vmem:[%s8] sm:$0x1]
      %v764 = vpack.c.bf16 %v749, %v746
      %766 = vrot.lane.b32.xlu0 %v764, 96
      %v767 = vpop.permute.xlu0 %766
      %vm768 = vcmask 64512
      %v770 = vsel %vm768, %v764, 0
      %v773 = vsel %vm768, %v767, 0
      %775 = vmatprep.subr.bf16.mxu0 0
      %776 = vmatpush1.bf16.xpose.msra.mxu0 0
      %777 = vmatprep.subr.bf16.mxu0 0
      %778 = vmatpush1.bf16.xpose.msra.mxu0 0
      %779 = vmatprep.subr.bf16.mxu0 0
      %780 = vmatpush1.bf16.xpose.msra.mxu0 0
      %781 = vmatprep.subr.bf16.mxu0 0
      %782 = vmatpush1.bf16.xpose.msra.mxu0 0
      %783 = vmatprep.subr.bf16.mxu0 0
      %784 = vmatpush1.bf16.xpose.msra.mxu0 0
      %785 = vmatprep.subr.bf16.mxu0 0
      %786 = vmatpush1.bf16.xpose.msra.mxu0 0
      %787 = vmatprep.subr.bf16.mxu0 0
      %788 = vmatpush1.bf16.xpose.msra.mxu0 0
      %789 = vmatprep.subr.bf16.mxu0 0
      %790 = vmatpush1.bf16.xpose.msra.mxu0 %v773
      %791 = vmatprep.subr.bf16.mxu0 0
      %792 = vmatpush2.bf16.xpose.msra.mxu0 0
      %793 = vmatprep.subr.bf16.mxu0 0
      %794 = vmatpush2.bf16.xpose.msra.mxu0 0
      %795 = vmatprep.subr.bf16.mxu0 0
      %796 = vmatpush2.bf16.xpose.msra.mxu0 0
      %797 = vmatprep.subr.bf16.mxu0 0
      %798 = vmatpush2.bf16.xpose.msra.mxu0 0
      %799 = vmatprep.subr.bf16.mxu0 0
      %800 = vmatpush2.bf16.xpose.msra.mxu0 0
      %801 = vmatprep.subr.bf16.mxu0 0
      %802 = vmatpush2.bf16.xpose.msra.mxu0 0
      %803 = vmatprep.subr.bf16.mxu0 0
      %804 = vmatpush2.bf16.xpose.msra.mxu0 0
      %805 = vmatprep.subr.bf16.mxu0 0
      %806 = vmatpush2.bf16.xpose.msra.mxu0 0
      %807 = vmatprep.mubr.bf16.mxu0 0
      %808 = vmatmul.mubr.bf16.gmra.mxu0 %v770
      %v809 = vpop.f32.mrf.mxu0
      %v810 = vadd.f32 0.0, %v809
      %v811 = vpop.f32.mrf.mxu0
      %v812 = vpop.f32.mrf.mxu0
      %v813 = vadd.f32 0.0, %v812
      %v814 = vpop.f32.mrf.mxu0
      %815 = vdwg.mxu0
      %v816 = vmul.f32 %v810, 0.35355338
      %v817 = vmul.f32 %v813, 0.35355338
      %v818 = vsel %vm761, %v816, -3.4028235e+38
      %v819 = vsel %vm762, %v817, -3.4028235e+38
      %vm820 = vcmask 72704
      %v821 = vsel %vm820, %v818, -inf
      %822 = vmax.xlane.f32.xlu0 %v821
      %v823 = vpop.xlane.xlu0 %822
      %vm824 = vcmask 65536
      %v825 = vsel %vm824, %v819, -inf
      %826 = vmax.xlane.f32.xlu0 %v825
      %v827 = vpop.xlane.xlu0 %826
      %v828 = vsub.f32 %v818, %v823
      %v829 = vsub.f32 %v819, %v827
      %v830 = vmul.f32 %v828, 1.442695
      %v831 = vpow.pop %v830
      %v832 = vmul.f32 %v829, 1.442695
      %v833 = vpow.pop %v832
      %v834 = vsel %vm820, %v831, 0.0
      %835 = vadd.xlane.f32.xlu0 %v834
      %v836 = vpop.xlane.xlu0 %835
      %v837 = vsel %vm824, %v833, 0.0
      %838 = vadd.xlane.f32.xlu0 %v837
      %v839 = vpop.xlane.xlu0 %838
      %v840 = vrcp.pop %v836
      %v841 = vrcp.pop %v839
      %v842 = vmul.f32 %v831, %v840
      %v843 = vmul.f32 %v833, %v841
      %v844 = vpack.c.bf16 %v843, %v842
      %845 = vrot.lane.b32.xlu0 %v764, 64
      %v846 = vpop.permute.xlu0 %845
      %v848 = vsel %vm820, %v844, 0
      %vm850 = vcmask 1043456
      %vm851 = vcmask 1044480
      %v852 = vsel %vm850, 4294967295, 65535
      %v853 = vsel %vm851, %v852, 0
      %v855 = vand.u32 %v846, %v853
      %857 = vmatprep.subr.bf16.mxu0 0
      %858 = vmatpush1.bf16.msra.mxu0 0
      %859 = vmatprep.subr.bf16.mxu0 0
      %860 = vmatpush1.bf16.msra.mxu0 0
      %861 = vmatprep.subr.bf16.mxu0 0
      %862 = vmatpush1.bf16.msra.mxu0 0
      %863 = vmatprep.subr.bf16.mxu0 0
      %864 = vmatpush1.bf16.msra.mxu0 0
      %865 = vmatprep.subr.bf16.mxu0 0
      %866 = vmatpush1.bf16.msra.mxu0 0
      %867 = vmatprep.subr.bf16.mxu0 0
      %868 = vmatpush1.bf16.msra.mxu0 0
      %869 = vmatprep.subr.bf16.mxu0 0
      %870 = vmatpush1.bf16.msra.mxu0 0
      %871 = vmatprep.subr.bf16.mxu0 0
      %872 = vmatpush1.bf16.msra.mxu0 %v855
      %873 = vmatprep.subr.bf16.mxu0 0
      %874 = vmatpush2.bf16.msra.mxu0 0
      %875 = vmatprep.subr.bf16.mxu0 0
      %876 = vmatpush2.bf16.msra.mxu0 0
      %877 = vmatprep.subr.bf16.mxu0 0
      %878 = vmatpush2.bf16.msra.mxu0 0
      %879 = vmatprep.subr.bf16.mxu0 0
      %880 = vmatpush2.bf16.msra.mxu0 0
      %881 = vmatprep.subr.bf16.mxu0 0
      %882 = vmatpush2.bf16.msra.mxu0 0
      %883 = vmatprep.subr.bf16.mxu0 0
      %884 = vmatpush2.bf16.msra.mxu0 0
      %885 = vmatprep.subr.bf16.mxu0 0
      %886 = vmatpush2.bf16.msra.mxu0 0
      %887 = vmatprep.subr.bf16.mxu0 0
      %888 = vmatpush2.bf16.msra.mxu0 0
      %889 = vmatprep.mubr.bf16.mxu0 0
      %890 = vmatmul.mubr.bf16.gmra.mxu0 %v848
      %v891 = vpop.f32.mrf.mxu0
      %v892 = vadd.f32 0.0, %v891
      %v893 = vpop.f32.mrf.mxu0
      %v894 = vpop.f32.mrf.mxu0
      %v895 = vadd.f32 0.0, %v894
      %v896 = vpop.f32.mrf.mxu0
      %897 = vdwg.mxu0
      %v898 = vpack.c.bf16 %v895, %v892
      %v899 = vld [vmem:[%s7] sm:$0xf]
      %900 = vrot.lane.b32.xlu0 %v764, 120
      %v901 = vpop.permute.xlu0 %900
      %902 = vrot.lane.b32.xlu0 %v764, 88
      %v903 = vpop.permute.xlu0 %902
      %v905 = vsel %vm768, %v901, 0
      %v908 = vsel %vm768, %v903, 0
      %910 = vmatprep.subr.bf16.mxu0 0
      %911 = vmatpush1.bf16.xpose.msra.mxu0 0
      %912 = vmatprep.subr.bf16.mxu0 0
      %913 = vmatpush1.bf16.xpose.msra.mxu0 0
      %914 = vmatprep.subr.bf16.mxu0 0
      %915 = vmatpush1.bf16.xpose.msra.mxu0 0
      %916 = vmatprep.subr.bf16.mxu0 0
      %917 = vmatpush1.bf16.xpose.msra.mxu0 0
      %918 = vmatprep.subr.bf16.mxu0 0
      %919 = vmatpush1.bf16.xpose.msra.mxu0 0
      %920 = vmatprep.subr.bf16.mxu0 0
      %921 = vmatpush1.bf16.xpose.msra.mxu0 0
      %922 = vmatprep.subr.bf16.mxu0 0
      %923 = vmatpush1.bf16.xpose.msra.mxu0 0
      %924 = vmatprep.subr.bf16.mxu0 0
      %925 = vmatpush1.bf16.xpose.msra.mxu0 %v908
      %926 = vmatprep.subr.bf16.mxu0 0
      %927 = vmatpush2.bf16.xpose.msra.mxu0 0
      %928 = vmatprep.subr.bf16.mxu0 0
      %929 = vmatpush2.bf16.xpose.msra.mxu0 0
      %930 = vmatprep.subr.bf16.mxu0 0
      %931 = vmatpush2.bf16.xpose.msra.mxu0 0
      %932 = vmatprep.subr.bf16.mxu0 0
      %933 = vmatpush2.bf16.xpose.msra.mxu0 0
      %934 = vmatprep.subr.bf16.mxu0 0
      %935 = vmatpush2.bf16.xpose.msra.mxu0 0
      %936 = vmatprep.subr.bf16.mxu0 0
      %937 = vmatpush2.bf16.xpose.msra.mxu0 0
      %938 = vmatprep.subr.bf16.mxu0 0
      %939 = vmatpush2.bf16.xpose.msra.mxu0 0
      %940 = vmatprep.subr.bf16.mxu0 0
      %941 = vmatpush2.bf16.xpose.msra.mxu0 0
      %942 = vmatprep.mubr.bf16.mxu0 0
      %943 = vmatmul.mubr.bf16.gmra.mxu0 %v905
      %v944 = vpop.f32.mrf.mxu0
      %v945 = vadd.f32 0.0, %v944
      %v946 = vpop.f32.mrf.mxu0
      %v947 = vpop.f32.mrf.mxu0
      %v948 = vadd.f32 0.0, %v947
      %v949 = vpop.f32.mrf.mxu0
      %950 = vdwg.mxu0
      %v951 = vmul.f32 %v945, 0.35355338
      %v952 = vmul.f32 %v948, 0.35355338
      %v953 = vsel %vm761, %v951, -3.4028235e+38
      %v954 = vsel %vm762, %v952, -3.4028235e+38
      %v955 = vsel %vm820, %v953, -inf
      %956 = vmax.xlane.f32.xlu0 %v955
      %v957 = vpop.xlane.xlu0 %956
      %v958 = vsel %vm824, %v954, -inf
      %959 = vmax.xlane.f32.xlu0 %v958
      %v960 = vpop.xlane.xlu0 %959
      %v961 = vsub.f32 %v953, %v957
      %v962 = vsub.f32 %v954, %v960
      %v963 = vmul.f32 %v961, 1.442695
      %v964 = vpow.pop %v963
      %v965 = vmul.f32 %v962, 1.442695
      %v966 = vpow.pop %v965
      %v967 = vsel %vm820, %v964, 0.0
      %968 = vadd.xlane.f32.xlu0 %v967
      %v969 = vpop.xlane.xlu0 %968
      %v970 = vsel %vm824, %v966, 0.0
      %971 = vadd.xlane.f32.xlu0 %v970
      %v972 = vpop.xlane.xlu0 %971
      %v973 = vrcp.pop %v969
      %v974 = vrcp.pop %v972
      %v975 = vmul.f32 %v964, %v973
      %v976 = vmul.f32 %v966, %v974
      %v977 = vpack.c.bf16 %v976, %v975
      %978 = vrot.lane.b32.xlu0 %v764, 56
      %v979 = vpop.permute.xlu0 %978
      %v981 = vsel %vm820, %v977, 0
      %v984 = vand.u32 %v979, %v853
      %986 = vmatprep.subr.bf16.mxu0 0
      %987 = vmatpush1.bf16.msra.mxu0 0
      %988 = vmatprep.subr.bf16.mxu0 0
      %989 = vmatpush1.bf16.msra.mxu0 0
      %990 = vmatprep.subr.bf16.mxu0 0
      %991 = vmatpush1.bf16.msra.mxu0 0
      %992 = vmatprep.subr.bf16.mxu0 0
      %993 = vmatpush1.bf16.msra.mxu0 0
      %994 = vmatprep.subr.bf16.mxu0 0
      %995 = vmatpush1.bf16.msra.mxu0 0
      %996 = vmatprep.subr.bf16.mxu0 0
      %997 = vmatpush1.bf16.msra.mxu0 0
      %998 = vmatprep.subr.bf16.mxu0 0
      %999 = vmatpush1.bf16.msra.mxu0 0
      %1000 = vmatprep.subr.bf16.mxu0 0
      %1001 = vmatpush1.bf16.msra.mxu0 %v984
      %1002 = vmatprep.subr.bf16.mxu0 0
      %1003 = vmatpush2.bf16.msra.mxu0 0
      %1004 = vmatprep.subr.bf16.mxu0 0
      %1005 = vmatpush2.bf16.msra.mxu0 0
      %1006 = vmatprep.subr.bf16.mxu0 0
      %1007 = vmatpush2.bf16.msra.mxu0 0
      %1008 = vmatprep.subr.bf16.mxu0 0
      %1009 = vmatpush2.bf16.msra.mxu0 0
      %1010 = vmatprep.subr.bf16.mxu0 0
      %1011 = vmatpush2.bf16.msra.mxu0 0
      %1012 = vmatprep.subr.bf16.mxu0 0
      %1013 = vmatpush2.bf16.msra.mxu0 0
      %1014 = vmatprep.subr.bf16.mxu0 0
      %1015 = vmatpush2.bf16.msra.mxu0 0
      %1016 = vmatprep.subr.bf16.mxu0 0
      %1017 = vmatpush2.bf16.msra.mxu0 0
      %1018 = vmatprep.mubr.bf16.mxu0 0
      %1019 = vmatmul.mubr.bf16.gmra.mxu0 %v981
      %v1020 = vpop.f32.mrf.mxu0
      %v1021 = vadd.f32 0.0, %v1020
      %v1022 = vpop.f32.mrf.mxu0
      %v1023 = vpop.f32.mrf.mxu0
      %v1024 = vadd.f32 0.0, %v1023
      %v1025 = vpop.f32.mrf.mxu0
      %1026 = vdwg.mxu0
      %v1027 = vpack.c.bf16 %v1024, %v1021
      %s1028 = scalar_lea.vmem %s7, 4
      %v1029 = vld [vmem:[%s1028] sm:$0xf]
      %v1031 = vsel %vm768, %v1027, 0
      %v1034 = vsel %vm850, %v1029, 0
      %1036 = vmatprep.subr.bf16.mxu0 0
      %1037 = vmatpush1.bf16.msra.mxu0 0
      %1038 = vmatprep.subr.bf16.mxu0 0
      %1039 = vmatpush1.bf16.msra.mxu0 0
      %1040 = vmatprep.subr.bf16.mxu0 0
      %1041 = vmatpush1.bf16.msra.mxu0 0
      %1042 = vmatprep.subr.bf16.mxu0 0
      %1043 = vmatpush1.bf16.msra.mxu0 0
      %1044 = vmatprep.subr.bf16.mxu0 0
      %1045 = vmatpush1.bf16.msra.mxu0 0
      %1046 = vmatprep.subr.bf16.mxu0 0
      %1047 = vmatpush1.bf16.msra.mxu0 0
      %1048 = vmatprep.subr.bf16.mxu0 0
      %1049 = vmatpush1.bf16.msra.mxu0 0
      %1050 = vmatprep.subr.bf16.mxu0 0
      %1051 = vmatpush1.bf16.msra.mxu0 %v1034
      %1052 = vmatprep.subr.bf16.mxu0 0
      %1053 = vmatpush2.bf16.msra.mxu0 0
      %1054 = vmatprep.subr.bf16.mxu0 0
      %1055 = vmatpush2.bf16.msra.mxu0 0
      %1056 = vmatprep.subr.bf16.mxu0 0
      %1057 = vmatpush2.bf16.msra.mxu0 0
      %1058 = vmatprep.subr.bf16.mxu0 0
      %1059 = vmatpush2.bf16.msra.mxu0 0
      %1060 = vmatprep.subr.bf16.mxu0 0
      %1061 = vmatpush2.bf16.msra.mxu0 0
      %1062 = vmatprep.subr.bf16.mxu0 0
      %1063 = vmatpush2.bf16.msra.mxu0 0
      %1064 = vmatprep.subr.bf16.mxu0 0
      %1065 = vmatpush2.bf16.msra.mxu0 0
      %1066 = vmatprep.subr.bf16.mxu0 0
      %1067 = vmatpush2.bf16.msra.mxu0 0
      %1068 = vmatprep.mubr.bf16.mxu0 0
      %1069 = vmatmul.mubr.bf16.gmra.mxu0 %v1031
      %v1070 = vpop.f32.mrf.mxu0
      %v1071 = vadd.f32 0.0, %v1070
      %v1072 = vpop.f32.mrf.mxu0
      %v1073 = vpop.f32.mrf.mxu0
      %v1074 = vadd.f32 0.0, %v1073
      %v1075 = vpop.f32.mrf.mxu0
      %1076 = vdwg.mxu0
      %v1078 = vsel %vm768, %v898, 0
      %v1081 = vsel %vm850, %v899, 0
      %1083 = vmatprep.subr.bf16.mxu0 0
      %1084 = vmatpush1.bf16.msra.mxu0 0
      %1085 = vmatprep.subr.bf16.mxu0 0
      %1086 = vmatpush1.bf16.msra.mxu0 0
      %1087 = vmatprep.subr.bf16.mxu0 0
      %1088 = vmatpush1.bf16.msra.mxu0 0
      %1089 = vmatprep.subr.bf16.mxu0 0
      %1090 = vmatpush1.bf16.msra.mxu0 0
      %1091 = vmatprep.subr.bf16.mxu0 0
      %1092 = vmatpush1.bf16.msra.mxu0 0
      %1093 = vmatprep.subr.bf16.mxu0 0
      %1094 = vmatpush1.bf16.msra.mxu0 0
      %1095 = vmatprep.subr.bf16.mxu0 0
      %1096 = vmatpush1.bf16.msra.mxu0 0
      %1097 = vmatprep.subr.bf16.mxu0 0
      %1098 = vmatpush1.bf16.msra.mxu0 %v1081
      %1099 = vmatprep.subr.bf16.mxu0 0
      %1100 = vmatpush2.bf16.msra.mxu0 0
      %1101 = vmatprep.subr.bf16.mxu0 0
      %1102 = vmatpush2.bf16.msra.mxu0 0
      %1103 = vmatprep.subr.bf16.mxu0 0
      %1104 = vmatpush2.bf16.msra.mxu0 0
      %1105 = vmatprep.subr.bf16.mxu0 0
      %1106 = vmatpush2.bf16.msra.mxu0 0
      %1107 = vmatprep.subr.bf16.mxu0 0
      %1108 = vmatpush2.bf16.msra.mxu0 0
      %1109 = vmatprep.subr.bf16.mxu0 0
      %1110 = vmatpush2.bf16.msra.mxu0 0
      %1111 = vmatprep.subr.bf16.mxu0 0
      %1112 = vmatpush2.bf16.msra.mxu0 0
      %1113 = vmatprep.subr.bf16.mxu0 0
      %1114 = vmatpush2.bf16.msra.mxu0 0
      %1115 = vmatprep.mubr.bf16.mxu0 0
      %1116 = vmatmul.mubr.bf16.gmra.mxu0 %v1078
      %v1117 = vpop.f32.mrf.mxu0
      %v1118 = vadd.f32 %v1071, %v1117
      %v1119 = vpop.f32.mrf.mxu0
      %v1120 = vpop.f32.mrf.mxu0
      %v1121 = vadd.f32 %v1074, %v1120
      %v1122 = vpop.f32.mrf.mxu0
      %1123 = vdwg.mxu0
      %1124 = vrot.lane.b32.xlu0 %v764, 112
      %v1125 = vpop.permute.xlu0 %1124
      %1126 = vrot.lane.b32.xlu0 %v764, 80
      %v1127 = vpop.permute.xlu0 %1126
      %v1129 = vsel %vm768, %v1125, 0
      %v1132 = vsel %vm768, %v1127, 0
      %1134 = vmatprep.subr.bf16.mxu0 0
      %1135 = vmatpush1.bf16.xpose.msra.mxu0 0
      %1136 = vmatprep.subr.bf16.mxu0 0
      %1137 = vmatpush1.bf16.xpose.msra.mxu0 0
      %1138 = vmatprep.subr.bf16.mxu0 0
      %1139 = vmatpush1.bf16.xpose.msra.mxu0 0
      %1140 = vmatprep.subr.bf16.mxu0 0
      %1141 = vmatpush1.bf16.xpose.msra.mxu0 0
      %1142 = vmatprep.subr.bf16.mxu0 0
      %1143 = vmatpush1.bf16.xpose.msra.mxu0 0
      %1144 = vmatprep.subr.bf16.mxu0 0
      %1145 = vmatpush1.bf16.xpose.msra.mxu0 0
      %1146 = vmatprep.subr.bf16.mxu0 0
      %1147 = vmatpush1.bf16.xpose.msra.mxu0 0
      %1148 = vmatprep.subr.bf16.mxu0 0
      %1149 = vmatpush1.bf16.xpose.msra.mxu0 %v1132
      %1150 = vmatprep.subr.bf16.mxu0 0
      %1151 = vmatpush2.bf16.xpose.msra.mxu0 0
      %1152 = vmatprep.subr.bf16.mxu0 0
      %1153 = vmatpush2.bf16.xpose.msra.mxu0 0
      %1154 = vmatprep.subr.bf16.mxu0 0
      %1155 = vmatpush2.bf16.xpose.msra.mxu0 0
      %1156 = vmatprep.subr.bf16.mxu0 0
      %1157 = vmatpush2.bf16.xpose.msra.mxu0 0
      %1158 = vmatprep.subr.bf16.mxu0 0
      %1159 = vmatpush2.bf16.xpose.msra.mxu0 0
      %1160 = vmatprep.subr.bf16.mxu0 0
      %1161 = vmatpush2.bf16.xpose.msra.mxu0 0
      %1162 = vmatprep.subr.bf16.mxu0 0
      %1163 = vmatpush2.bf16.xpose.msra.mxu0 0
      %1164 = vmatprep.subr.bf16.mxu0 0
      %1165 = vmatpush2.bf16.xpose.msra.mxu0 0
      %1166 = vmatprep.mubr.bf16.mxu0 0
      %1167 = vmatmul.mubr.bf16.gmra.mxu0 %v1129
      %v1168 = vpop.f32.mrf.mxu0
      %v1169 = vadd.f32 0.0, %v1168
      %v1170 = vpop.f32.mrf.mxu0
      %v1171 = vpop.f32.mrf.mxu0
      %v1172 = vadd.f32 0.0, %v1171
      %v1173 = vpop.f32.mrf.mxu0
      %1174 = vdwg.mxu0
      %v1175 = vmul.f32 %v1169, 0.35355338
      %v1176 = vmul.f32 %v1172, 0.35355338
      %v1177 = vsel %vm761, %v1175, -3.4028235e+38
      %v1178 = vsel %vm762, %v1176, -3.4028235e+38
      %v1179 = vsel %vm820, %v1177, -inf
      %1180 = vmax.xlane.f32.xlu0 %v1179
      %v1181 = vpop.xlane.xlu0 %1180
      %v1182 = vsel %vm824, %v1178, -inf
      %1183 = vmax.xlane.f32.xlu0 %v1182
      %v1184 = vpop.xlane.xlu0 %1183
      %v1185 = vsub.f32 %v1177, %v1181
      %v1186 = vsub.f32 %v1178, %v1184
      %v1187 = vmul.f32 %v1185, 1.442695
      %v1188 = vpow.pop %v1187
      %v1189 = vmul.f32 %v1186, 1.442695
      %v1190 = vpow.pop %v1189
      %v1191 = vsel %vm820, %v1188, 0.0
      %1192 = vadd.xlane.f32.xlu0 %v1191
      %v1193 = vpop.xlane.xlu0 %1192
      %v1194 = vsel %vm824, %v1190, 0.0
      %1195 = vadd.xlane.f32.xlu0 %v1194
      %v1196 = vpop.xlane.xlu0 %1195
      %v1197 = vrcp.pop %v1193
      %v1198 = vrcp.pop %v1196
      %v1199 = vmul.f32 %v1188, %v1197
      %v1200 = vmul.f32 %v1190, %v1198
      %v1201 = vpack.c.bf16 %v1200, %v1199
      %1202 = vrot.lane.b32.xlu0 %v764, 48
      %v1203 = vpop.permute.xlu0 %1202
      %v1205 = vsel %vm820, %v1201, 0
      %v1208 = vand.u32 %v1203, %v853
      %1210 = vmatprep.subr.bf16.mxu0 0
      %1211 = vmatpush1.bf16.msra.mxu0 0
      %1212 = vmatprep.subr.bf16.mxu0 0
      %1213 = vmatpush1.bf16.msra.mxu0 0
      %1214 = vmatprep.subr.bf16.mxu0 0
      %1215 = vmatpush1.bf16.msra.mxu0 0
      %1216 = vmatprep.subr.bf16.mxu0 0
      %1217 = vmatpush1.bf16.msra.mxu0 0
      %1218 = vmatprep.subr.bf16.mxu0 0
      %1219 = vmatpush1.bf16.msra.mxu0 0
      %1220 = vmatprep.subr.bf16.mxu0 0
      %1221 = vmatpush1.bf16.msra.mxu0 0
      %1222 = vmatprep.subr.bf16.mxu0 0
      %1223 = vmatpush1.bf16.msra.mxu0 0
      %1224 = vmatprep.subr.bf16.mxu0 0
      %1225 = vmatpush1.bf16.msra.mxu0 %v1208
      %1226 = vmatprep.subr.bf16.mxu0 0
      %1227 = vmatpush2.bf16.msra.mxu0 0
      %1228 = vmatprep.subr.bf16.mxu0 0
      %1229 = vmatpush2.bf16.msra.mxu0 0
      %1230 = vmatprep.subr.bf16.mxu0 0
      %1231 = vmatpush2.bf16.msra.mxu0 0
      %1232 = vmatprep.subr.bf16.mxu0 0
      %1233 = vmatpush2.bf16.msra.mxu0 0
      %1234 = vmatprep.subr.bf16.mxu0 0
      %1235 = vmatpush2.bf16.msra.mxu0 0
      %1236 = vmatprep.subr.bf16.mxu0 0
      %1237 = vmatpush2.bf16.msra.mxu0 0
      %1238 = vmatprep.subr.bf16.mxu0 0
      %1239 = vmatpush2.bf16.msra.mxu0 0
      %1240 = vmatprep.subr.bf16.mxu0 0
      %1241 = vmatpush2.bf16.msra.mxu0 0
      %1242 = vmatprep.mubr.bf16.mxu0 0
      %1243 = vmatmul.mubr.bf16.gmra.mxu0 %v1205
      %v1244 = vpop.f32.mrf.mxu0
      %v1245 = vadd.f32 0.0, %v1244
      %v1246 = vpop.f32.mrf.mxu0
      %v1247 = vpop.f32.mrf.mxu0
      %v1248 = vadd.f32 0.0, %v1247
      %v1249 = vpop.f32.mrf.mxu0
      %1250 = vdwg.mxu0
      %v1251 = vpack.c.bf16 %v1248, %v1245
      %s1252 = scalar_lea.vmem %s7, 8
      %v1253 = vld [vmem:[%s1252] sm:$0xf]
      %v1255 = vsel %vm768, %v1251, 0
      %v1258 = vsel %vm850, %v1253, 0
      %1260 = vmatprep.subr.bf16.mxu0 0
      %1261 = vmatpush1.bf16.msra.mxu0 0
      %1262 = vmatprep.subr.bf16.mxu0 0
      %1263 = vmatpush1.bf16.msra.mxu0 0
      %1264 = vmatprep.subr.bf16.mxu0 0
      %1265 = vmatpush1.bf16.msra.mxu0 0
      %1266 = vmatprep.subr.bf16.mxu0 0
      %1267 = vmatpush1.bf16.msra.mxu0 0
      %1268 = vmatprep.subr.bf16.mxu0 0
      %1269 = vmatpush1.bf16.msra.mxu0 0
      %1270 = vmatprep.subr.bf16.mxu0 0
      %1271 = vmatpush1.bf16.msra.mxu0 0
      %1272 = vmatprep.subr.bf16.mxu0 0
      %1273 = vmatpush1.bf16.msra.mxu0 0
      %1274 = vmatprep.subr.bf16.mxu0 0
      %1275 = vmatpush1.bf16.msra.mxu0 %v1258
      %1276 = vmatprep.subr.bf16.mxu0 0
      %1277 = vmatpush2.bf16.msra.mxu0 0
      %1278 = vmatprep.subr.bf16.mxu0 0
      %1279 = vmatpush2.bf16.msra.mxu0 0
      %1280 = vmatprep.subr.bf16.mxu0 0
      %1281 = vmatpush2.bf16.msra.mxu0 0
      %1282 = vmatprep.subr.bf16.mxu0 0
      %1283 = vmatpush2.bf16.msra.mxu0 0
      %1284 = vmatprep.subr.bf16.mxu0 0
      %1285 = vmatpush2.bf16.msra.mxu0 0
      %1286 = vmatprep.subr.bf16.mxu0 0
      %1287 = vmatpush2.bf16.msra.mxu0 0
      %1288 = vmatprep.subr.bf16.mxu0 0
      %1289 = vmatpush2.bf16.msra.mxu0 0
      %1290 = vmatprep.subr.bf16.mxu0 0
      %1291 = vmatpush2.bf16.msra.mxu0 0
      %1292 = vmatprep.mubr.bf16.mxu0 0
      %1293 = vmatmul.mubr.bf16.gmra.mxu0 %v1255
      %v1294 = vpop.f32.mrf.mxu0
      %v1295 = vadd.f32 0.0, %v1294
      %v1296 = vpop.f32.mrf.mxu0
      %v1297 = vpop.f32.mrf.mxu0
      %v1298 = vadd.f32 0.0, %v1297
      %v1299 = vpop.f32.mrf.mxu0
      %1300 = vdwg.mxu0
      %v1301 = vadd.f32 %v1118, %v1295
      %v1302 = vadd.f32 %v1121, %v1298
      %1303 = vrot.lane.b32.xlu0 %v764, 104
      %v1304 = vpop.permute.xlu0 %1303
      %1305 = vrot.lane.b32.xlu0 %v764, 72
      %v1306 = vpop.permute.xlu0 %1305
      %v1308 = vsel %vm768, %v1304, 0
      %v1311 = vsel %vm768, %v1306, 0
      %1313 = vmatprep.subr.bf16.mxu0 0
      %1314 = vmatpush1.bf16.xpose.msra.mxu0 0
      %1315 = vmatprep.subr.bf16.mxu0 0
      %1316 = vmatpush1.bf16.xpose.msra.mxu0 0
      %1317 = vmatprep.subr.bf16.mxu0 0
      %1318 = vmatpush1.bf16.xpose.msra.mxu0 0
      %1319 = vmatprep.subr.bf16.mxu0 0
      %1320 = vmatpush1.bf16.xpose.msra.mxu0 0
      %1321 = vmatprep.subr.bf16.mxu0 0
      %1322 = vmatpush1.bf16.xpose.msra.mxu0 0
      %1323 = vmatprep.subr.bf16.mxu0 0
      %1324 = vmatpush1.bf16.xpose.msra.mxu0 0
      %1325 = vmatprep.subr.bf16.mxu0 0
      %1326 = vmatpush1.bf16.xpose.msra.mxu0 0
      %1327 = vmatprep.subr.bf16.mxu0 0
      %1328 = vmatpush1.bf16.xpose.msra.mxu0 %v1311
      %1329 = vmatprep.subr.bf16.mxu0 0
      %1330 = vmatpush2.bf16.xpose.msra.mxu0 0
      %1331 = vmatprep.subr.bf16.mxu0 0
      %1332 = vmatpush2.bf16.xpose.msra.mxu0 0
      %1333 = vmatprep.subr.bf16.mxu0 0
      %1334 = vmatpush2.bf16.xpose.msra.mxu0 0
      %1335 = vmatprep.subr.bf16.mxu0 0
      %1336 = vmatpush2.bf16.xpose.msra.mxu0 0
      %1337 = vmatprep.subr.bf16.mxu0 0
      %1338 = vmatpush2.bf16.xpose.msra.mxu0 0
      %1339 = vmatprep.subr.bf16.mxu0 0
      %1340 = vmatpush2.bf16.xpose.msra.mxu0 0
      %1341 = vmatprep.subr.bf16.mxu0 0
      %1342 = vmatpush2.bf16.xpose.msra.mxu0 0
      %1343 = vmatprep.subr.bf16.mxu0 0
      %1344 = vmatpush2.bf16.xpose.msra.mxu0 0
      %1345 = vmatprep.mubr.bf16.mxu0 0
      %1346 = vmatmul.mubr.bf16.gmra.mxu0 %v1308
      %v1347 = vpop.f32.mrf.mxu0
      %v1348 = vadd.f32 0.0, %v1347
      %v1349 = vpop.f32.mrf.mxu0
      %v1350 = vpop.f32.mrf.mxu0
      %v1351 = vadd.f32 0.0, %v1350
      %v1352 = vpop.f32.mrf.mxu0
      %1353 = vdwg.mxu0
      %v1354 = vmul.f32 %v1348, 0.35355338
      %v1355 = vmul.f32 %v1351, 0.35355338
      %v1356 = vsel %vm761, %v1354, -3.4028235e+38
      %v1357 = vsel %vm762, %v1355, -3.4028235e+38
      %v1358 = vsel %vm820, %v1356, -inf
      %1359 = vmax.xlane.f32.xlu0 %v1358
      %v1360 = vpop.xlane.xlu0 %1359
      %v1361 = vsel %vm824, %v1357, -inf
      %1362 = vmax.xlane.f32.xlu0 %v1361
      %v1363 = vpop.xlane.xlu0 %1362
      %v1364 = vsub.f32 %v1356, %v1360
      %v1365 = vsub.f32 %v1357, %v1363
      %v1366 = vmul.f32 %v1364, 1.442695
      %v1367 = vpow.pop %v1366
      %v1368 = vmul.f32 %v1365, 1.442695
      %v1369 = vpow.pop %v1368
      %v1370 = vsel %vm820, %v1367, 0.0
      %1371 = vadd.xlane.f32.xlu0 %v1370
      %v1372 = vpop.xlane.xlu0 %1371
      %v1373 = vsel %vm824, %v1369, 0.0
      %1374 = vadd.xlane.f32.xlu0 %v1373
      %v1375 = vpop.xlane.xlu0 %1374
      %v1376 = vrcp.pop %v1372
      %v1377 = vrcp.pop %v1375
      %v1378 = vmul.f32 %v1367, %v1376
      %v1379 = vmul.f32 %v1369, %v1377
      %v1380 = vpack.c.bf16 %v1379, %v1378
      %1381 = vrot.lane.b32.xlu0 %v764, 40
      %v1382 = vpop.permute.xlu0 %1381
      %v1384 = vsel %vm820, %v1380, 0
      %v1387 = vand.u32 %v1382, %v853
      %1389 = vmatprep.subr.bf16.mxu0 0
      %1390 = vmatpush1.bf16.msra.mxu0 0
      %1391 = vmatprep.subr.bf16.mxu0 0
      %1392 = vmatpush1.bf16.msra.mxu0 0
      %1393 = vmatprep.subr.bf16.mxu0 0
      %1394 = vmatpush1.bf16.msra.mxu0 0
      %1395 = vmatprep.subr.bf16.mxu0 0
      %1396 = vmatpush1.bf16.msra.mxu0 0
      %1397 = vmatprep.subr.bf16.mxu0 0
      %1398 = vmatpush1.bf16.msra.mxu0 0
      %1399 = vmatprep.subr.bf16.mxu0 0
      %1400 = vmatpush1.bf16.msra.mxu0 0
      %1401 = vmatprep.subr.bf16.mxu0 0
      %1402 = vmatpush1.bf16.msra.mxu0 0
      %1403 = vmatprep.subr.bf16.mxu0 0
      %1404 = vmatpush1.bf16.msra.mxu0 %v1387
      %1405 = vmatprep.subr.bf16.mxu0 0
      %1406 = vmatpush2.bf16.msra.mxu0 0
      %1407 = vmatprep.subr.bf16.mxu0 0
      %1408 = vmatpush2.bf16.msra.mxu0 0
      %1409 = vmatprep.subr.bf16.mxu0 0
      %1410 = vmatpush2.bf16.msra.mxu0 0
      %1411 = vmatprep.subr.bf16.mxu0 0
      %1412 = vmatpush2.bf16.msra.mxu0 0
      %1413 = vmatprep.subr.bf16.mxu0 0
      %1414 = vmatpush2.bf16.msra.mxu0 0
      %1415 = vmatprep.subr.bf16.mxu0 0
      %1416 = vmatpush2.bf16.msra.mxu0 0
      %1417 = vmatprep.subr.bf16.mxu0 0
      %1418 = vmatpush2.bf16.msra.mxu0 0
      %1419 = vmatprep.subr.bf16.mxu0 0
      %1420 = vmatpush2.bf16.msra.mxu0 0
      %1421 = vmatprep.mubr.bf16.mxu0 0
      %1422 = vmatmul.mubr.bf16.gmra.mxu0 %v1384
      %v1423 = vpop.f32.mrf.mxu0
      %v1424 = vadd.f32 0.0, %v1423
      %v1425 = vpop.f32.mrf.mxu0
      %v1426 = vpop.f32.mrf.mxu0
      %v1427 = vadd.f32 0.0, %v1426
      %v1428 = vpop.f32.mrf.mxu0
      %1429 = vdwg.mxu0
      %v1430 = vpack.c.bf16 %v1427, %v1424
      %s1431 = scalar_lea.vmem %s7, 12
      %v1432 = vld [vmem:[%s1431] sm:$0xf]
      %v1434 = vsel %vm768, %v1430, 0
      %v1437 = vsel %vm850, %v1432, 0
      %1439 = vmatprep.subr.bf16.mxu0 0
      %1440 = vmatpush1.bf16.msra.mxu0 0
      %1441 = vmatprep.subr.bf16.mxu0 0
      %1442 = vmatpush1.bf16.msra.mxu0 0
      %1443 = vmatprep.subr.bf16.mxu0 0
      %1444 = vmatpush1.bf16.msra.mxu0 0
      %1445 = vmatprep.subr.bf16.mxu0 0
      %1446 = vmatpush1.bf16.msra.mxu0 0
      %1447 = vmatprep.subr.bf16.mxu0 0
      %1448 = vmatpush1.bf16.msra.mxu0 0
      %1449 = vmatprep.subr.bf16.mxu0 0
      %1450 = vmatpush1.bf16.msra.mxu0 0
      %1451 = vmatprep.subr.bf16.mxu0 0
      %1452 = vmatpush1.bf16.msra.mxu0 0
      %1453 = vmatprep.subr.bf16.mxu0 0
      %1454 = vmatpush1.bf16.msra.mxu0 %v1437
      %1455 = vmatprep.subr.bf16.mxu0 0
      %1456 = vmatpush2.bf16.msra.mxu0 0
      %1457 = vmatprep.subr.bf16.mxu0 0
      %1458 = vmatpush2.bf16.msra.mxu0 0
      %1459 = vmatprep.subr.bf16.mxu0 0
      %1460 = vmatpush2.bf16.msra.mxu0 0
      %1461 = vmatprep.subr.bf16.mxu0 0
      %1462 = vmatpush2.bf16.msra.mxu0 0
      %1463 = vmatprep.subr.bf16.mxu0 0
      %1464 = vmatpush2.bf16.msra.mxu0 0
      %1465 = vmatprep.subr.bf16.mxu0 0
      %1466 = vmatpush2.bf16.msra.mxu0 0
      %1467 = vmatprep.subr.bf16.mxu0 0
      %1468 = vmatpush2.bf16.msra.mxu0 0
      %1469 = vmatprep.subr.bf16.mxu0 0
      %1470 = vmatpush2.bf16.msra.mxu0 0
      %1471 = vmatprep.mubr.bf16.mxu0 0
      %1472 = vmatmul.mubr.bf16.gmra.mxu0 %v1434
      %v1473 = vpop.f32.mrf.mxu0
      %v1474 = vadd.f32 0.0, %v1473
      %v1475 = vpop.f32.mrf.mxu0
      %v1476 = vpop.f32.mrf.mxu0
      %v1477 = vadd.f32 0.0, %v1476
      %v1478 = vpop.f32.mrf.mxu0
      %1479 = vdwg.mxu0
      %v1480 = vadd.f32 %v1301, %v1474
      %v1481 = vadd.f32 %v1302, %v1477
      %v1483 = vlaneseq
      %v1484 = vshrl.u32 %v1483, 7
      %v1485 = vsub.s32 0, %v1484
      %v1486 = vrot.slane %v763, %v1485
      %v1488 = vadd.f32 %v1480, %v1486
      %v1489 = vadd.f32 %v1481, %v1486
      %v1490 = vadd.f32 %v640, %v1488
      %v1491 = vadd.f32 %v641, %v1489
      %v1492 = vld [vmem:[%s9] sm:$0x1]
      %v1493 = vld [vmem:[%s10] sm:$0x1]
      %v1494 = vsel %vm646, %v1490, 0.0
      %1495 = vadd.xlane.f32.xlu0 %v1494
      %v1496 = vpop.xlane.xlu0 %1495
      %v1497 = vsel %vm650, %v1491, 0.0
      %1498 = vadd.xlane.f32.xlu0 %v1497
      %v1499 = vpop.xlane.xlu0 %1498
      %v1500 = vmul.f32 %v1496, %v654
      %v1501 = vmul.f32 %v1499, %v654
      %v1502 = vsub.f32 %v1490, %v1500
      %v1503 = vsub.f32 %v1491, %v1501
      %v1504 = vmul.f32 %v1502, %v1502
      %v1505 = vmul.f32 %v1503, %v1503
      %v1506 = vsel %vm646, %v1504, 0.0
      %1507 = vadd.xlane.f32.xlu0 %v1506
      %v1508 = vpop.xlane.xlu0 %1507
      %v1509 = vsel %vm650, %v1505, 0.0
      %1510 = vadd.xlane.f32.xlu0 %v1509
      %v1511 = vpop.xlane.xlu0 %1510
      %v1512 = vmul.f32 %v1508, %v654
      %v1513 = vmul.f32 %v1511, %v654
      %v1514 = vadd.f32 %v1512, 1e-06
      %v1515 = vadd.f32 %v1513, 1e-06
      %v1516 = vrsqrt.pop %v1514
      %v1517 = vrsqrt.pop %v1515
      %v1518 = vmul.f32 %v1502, %v1516
      %v1519 = vmul.f32 %v1503, %v1517
      %v1521 = vlaneseq
      %v1522 = vshrl.u32 %v1521, 7
      %v1523 = vsub.s32 0, %v1522
      %v1524 = vrot.slane %v1492, %v1523
      %v1526 = vmul.f32 %v1518, %v1524
      %v1527 = vmul.f32 %v1519, %v1524
      %v1529 = vlaneseq
      %v1530 = vshrl.u32 %v1529, 7
      %v1531 = vsub.s32 0, %v1530
      %v1532 = vrot.slane %v1493, %v1531
      %v1534 = vadd.f32 %v1526, %v1532
      %v1535 = vadd.f32 %v1527, %v1532
      %v1536 = vpack.c.bf16 %v1535, %v1534
      %v1537 = vld [vmem:[%s11] sm:$0xf]
      %v1538 = vld [vmem:[%s11 + $0x4] sm:$0xf]
      %v1539 = vld [vmem:[%s11 + $0x8] sm:$0xf]
      %v1540 = vld [vmem:[%s11 + $0xc] sm:$0xf]
      %v1545 = vunpack.c.l.b16 %v1537
      %v1546 = vunpack.c.l.b16 %v1538
      %v1547 = vunpack.c.l.b16 %v1539
      %v1548 = vunpack.c.l.b16 %v1540
      %v1549 = vpack.c.b16 %v1546, %v1545
      %v1550 = vpack.c.b16 %v1548, %v1547
      %v1554 = vsel %vm646, %v1536, 0
      %1556 = vmatprep.subr.bf16.mxu0 0
      %1557 = vmatpush1.bf16.msra.mxu0 0
      %1558 = vmatprep.subr.bf16.mxu0 0
      %1559 = vmatpush1.bf16.msra.mxu0 0
      %1560 = vmatprep.subr.bf16.mxu0 0
      %1561 = vmatpush1.bf16.msra.mxu0 0
      %1562 = vmatprep.subr.bf16.mxu0 0
      %1563 = vmatpush1.bf16.msra.mxu0 0
      %1564 = vmatprep.subr.bf16.mxu0 0
      %1565 = vmatpush1.bf16.msra.mxu0 0
      %1566 = vmatprep.subr.bf16.mxu0 0
      %1567 = vmatpush1.bf16.msra.mxu0 0
      %1568 = vmatprep.subr.bf16.mxu0 0
      %1569 = vmatpush1.bf16.msra.mxu0 %v1550
      %1570 = vmatprep.subr.bf16.mxu0 0
      %1571 = vmatpush1.bf16.msra.mxu0 %v1549
      %1572 = vmatprep.subr.bf16.mxu0 0
      %1573 = vmatpush2.bf16.msra.mxu0 0
      %1574 = vmatprep.subr.bf16.mxu0 0
      %1575 = vmatpush2.bf16.msra.mxu0 0
      %1576 = vmatprep.subr.bf16.mxu0 0
      %1577 = vmatpush2.bf16.msra.mxu0 0
      %1578 = vmatprep.subr.bf16.mxu0 0
      %1579 = vmatpush2.bf16.msra.mxu0 0
      %1580 = vmatprep.subr.bf16.mxu0 0
      %1581 = vmatpush2.bf16.msra.mxu0 0
      %1582 = vmatprep.subr.bf16.mxu0 0
      %1583 = vmatpush2.bf16.msra.mxu0 0
      %1584 = vmatprep.subr.bf16.mxu0 0
      %1585 = vmatpush2.bf16.msra.mxu0 0
      %1586 = vmatprep.subr.bf16.mxu0 0
      %1587 = vmatpush2.bf16.msra.mxu0 0
      %1588 = vmatprep.mubr.bf16.mxu0 0
      %1589 = vmatmul.mubr.bf16.gmra.mxu0 %v1554
      %v1590 = vpop.f32.mrf.mxu0
      %v1591 = vadd.f32 0.0, %v1590
      %v1592 = vpop.f32.mrf.mxu0
      %v1593 = vpop.f32.mrf.mxu0
      %v1594 = vadd.f32 0.0, %v1593
      %v1595 = vpop.f32.mrf.mxu0
      %1596 = vdwg.mxu0
      %v1597 = vld [vmem:[%s12] sm:$0xf]
      %v1598 = vld [vmem:[%s12 + $0x4] sm:$0xf]
      %v1599 = vld [vmem:[%s12 + $0x8] sm:$0xf]
      %v1600 = vld [vmem:[%s12 + $0xc] sm:$0xf]
      %v1603 = vunpack.c.l.b16 %v642
      %v1604 = vunpack.c.l.b16 %v643
      %v1605 = vpack.c.b16 %v1604, %v1603
      %v1610 = vunpack.c.l.b16 %v1597
      %v1611 = vunpack.c.l.b16 %v1598
      %v1612 = vunpack.c.l.b16 %v1599
      %v1613 = vunpack.c.l.b16 %v1600
      %v1614 = vpack.c.b16 %v1611, %v1610
      %v1615 = vpack.c.b16 %v1613, %v1612
      %v1619 = vsel %vm646, %v1605, 0
      %1621 = vmatprep.subr.bf16.mxu0 0
      %1622 = vmatpush1.bf16.msra.mxu0 0
      %1623 = vmatprep.subr.bf16.mxu0 0
      %1624 = vmatpush1.bf16.msra.mxu0 0
      %1625 = vmatprep.subr.bf16.mxu0 0
      %1626 = vmatpush1.bf16.msra.mxu0 0
      %1627 = vmatprep.subr.bf16.mxu0 0
      %1628 = vmatpush1.bf16.msra.mxu0 0
      %1629 = vmatprep.subr.bf16.mxu0 0
      %1630 = vmatpush1.bf16.msra.mxu0 0
      %1631 = vmatprep.subr.bf16.mxu0 0
      %1632 = vmatpush1.bf16.msra.mxu0 0
      %1633 = vmatprep.subr.bf16.mxu0 0
      %1634 = vmatpush1.bf16.msra.mxu0 %v1615
      %1635 = vmatprep.subr.bf16.mxu0 0
      %1636 = vmatpush1.bf16.msra.mxu0 %v1614
      %1637 = vmatprep.subr.bf16.mxu0 0
      %1638 = vmatpush2.bf16.msra.mxu0 0
      %1639 = vmatprep.subr.bf16.mxu0 0
      %1640 = vmatpush2.bf16.msra.mxu0 0
      %1641 = vmatprep.subr.bf16.mxu0 0
      %1642 = vmatpush2.bf16.msra.mxu0 0
      %1643 = vmatprep.subr.bf16.mxu0 0
      %1644 = vmatpush2.bf16.msra.mxu0 0
      %1645 = vmatprep.subr.bf16.mxu0 0
      %1646 = vmatpush2.bf16.msra.mxu0 0
      %1647 = vmatprep.subr.bf16.mxu0 0
      %1648 = vmatpush2.bf16.msra.mxu0 0
      %1649 = vmatprep.subr.bf16.mxu0 0
      %1650 = vmatpush2.bf16.msra.mxu0 0
      %1651 = vmatprep.subr.bf16.mxu0 0
      %1652 = vmatpush2.bf16.msra.mxu0 0
      %1653 = vmatprep.mubr.bf16.mxu0 0
      %1654 = vmatmul.mubr.bf16.gmra.mxu0 %v1619
      %v1655 = vpop.f32.mrf.mxu0
      %v1656 = vadd.f32 0.0, %v1655
      %v1657 = vpop.f32.mrf.mxu0
      %v1658 = vpop.f32.mrf.mxu0
      %v1659 = vadd.f32 0.0, %v1658
      %v1660 = vpop.f32.mrf.mxu0
      %1661 = vdwg.mxu0
      %v1662 = vstv %s637
      %vm1663 = vcmp.lt.s32.totalorder %v753, %v1662
      %v1664 = vld [vmem:[%s14] sm:$0x1]
      %v1665 = vpack.c.bf16 %v1594, %v1591
      %v1666 = vpack.c.bf16 %v1659, %v1656
      %v1668 = vsel %vm768, %v1665, 0
      %v1671 = vsel %vm768, %v1666, 0
      %1673 = vmatprep.subr.bf16.mxu0 0
      %1674 = vmatpush1.bf16.xpose.msra.mxu0 0
      %1675 = vmatprep.subr.bf16.mxu0 0
      %1676 = vmatpush1.bf16.xpose.msra.mxu0 0
      %1677 = vmatprep.subr.bf16.mxu0 0
      %1678 = vmatpush1.bf16.xpose.msra.mxu0 0
      %1679 = vmatprep.subr.bf16.mxu0 0
      %1680 = vmatpush1.bf16.xpose.msra.mxu0 0
      %1681 = vmatprep.subr.bf16.mxu0 0
      %1682 = vmatpush1.bf16.xpose.msra.mxu0 0
      %1683 = vmatprep.subr.bf16.mxu0 0
      %1684 = vmatpush1.bf16.xpose.msra.mxu0 0
      %1685 = vmatprep.subr.bf16.mxu0 0
      %1686 = vmatpush1.bf16.xpose.msra.mxu0 0
      %1687 = vmatprep.subr.bf16.mxu0 0
      %1688 = vmatpush1.bf16.xpose.msra.mxu0 %v1671
      %1689 = vmatprep.subr.bf16.mxu0 0
      %1690 = vmatpush2.bf16.xpose.msra.mxu0 0
      %1691 = vmatprep.subr.bf16.mxu0 0
      %1692 = vmatpush2.bf16.xpose.msra.mxu0 0
      %1693 = vmatprep.subr.bf16.mxu0 0
      %1694 = vmatpush2.bf16.xpose.msra.mxu0 0
      %1695 = vmatprep.subr.bf16.mxu0 0
      %1696 = vmatpush2.bf16.xpose.msra.mxu0 0
      %1697 = vmatprep.subr.bf16.mxu0 0
      %1698 = vmatpush2.bf16.xpose.msra.mxu0 0
      %1699 = vmatprep.subr.bf16.mxu0 0
      %1700 = vmatpush2.bf16.xpose.msra.mxu0 0
      %1701 = vmatprep.subr.bf16.mxu0 0
      %1702 = vmatpush2.bf16.xpose.msra.mxu0 0
      %1703 = vmatprep.subr.bf16.mxu0 0
      %1704 = vmatpush2.bf16.xpose.msra.mxu0 0
      %1705 = vmatprep.mubr.bf16.mxu0 0
      %1706 = vmatmul.mubr.bf16.gmra.mxu0 %v1668
      %v1707 = vpop.f32.mrf.mxu0
      %v1708 = vadd.f32 0.0, %v1707
      %v1709 = vpop.f32.mrf.mxu0
      %v1710 = vpop.f32.mrf.mxu0
      %v1711 = vadd.f32 0.0, %v1710
      %v1712 = vpop.f32.mrf.mxu0
      %1713 = vdwg.mxu0
      %v1714 = vmul.f32 %v1708, 0.35355338
      %v1715 = vmul.f32 %v1711, 0.35355338
      %v1716 = vsel %vm1663, %v1714, -3.4028235e+38
      %v1717 = vsel %vm1663, %v1715, -3.4028235e+38
      %vm1718 = vcmask 130048
      %v1719 = vsel %vm1718, %v1716, -inf
      %1720 = vmax.xlane.f32.xlu0 %v1719
      %v1721 = vpop.xlane.xlu0 %1720
      %vm1722 = vcmask 122880
      %v1723 = vsel %vm1722, %v1717, -inf
      %1724 = vmax.xlane.f32.xlu0 %v1723
      %v1725 = vpop.xlane.xlu0 %1724
      %v1726 = vsub.f32 %v1716, %v1721
      %v1727 = vsub.f32 %v1717, %v1725
      %v1728 = vmul.f32 %v1726, 1.442695
      %v1729 = vpow.pop %v1728
      %v1730 = vmul.f32 %v1727, 1.442695
      %v1731 = vpow.pop %v1730
      %v1732 = vsel %vm1718, %v1729, 0.0
      %1733 = vadd.xlane.f32.xlu0 %v1732
      %v1734 = vpop.xlane.xlu0 %1733
      %v1735 = vsel %vm1722, %v1731, 0.0
      %1736 = vadd.xlane.f32.xlu0 %v1735
      %v1737 = vpop.xlane.xlu0 %1736
      %v1738 = vrcp.pop %v1734
      %v1739 = vrcp.pop %v1737
      %v1740 = vmul.f32 %v1729, %v1738
      %v1741 = vmul.f32 %v1731, %v1739
      %v1742 = vpack.c.bf16 %v1741, %v1740
      %1744 = vrot.lane.b32.xlu0 %v1666, 96
      %v1745 = vpop.permute.xlu0 %1744
      %v1748 = vsel %vm1718, %v1742, 0
      %1750 = vmatprep.subr.bf16.mxu0 0
      %1751 = vmatpush1.bf16.msra.mxu0 0
      %1752 = vmatprep.subr.bf16.mxu0 0
      %1753 = vmatpush1.bf16.msra.mxu0 0
      %1754 = vmatprep.subr.bf16.mxu0 0
      %1755 = vmatpush1.bf16.msra.mxu0 0
      %1756 = vmatprep.subr.bf16.mxu0 0
      %1757 = vmatpush1.bf16.msra.mxu0 0
      %1758 = vmatprep.subr.bf16.mxu0 0
      %1759 = vmatpush1.bf16.msra.mxu0 0
      %1760 = vmatprep.subr.bf16.mxu0 0
      %1761 = vmatpush1.bf16.msra.mxu0 0
      %1762 = vmatprep.subr.bf16.mxu0 0
      %1763 = vmatpush1.bf16.msra.mxu0 0
      %1764 = vmatprep.subr.bf16.mxu0 0
      %1765 = vmatpush1.bf16.msra.mxu0 %v1745
      %1766 = vmatprep.subr.bf16.mxu0 0
      %1767 = vmatpush2.bf16.msra.mxu0 0
      %1768 = vmatprep.subr.bf16.mxu0 0
      %1769 = vmatpush2.bf16.msra.mxu0 0
      %1770 = vmatprep.subr.bf16.mxu0 0
      %1771 = vmatpush2.bf16.msra.mxu0 0
      %1772 = vmatprep.subr.bf16.mxu0 0
      %1773 = vmatpush2.bf16.msra.mxu0 0
      %1774 = vmatprep.subr.bf16.mxu0 0
      %1775 = vmatpush2.bf16.msra.mxu0 0
      %1776 = vmatprep.subr.bf16.mxu0 0
      %1777 = vmatpush2.bf16.msra.mxu0 0
      %1778 = vmatprep.subr.bf16.mxu0 0
      %1779 = vmatpush2.bf16.msra.mxu0 0
      %1780 = vmatprep.subr.bf16.mxu0 0
      %1781 = vmatpush2.bf16.msra.mxu0 0
      %1782 = vmatprep.mubr.bf16.mxu0 0
      %1783 = vmatmul.mubr.bf16.gmra.mxu0 %v1748
      %v1784 = vpop.f32.mrf.mxu0
      %v1785 = vadd.f32 0.0, %v1784
      %v1786 = vpop.f32.mrf.mxu0
      %v1787 = vpop.f32.mrf.mxu0
      %v1788 = vadd.f32 0.0, %v1787
      %v1789 = vpop.f32.mrf.mxu0
      %1790 = vdwg.mxu0
      %v1791 = vpack.c.bf16 %v1788, %v1785
      %v1792 = vld [vmem:[%s13] sm:$0xf]
      %1794 = vrot.lane.b32.xlu0 %v1665, 120
      %v1795 = vpop.permute.xlu0 %1794
      %1796 = vrot.lane.b32.xlu0 %v1666, 120
      %v1797 = vpop.permute.xlu0 %1796
      %v1799 = vsel %vm768, %v1795, 0
      %v1802 = vsel %vm768, %v1797, 0
      %1804 = vmatprep.subr.bf16.mxu0 0
      %1805 = vmatpush1.bf16.xpose.msra.mxu0 0
      %1806 = vmatprep.subr.bf16.mxu0 0
      %1807 = vmatpush1.bf16.xpose.msra.mxu0 0
      %1808 = vmatprep.subr.bf16.mxu0 0
      %1809 = vmatpush1.bf16.xpose.msra.mxu0 0
      %1810 = vmatprep.subr.bf16.mxu0 0
      %1811 = vmatpush1.bf16.xpose.msra.mxu0 0
      %1812 = vmatprep.subr.bf16.mxu0 0
      %1813 = vmatpush1.bf16.xpose.msra.mxu0 0
      %1814 = vmatprep.subr.bf16.mxu0 0
      %1815 = vmatpush1.bf16.xpose.msra.mxu0 0
      %1816 = vmatprep.subr.bf16.mxu0 0
      %1817 = vmatpush1.bf16.xpose.msra.mxu0 0
      %1818 = vmatprep.subr.bf16.mxu0 0
      %1819 = vmatpush1.bf16.xpose.msra.mxu0 %v1802
      %1820 = vmatprep.subr.bf16.mxu0 0
      %1821 = vmatpush2.bf16.xpose.msra.mxu0 0
      %1822 = vmatprep.subr.bf16.mxu0 0
      %1823 = vmatpush2.bf16.xpose.msra.mxu0 0
      %1824 = vmatprep.subr.bf16.mxu0 0
      %1825 = vmatpush2.bf16.xpose.msra.mxu0 0
      %1826 = vmatprep.subr.bf16.mxu0 0
      %1827 = vmatpush2.bf16.xpose.msra.mxu0 0
      %1828 = vmatprep.subr.bf16.mxu0 0
      %1829 = vmatpush2.bf16.xpose.msra.mxu0 0
      %1830 = vmatprep.subr.bf16.mxu0 0
      %1831 = vmatpush2.bf16.xpose.msra.mxu0 0
      %1832 = vmatprep.subr.bf16.mxu0 0
      %1833 = vmatpush2.bf16.xpose.msra.mxu0 0
      %1834 = vmatprep.subr.bf16.mxu0 0
      %1835 = vmatpush2.bf16.xpose.msra.mxu0 0
      %1836 = vmatprep.mubr.bf16.mxu0 0
      %1837 = vmatmul.mubr.bf16.gmra.mxu0 %v1799
      %v1838 = vpop.f32.mrf.mxu0
      %v1839 = vadd.f32 0.0, %v1838
      %v1840 = vpop.f32.mrf.mxu0
      %v1841 = vpop.f32.mrf.mxu0
      %v1842 = vadd.f32 0.0, %v1841
      %v1843 = vpop.f32.mrf.mxu0
      %1844 = vdwg.mxu0
      %v1845 = vmul.f32 %v1839, 0.35355338
      %v1846 = vmul.f32 %v1842, 0.35355338
      %v1847 = vsel %vm1663, %v1845, -3.4028235e+38
      %v1848 = vsel %vm1663, %v1846, -3.4028235e+38
      %v1849 = vsel %vm1718, %v1847, -inf
      %1850 = vmax.xlane.f32.xlu0 %v1849
      %v1851 = vpop.xlane.xlu0 %1850
      %v1852 = vsel %vm1722, %v1848, -inf
      %1853 = vmax.xlane.f32.xlu0 %v1852
      %v1854 = vpop.xlane.xlu0 %1853
      %v1855 = vsub.f32 %v1847, %v1851
      %v1856 = vsub.f32 %v1848, %v1854
      %v1857 = vmul.f32 %v1855, 1.442695
      %v1858 = vpow.pop %v1857
      %v1859 = vmul.f32 %v1856, 1.442695
      %v1860 = vpow.pop %v1859
      %v1861 = vsel %vm1718, %v1858, 0.0
      %1862 = vadd.xlane.f32.xlu0 %v1861
      %v1863 = vpop.xlane.xlu0 %1862
      %v1864 = vsel %vm1722, %v1860, 0.0
      %1865 = vadd.xlane.f32.xlu0 %v1864
      %v1866 = vpop.xlane.xlu0 %1865
      %v1867 = vrcp.pop %v1863
      %v1868 = vrcp.pop %v1866
      %v1869 = vmul.f32 %v1858, %v1867
      %v1870 = vmul.f32 %v1860, %v1868
      %v1871 = vpack.c.bf16 %v1870, %v1869
      %1872 = vrot.lane.b32.xlu0 %v1666, 88
      %v1873 = vpop.permute.xlu0 %1872
      %v1876 = vsel %vm1718, %v1871, 0
      %1878 = vmatprep.subr.bf16.mxu0 0
      %1879 = vmatpush1.bf16.msra.mxu0 0
      %1880 = vmatprep.subr.bf16.mxu0 0
      %1881 = vmatpush1.bf16.msra.mxu0 0
      %1882 = vmatprep.subr.bf16.mxu0 0
      %1883 = vmatpush1.bf16.msra.mxu0 0
      %1884 = vmatprep.subr.bf16.mxu0 0
      %1885 = vmatpush1.bf16.msra.mxu0 0
      %1886 = vmatprep.subr.bf16.mxu0 0
      %1887 = vmatpush1.bf16.msra.mxu0 0
      %1888 = vmatprep.subr.bf16.mxu0 0
      %1889 = vmatpush1.bf16.msra.mxu0 0
      %1890 = vmatprep.subr.bf16.mxu0 0
      %1891 = vmatpush1.bf16.msra.mxu0 0
      %1892 = vmatprep.subr.bf16.mxu0 0
      %1893 = vmatpush1.bf16.msra.mxu0 %v1873
      %1894 = vmatprep.subr.bf16.mxu0 0
      %1895 = vmatpush2.bf16.msra.mxu0 0
      %1896 = vmatprep.subr.bf16.mxu0 0
      %1897 = vmatpush2.bf16.msra.mxu0 0
      %1898 = vmatprep.subr.bf16.mxu0 0
      %1899 = vmatpush2.bf16.msra.mxu0 0
      %1900 = vmatprep.subr.bf16.mxu0 0
      %1901 = vmatpush2.bf16.msra.mxu0 0
      %1902 = vmatprep.subr.bf16.mxu0 0
      %1903 = vmatpush2.bf16.msra.mxu0 0
      %1904 = vmatprep.subr.bf16.mxu0 0
      %1905 = vmatpush2.bf16.msra.mxu0 0
      %1906 = vmatprep.subr.bf16.mxu0 0
      %1907 = vmatpush2.bf16.msra.mxu0 0
      %1908 = vmatprep.subr.bf16.mxu0 0
      %1909 = vmatpush2.bf16.msra.mxu0 0
      %1910 = vmatprep.mubr.bf16.mxu0 0
      %1911 = vmatmul.mubr.bf16.gmra.mxu0 %v1876
      %v1912 = vpop.f32.mrf.mxu0
      %v1913 = vadd.f32 0.0, %v1912
      %v1914 = vpop.f32.mrf.mxu0
      %v1915 = vpop.f32.mrf.mxu0
      %v1916 = vadd.f32 0.0, %v1915
      %v1917 = vpop.f32.mrf.mxu0
      %1918 = vdwg.mxu0
      %v1919 = vpack.c.bf16 %v1916, %v1913
      %s1920 = scalar_lea.vmem %s13, 4
      %v1921 = vld [vmem:[%s1920] sm:$0xf]
      %v1923 = vsel %vm768, %v1919, 0
      %v1926 = vsel %vm850, %v1921, 0
      %1928 = vmatprep.subr.bf16.mxu0 0
      %1929 = vmatpush1.bf16.msra.mxu0 0
      %1930 = vmatprep.subr.bf16.mxu0 0
      %1931 = vmatpush1.bf16.msra.mxu0 0
      %1932 = vmatprep.subr.bf16.mxu0 0
      %1933 = vmatpush1.bf16.msra.mxu0 0
      %1934 = vmatprep.subr.bf16.mxu0 0
      %1935 = vmatpush1.bf16.msra.mxu0 0
      %1936 = vmatprep.subr.bf16.mxu0 0
      %1937 = vmatpush1.bf16.msra.mxu0 0
      %1938 = vmatprep.subr.bf16.mxu0 0
      %1939 = vmatpush1.bf16.msra.mxu0 0
      %1940 = vmatprep.subr.bf16.mxu0 0
      %1941 = vmatpush1.bf16.msra.mxu0 0
      %1942 = vmatprep.subr.bf16.mxu0 0
      %1943 = vmatpush1.bf16.msra.mxu0 %v1926
      %1944 = vmatprep.subr.bf16.mxu0 0
      %1945 = vmatpush2.bf16.msra.mxu0 0
      %1946 = vmatprep.subr.bf16.mxu0 0
      %1947 = vmatpush2.bf16.msra.mxu0 0
      %1948 = vmatprep.subr.bf16.mxu0 0
      %1949 = vmatpush2.bf16.msra.mxu0 0
      %1950 = vmatprep.subr.bf16.mxu0 0
      %1951 = vmatpush2.bf16.msra.mxu0 0
      %1952 = vmatprep.subr.bf16.mxu0 0
      %1953 = vmatpush2.bf16.msra.mxu0 0
      %1954 = vmatprep.subr.bf16.mxu0 0
      %1955 = vmatpush2.bf16.msra.mxu0 0
      %1956 = vmatprep.subr.bf16.mxu0 0
      %1957 = vmatpush2.bf16.msra.mxu0 0
      %1958 = vmatprep.subr.bf16.mxu0 0
      %1959 = vmatpush2.bf16.msra.mxu0 0
      %1960 = vmatprep.mubr.bf16.mxu0 0
      %1961 = vmatmul.mubr.bf16.gmra.mxu0 %v1923
      %v1962 = vpop.f32.mrf.mxu0
      %v1963 = vadd.f32 0.0, %v1962
      %v1964 = vpop.f32.mrf.mxu0
      %v1965 = vpop.f32.mrf.mxu0
      %v1966 = vadd.f32 0.0, %v1965
      %v1967 = vpop.f32.mrf.mxu0
      %1968 = vdwg.mxu0
      %v1970 = vsel %vm768, %v1791, 0
      %v1973 = vsel %vm850, %v1792, 0
      %1975 = vmatprep.subr.bf16.mxu0 0
      %1976 = vmatpush1.bf16.msra.mxu0 0
      %1977 = vmatprep.subr.bf16.mxu0 0
      %1978 = vmatpush1.bf16.msra.mxu0 0
      %1979 = vmatprep.subr.bf16.mxu0 0
      %1980 = vmatpush1.bf16.msra.mxu0 0
      %1981 = vmatprep.subr.bf16.mxu0 0
      %1982 = vmatpush1.bf16.msra.mxu0 0
      %1983 = vmatprep.subr.bf16.mxu0 0
      %1984 = vmatpush1.bf16.msra.mxu0 0
      %1985 = vmatprep.subr.bf16.mxu0 0
      %1986 = vmatpush1.bf16.msra.mxu0 0
      %1987 = vmatprep.subr.bf16.mxu0 0
      %1988 = vmatpush1.bf16.msra.mxu0 0
      %1989 = vmatprep.subr.bf16.mxu0 0
      %1990 = vmatpush1.bf16.msra.mxu0 %v1973
      %1991 = vmatprep.subr.bf16.mxu0 0
      %1992 = vmatpush2.bf16.msra.mxu0 0
      %1993 = vmatprep.subr.bf16.mxu0 0
      %1994 = vmatpush2.bf16.msra.mxu0 0
      %1995 = vmatprep.subr.bf16.mxu0 0
      %1996 = vmatpush2.bf16.msra.mxu0 0
      %1997 = vmatprep.subr.bf16.mxu0 0
      %1998 = vmatpush2.bf16.msra.mxu0 0
      %1999 = vmatprep.subr.bf16.mxu0 0
      %2000 = vmatpush2.bf16.msra.mxu0 0
      %2001 = vmatprep.subr.bf16.mxu0 0
      %2002 = vmatpush2.bf16.msra.mxu0 0
      %2003 = vmatprep.subr.bf16.mxu0 0
      %2004 = vmatpush2.bf16.msra.mxu0 0
      %2005 = vmatprep.subr.bf16.mxu0 0
      %2006 = vmatpush2.bf16.msra.mxu0 0
      %2007 = vmatprep.mubr.bf16.mxu0 0
      %2008 = vmatmul.mubr.bf16.gmra.mxu0 %v1970
      %v2009 = vpop.f32.mrf.mxu0
      %v2010 = vadd.f32 %v1963, %v2009
      %v2011 = vpop.f32.mrf.mxu0
      %v2012 = vpop.f32.mrf.mxu0
      %v2013 = vadd.f32 %v1966, %v2012
      %v2014 = vpop.f32.mrf.mxu0
      %2015 = vdwg.mxu0
      %2016 = vrot.lane.b32.xlu0 %v1665, 112
      %v2017 = vpop.permute.xlu0 %2016
      %2018 = vrot.lane.b32.xlu0 %v1666, 112
      %v2019 = vpop.permute.xlu0 %2018
      %v2021 = vsel %vm768, %v2017, 0
      %v2024 = vsel %vm768, %v2019, 0
      %2026 = vmatprep.subr.bf16.mxu0 0
      %2027 = vmatpush1.bf16.xpose.msra.mxu0 0
      %2028 = vmatprep.subr.bf16.mxu0 0
      %2029 = vmatpush1.bf16.xpose.msra.mxu0 0
      %2030 = vmatprep.subr.bf16.mxu0 0
      %2031 = vmatpush1.bf16.xpose.msra.mxu0 0
      %2032 = vmatprep.subr.bf16.mxu0 0
      %2033 = vmatpush1.bf16.xpose.msra.mxu0 0
      %2034 = vmatprep.subr.bf16.mxu0 0
      %2035 = vmatpush1.bf16.xpose.msra.mxu0 0
      %2036 = vmatprep.subr.bf16.mxu0 0
      %2037 = vmatpush1.bf16.xpose.msra.mxu0 0
      %2038 = vmatprep.subr.bf16.mxu0 0
      %2039 = vmatpush1.bf16.xpose.msra.mxu0 0
      %2040 = vmatprep.subr.bf16.mxu0 0
      %2041 = vmatpush1.bf16.xpose.msra.mxu0 %v2024
      %2042 = vmatprep.subr.bf16.mxu0 0
      %2043 = vmatpush2.bf16.xpose.msra.mxu0 0
      %2044 = vmatprep.subr.bf16.mxu0 0
      %2045 = vmatpush2.bf16.xpose.msra.mxu0 0
      %2046 = vmatprep.subr.bf16.mxu0 0
      %2047 = vmatpush2.bf16.xpose.msra.mxu0 0
      %2048 = vmatprep.subr.bf16.mxu0 0
      %2049 = vmatpush2.bf16.xpose.msra.mxu0 0
      %2050 = vmatprep.subr.bf16.mxu0 0
      %2051 = vmatpush2.bf16.xpose.msra.mxu0 0
      %2052 = vmatprep.subr.bf16.mxu0 0
      %2053 = vmatpush2.bf16.xpose.msra.mxu0 0
      %2054 = vmatprep.subr.bf16.mxu0 0
      %2055 = vmatpush2.bf16.xpose.msra.mxu0 0
      %2056 = vmatprep.subr.bf16.mxu0 0
      %2057 = vmatpush2.bf16.xpose.msra.mxu0 0
      %2058 = vmatprep.mubr.bf16.mxu0 0
      %2059 = vmatmul.mubr.bf16.gmra.mxu0 %v2021
      %v2060 = vpop.f32.mrf.mxu0
      %v2061 = vadd.f32 0.0, %v2060
      %v2062 = vpop.f32.mrf.mxu0
      %v2063 = vpop.f32.mrf.mxu0
      %v2064 = vadd.f32 0.0, %v2063
      %v2065 = vpop.f32.mrf.mxu0
      %2066 = vdwg.mxu0
      %v2067 = vmul.f32 %v2061, 0.35355338
      %v2068 = vmul.f32 %v2064, 0.35355338
      %v2069 = vsel %vm1663, %v2067, -3.4028235e+38
      %v2070 = vsel %vm1663, %v2068, -3.4028235e+38
      %v2071 = vsel %vm1718, %v2069, -inf
      %2072 = vmax.xlane.f32.xlu0 %v2071
      %v2073 = vpop.xlane.xlu0 %2072
      %v2074 = vsel %vm1722, %v2070, -inf
      %2075 = vmax.xlane.f32.xlu0 %v2074
      %v2076 = vpop.xlane.xlu0 %2075
      %v2077 = vsub.f32 %v2069, %v2073
      %v2078 = vsub.f32 %v2070, %v2076
      %v2079 = vmul.f32 %v2077, 1.442695
      %v2080 = vpow.pop %v2079
      %v2081 = vmul.f32 %v2078, 1.442695
      %v2082 = vpow.pop %v2081
      %v2083 = vsel %vm1718, %v2080, 0.0
      %2084 = vadd.xlane.f32.xlu0 %v2083
      %v2085 = vpop.xlane.xlu0 %2084
      %v2086 = vsel %vm1722, %v2082, 0.0
      %2087 = vadd.xlane.f32.xlu0 %v2086
      %v2088 = vpop.xlane.xlu0 %2087
      %v2089 = vrcp.pop %v2085
      %v2090 = vrcp.pop %v2088
      %v2091 = vmul.f32 %v2080, %v2089
      %v2092 = vmul.f32 %v2082, %v2090
      %v2093 = vpack.c.bf16 %v2092, %v2091
      %2094 = vrot.lane.b32.xlu0 %v1666, 80
      %v2095 = vpop.permute.xlu0 %2094
      %v2098 = vsel %vm1718, %v2093, 0
      %2100 = vmatprep.subr.bf16.mxu0 0
      %2101 = vmatpush1.bf16.msra.mxu0 0
      %2102 = vmatprep.subr.bf16.mxu0 0
      %2103 = vmatpush1.bf16.msra.mxu0 0
      %2104 = vmatprep.subr.bf16.mxu0 0
      %2105 = vmatpush1.bf16.msra.mxu0 0
      %2106 = vmatprep.subr.bf16.mxu0 0
      %2107 = vmatpush1.bf16.msra.mxu0 0
      %2108 = vmatprep.subr.bf16.mxu0 0
      %2109 = vmatpush1.bf16.msra.mxu0 0
      %2110 = vmatprep.subr.bf16.mxu0 0
      %2111 = vmatpush1.bf16.msra.mxu0 0
      %2112 = vmatprep.subr.bf16.mxu0 0
      %2113 = vmatpush1.bf16.msra.mxu0 0
      %2114 = vmatprep.subr.bf16.mxu0 0
      %2115 = vmatpush1.bf16.msra.mxu0 %v2095
      %2116 = vmatprep.subr.bf16.mxu0 0
      %2117 = vmatpush2.bf16.msra.mxu0 0
      %2118 = vmatprep.subr.bf16.mxu0 0
      %2119 = vmatpush2.bf16.msra.mxu0 0
      %2120 = vmatprep.subr.bf16.mxu0 0
      %2121 = vmatpush2.bf16.msra.mxu0 0
      %2122 = vmatprep.subr.bf16.mxu0 0
      %2123 = vmatpush2.bf16.msra.mxu0 0
      %2124 = vmatprep.subr.bf16.mxu0 0
      %2125 = vmatpush2.bf16.msra.mxu0 0
      %2126 = vmatprep.subr.bf16.mxu0 0
      %2127 = vmatpush2.bf16.msra.mxu0 0
      %2128 = vmatprep.subr.bf16.mxu0 0
      %2129 = vmatpush2.bf16.msra.mxu0 0
      %2130 = vmatprep.subr.bf16.mxu0 0
      %2131 = vmatpush2.bf16.msra.mxu0 0
      %2132 = vmatprep.mubr.bf16.mxu0 0
      %2133 = vmatmul.mubr.bf16.gmra.mxu0 %v2098
      %v2134 = vpop.f32.mrf.mxu0
      %v2135 = vadd.f32 0.0, %v2134
      %v2136 = vpop.f32.mrf.mxu0
      %v2137 = vpop.f32.mrf.mxu0
      %v2138 = vadd.f32 0.0, %v2137
      %v2139 = vpop.f32.mrf.mxu0
      %2140 = vdwg.mxu0
      %v2141 = vpack.c.bf16 %v2138, %v2135
      %s2142 = scalar_lea.vmem %s13, 8
      %v2143 = vld [vmem:[%s2142] sm:$0xf]
      %v2145 = vsel %vm768, %v2141, 0
      %v2148 = vsel %vm850, %v2143, 0
      %2150 = vmatprep.subr.bf16.mxu0 0
      %2151 = vmatpush1.bf16.msra.mxu0 0
      %2152 = vmatprep.subr.bf16.mxu0 0
      %2153 = vmatpush1.bf16.msra.mxu0 0
      %2154 = vmatprep.subr.bf16.mxu0 0
      %2155 = vmatpush1.bf16.msra.mxu0 0
      %2156 = vmatprep.subr.bf16.mxu0 0
      %2157 = vmatpush1.bf16.msra.mxu0 0
      %2158 = vmatprep.subr.bf16.mxu0 0
      %2159 = vmatpush1.bf16.msra.mxu0 0
      %2160 = vmatprep.subr.bf16.mxu0 0
      %2161 = vmatpush1.bf16.msra.mxu0 0
      %2162 = vmatprep.subr.bf16.mxu0 0
      %2163 = vmatpush1.bf16.msra.mxu0 0
      %2164 = vmatprep.subr.bf16.mxu0 0
      %2165 = vmatpush1.bf16.msra.mxu0 %v2148
      %2166 = vmatprep.subr.bf16.mxu0 0
      %2167 = vmatpush2.bf16.msra.mxu0 0
      %2168 = vmatprep.subr.bf16.mxu0 0
      %2169 = vmatpush2.bf16.msra.mxu0 0
      %2170 = vmatprep.subr.bf16.mxu0 0
      %2171 = vmatpush2.bf16.msra.mxu0 0
      %2172 = vmatprep.subr.bf16.mxu0 0
      %2173 = vmatpush2.bf16.msra.mxu0 0
      %2174 = vmatprep.subr.bf16.mxu0 0
      %2175 = vmatpush2.bf16.msra.mxu0 0
      %2176 = vmatprep.subr.bf16.mxu0 0
      %2177 = vmatpush2.bf16.msra.mxu0 0
      %2178 = vmatprep.subr.bf16.mxu0 0
      %2179 = vmatpush2.bf16.msra.mxu0 0
      %2180 = vmatprep.subr.bf16.mxu0 0
      %2181 = vmatpush2.bf16.msra.mxu0 0
      %2182 = vmatprep.mubr.bf16.mxu0 0
      %2183 = vmatmul.mubr.bf16.gmra.mxu0 %v2145
      %v2184 = vpop.f32.mrf.mxu0
      %v2185 = vadd.f32 0.0, %v2184
      %v2186 = vpop.f32.mrf.mxu0
      %v2187 = vpop.f32.mrf.mxu0
      %v2188 = vadd.f32 0.0, %v2187
      %v2189 = vpop.f32.mrf.mxu0
      %2190 = vdwg.mxu0
      %v2191 = vadd.f32 %v2010, %v2185
      %v2192 = vadd.f32 %v2013, %v2188
      %2193 = vrot.lane.b32.xlu0 %v1665, 104
      %v2194 = vpop.permute.xlu0 %2193
      %2195 = vrot.lane.b32.xlu0 %v1666, 104
      %v2196 = vpop.permute.xlu0 %2195
      %v2198 = vsel %vm768, %v2194, 0
      %v2201 = vsel %vm768, %v2196, 0
      %2203 = vmatprep.subr.bf16.mxu0 0
      %2204 = vmatpush1.bf16.xpose.msra.mxu0 0
      %2205 = vmatprep.subr.bf16.mxu0 0
      %2206 = vmatpush1.bf16.xpose.msra.mxu0 0
      %2207 = vmatprep.subr.bf16.mxu0 0
      %2208 = vmatpush1.bf16.xpose.msra.mxu0 0
      %2209 = vmatprep.subr.bf16.mxu0 0
      %2210 = vmatpush1.bf16.xpose.msra.mxu0 0
      %2211 = vmatprep.subr.bf16.mxu0 0
      %2212 = vmatpush1.bf16.xpose.msra.mxu0 0
      %2213 = vmatprep.subr.bf16.mxu0 0
      %2214 = vmatpush1.bf16.xpose.msra.mxu0 0
      %2215 = vmatprep.subr.bf16.mxu0 0
      %2216 = vmatpush1.bf16.xpose.msra.mxu0 0
      %2217 = vmatprep.subr.bf16.mxu0 0
      %2218 = vmatpush1.bf16.xpose.msra.mxu0 %v2201
      %2219 = vmatprep.subr.bf16.mxu0 0
      %2220 = vmatpush2.bf16.xpose.msra.mxu0 0
      %2221 = vmatprep.subr.bf16.mxu0 0
      %2222 = vmatpush2.bf16.xpose.msra.mxu0 0
      %2223 = vmatprep.subr.bf16.mxu0 0
      %2224 = vmatpush2.bf16.xpose.msra.mxu0 0
      %2225 = vmatprep.subr.bf16.mxu0 0
      %2226 = vmatpush2.bf16.xpose.msra.mxu0 0
      %2227 = vmatprep.subr.bf16.mxu0 0
      %2228 = vmatpush2.bf16.xpose.msra.mxu0 0
      %2229 = vmatprep.subr.bf16.mxu0 0
      %2230 = vmatpush2.bf16.xpose.msra.mxu0 0
      %2231 = vmatprep.subr.bf16.mxu0 0
      %2232 = vmatpush2.bf16.xpose.msra.mxu0 0
      %2233 = vmatprep.subr.bf16.mxu0 0
      %2234 = vmatpush2.bf16.xpose.msra.mxu0 0
      %2235 = vmatprep.mubr.bf16.mxu0 0
      %2236 = vmatmul.mubr.bf16.gmra.mxu0 %v2198
      %v2237 = vpop.f32.mrf.mxu0
      %v2238 = vadd.f32 0.0, %v2237
      %v2239 = vpop.f32.mrf.mxu0
      %v2240 = vpop.f32.mrf.mxu0
      %v2241 = vadd.f32 0.0, %v2240
      %v2242 = vpop.f32.mrf.mxu0
      %2243 = vdwg.mxu0
      %v2244 = vmul.f32 %v2238, 0.35355338
      %v2245 = vmul.f32 %v2241, 0.35355338
      %v2246 = vsel %vm1663, %v2244, -3.4028235e+38
      %v2247 = vsel %vm1663, %v2245, -3.4028235e+38
      %v2248 = vsel %vm1718, %v2246, -inf
      %2249 = vmax.xlane.f32.xlu0 %v2248
      %v2250 = vpop.xlane.xlu0 %2249
      %v2251 = vsel %vm1722, %v2247, -inf
      %2252 = vmax.xlane.f32.xlu0 %v2251
      %v2253 = vpop.xlane.xlu0 %2252
      %v2254 = vsub.f32 %v2246, %v2250
      %v2255 = vsub.f32 %v2247, %v2253
      %v2256 = vmul.f32 %v2254, 1.442695
      %v2257 = vpow.pop %v2256
      %v2258 = vmul.f32 %v2255, 1.442695
      %v2259 = vpow.pop %v2258
      %v2260 = vsel %vm1718, %v2257, 0.0
      %2261 = vadd.xlane.f32.xlu0 %v2260
      %v2262 = vpop.xlane.xlu0 %2261
      %v2263 = vsel %vm1722, %v2259, 0.0
      %2264 = vadd.xlane.f32.xlu0 %v2263
      %v2265 = vpop.xlane.xlu0 %2264
      %v2266 = vrcp.pop %v2262
      %v2267 = vrcp.pop %v2265
      %v2268 = vmul.f32 %v2257, %v2266
      %v2269 = vmul.f32 %v2259, %v2267
      %v2270 = vpack.c.bf16 %v2269, %v2268
      %2271 = vrot.lane.b32.xlu0 %v1666, 72
      %v2272 = vpop.permute.xlu0 %2271
      %v2275 = vsel %vm1718, %v2270, 0
      %2277 = vmatprep.subr.bf16.mxu0 0
      %2278 = vmatpush1.bf16.msra.mxu0 0
      %2279 = vmatprep.subr.bf16.mxu0 0
      %2280 = vmatpush1.bf16.msra.mxu0 0
      %2281 = vmatprep.subr.bf16.mxu0 0
      %2282 = vmatpush1.bf16.msra.mxu0 0
      %2283 = vmatprep.subr.bf16.mxu0 0
      %2284 = vmatpush1.bf16.msra.mxu0 0
      %2285 = vmatprep.subr.bf16.mxu0 0
      %2286 = vmatpush1.bf16.msra.mxu0 0
      %2287 = vmatprep.subr.bf16.mxu0 0
      %2288 = vmatpush1.bf16.msra.mxu0 0
      %2289 = vmatprep.subr.bf16.mxu0 0
      %2290 = vmatpush1.bf16.msra.mxu0 0
      %2291 = vmatprep.subr.bf16.mxu0 0
      %2292 = vmatpush1.bf16.msra.mxu0 %v2272
      %2293 = vmatprep.subr.bf16.mxu0 0
      %2294 = vmatpush2.bf16.msra.mxu0 0
      %2295 = vmatprep.subr.bf16.mxu0 0
      %2296 = vmatpush2.bf16.msra.mxu0 0
      %2297 = vmatprep.subr.bf16.mxu0 0
      %2298 = vmatpush2.bf16.msra.mxu0 0
      %2299 = vmatprep.subr.bf16.mxu0 0
      %2300 = vmatpush2.bf16.msra.mxu0 0
      %2301 = vmatprep.subr.bf16.mxu0 0
      %2302 = vmatpush2.bf16.msra.mxu0 0
      %2303 = vmatprep.subr.bf16.mxu0 0
      %2304 = vmatpush2.bf16.msra.mxu0 0
      %2305 = vmatprep.subr.bf16.mxu0 0
      %2306 = vmatpush2.bf16.msra.mxu0 0
      %2307 = vmatprep.subr.bf16.mxu0 0
      %2308 = vmatpush2.bf16.msra.mxu0 0
      %2309 = vmatprep.mubr.bf16.mxu0 0
      %2310 = vmatmul.mubr.bf16.gmra.mxu0 %v2275
      %v2311 = vpop.f32.mrf.mxu0
      %v2312 = vadd.f32 0.0, %v2311
      %v2313 = vpop.f32.mrf.mxu0
      %v2314 = vpop.f32.mrf.mxu0
      %v2315 = vadd.f32 0.0, %v2314
      %v2316 = vpop.f32.mrf.mxu0
      %2317 = vdwg.mxu0
      %v2318 = vpack.c.bf16 %v2315, %v2312
      %s2319 = scalar_lea.vmem %s13, 12
      %v2320 = vld [vmem:[%s2319] sm:$0xf]
      %v2322 = vsel %vm768, %v2318, 0
      %v2325 = vsel %vm850, %v2320, 0
      %2327 = vmatprep.subr.bf16.mxu0 0
      %2328 = vmatpush1.bf16.msra.mxu0 0
      %2329 = vmatprep.subr.bf16.mxu0 0
      %2330 = vmatpush1.bf16.msra.mxu0 0
      %2331 = vmatprep.subr.bf16.mxu0 0
      %2332 = vmatpush1.bf16.msra.mxu0 0
      %2333 = vmatprep.subr.bf16.mxu0 0
      %2334 = vmatpush1.bf16.msra.mxu0 0
      %2335 = vmatprep.subr.bf16.mxu0 0
      %2336 = vmatpush1.bf16.msra.mxu0 0
      %2337 = vmatprep.subr.bf16.mxu0 0
      %2338 = vmatpush1.bf16.msra.mxu0 0
      %2339 = vmatprep.subr.bf16.mxu0 0
      %2340 = vmatpush1.bf16.msra.mxu0 0
      %2341 = vmatprep.subr.bf16.mxu0 0
      %2342 = vmatpush1.bf16.msra.mxu0 %v2325
      %2343 = vmatprep.subr.bf16.mxu0 0
      %2344 = vmatpush2.bf16.msra.mxu0 0
      %2345 = vmatprep.subr.bf16.mxu0 0
      %2346 = vmatpush2.bf16.msra.mxu0 0
      %2347 = vmatprep.subr.bf16.mxu0 0
      %2348 = vmatpush2.bf16.msra.mxu0 0
      %2349 = vmatprep.subr.bf16.mxu0 0
      %2350 = vmatpush2.bf16.msra.mxu0 0
      %2351 = vmatprep.subr.bf16.mxu0 0
      %2352 = vmatpush2.bf16.msra.mxu0 0
      %2353 = vmatprep.subr.bf16.mxu0 0
      %2354 = vmatpush2.bf16.msra.mxu0 0
      %2355 = vmatprep.subr.bf16.mxu0 0
      %2356 = vmatpush2.bf16.msra.mxu0 0
      %2357 = vmatprep.subr.bf16.mxu0 0
      %2358 = vmatpush2.bf16.msra.mxu0 0
      %2359 = vmatprep.mubr.bf16.mxu0 0
      %2360 = vmatmul.mubr.bf16.gmra.mxu0 %v2322
      %v2361 = vpop.f32.mrf.mxu0
      %v2362 = vadd.f32 0.0, %v2361
      %v2363 = vpop.f32.mrf.mxu0
      %v2364 = vpop.f32.mrf.mxu0
      %v2365 = vadd.f32 0.0, %v2364
      %v2366 = vpop.f32.mrf.mxu0
      %2367 = vdwg.mxu0
      %v2368 = vadd.f32 %v2191, %v2362
      %v2369 = vadd.f32 %v2192, %v2365
      %v2371 = vlaneseq
      %v2372 = vshrl.u32 %v2371, 7
      %v2373 = vsub.s32 0, %v2372
      %v2374 = vrot.slane %v1664, %v2373
      %v2376 = vadd.f32 %v2368, %v2374
      %v2377 = vadd.f32 %v2369, %v2374
      %v2378 = vadd.f32 %v1490, %v2376
      %v2379 = vadd.f32 %v1491, %v2377
      %v2380 = vld [vmem:[%s15] sm:$0x1]
      %v2381 = vld [vmem:[%s16] sm:$0x1]
      %v2382 = vsel %vm646, %v2378, 0.0
      %2383 = vadd.xlane.f32.xlu0 %v2382
      %v2384 = vpop.xlane.xlu0 %2383
      %v2385 = vsel %vm650, %v2379, 0.0
      %2386 = vadd.xlane.f32.xlu0 %v2385
      %v2387 = vpop.xlane.xlu0 %2386
      %v2388 = vmul.f32 %v2384, %v654
      %v2389 = vmul.f32 %v2387, %v654
      %v2390 = vsub.f32 %v2378, %v2388
      %v2391 = vsub.f32 %v2379, %v2389
      %v2392 = vmul.f32 %v2390, %v2390
      %v2393 = vmul.f32 %v2391, %v2391
      %v2394 = vsel %vm646, %v2392, 0.0
      %2395 = vadd.xlane.f32.xlu0 %v2394
      %v2396 = vpop.xlane.xlu0 %2395
      %v2397 = vsel %vm650, %v2393, 0.0
      %2398 = vadd.xlane.f32.xlu0 %v2397
      %v2399 = vpop.xlane.xlu0 %2398
      %v2400 = vmul.f32 %v2396, %v654
      %v2401 = vmul.f32 %v2399, %v654
      %v2402 = vadd.f32 %v2400, 1e-06
      %v2403 = vadd.f32 %v2401, 1e-06
      %v2404 = vrsqrt.pop %v2402
      %v2405 = vrsqrt.pop %v2403
      %v2406 = vmul.f32 %v2390, %v2404
      %v2407 = vmul.f32 %v2391, %v2405
      %v2409 = vlaneseq
      %v2410 = vshrl.u32 %v2409, 7
      %v2411 = vsub.s32 0, %v2410
      %v2412 = vrot.slane %v2380, %v2411
      %v2414 = vmul.f32 %v2406, %v2412
      %v2415 = vmul.f32 %v2407, %v2412
      %v2417 = vlaneseq
      %v2418 = vshrl.u32 %v2417, 7
      %v2419 = vsub.s32 0, %v2418
      %v2420 = vrot.slane %v2381, %v2419
      %v2422 = vadd.f32 %v2414, %v2420
      %v2423 = vadd.f32 %v2415, %v2420
      %v2424 = vpack.c.bf16 %v2423, %v2422
      %v2425 = vld [vmem:[%s17] sm:$0xf]
      %v2426 = vld [vmem:[%s17 + $0x4] sm:$0xf]
      %v2427 = vld [vmem:[%s17 + $0x8] sm:$0xf]
      %v2428 = vld [vmem:[%s17 + $0xc] sm:$0xf]
      %v2429 = vld [vmem:[%s18] sm:$0x1]
      %v2431 = vlaneseq
      %v2432 = vshrl.u32 %v2431, 7
      %v2433 = vsub.s32 0, %v2432
      %v2434 = vrot.slane %v2429, %v2433
      %v2440 = vunpack.c.l.b16 %v2425
      %v2441 = vunpack.c.l.b16 %v2426
      %v2442 = vunpack.c.l.b16 %v2427
      %v2443 = vunpack.c.l.b16 %v2428
      %v2444 = vpack.c.b16 %v2441, %v2440
      %v2445 = vpack.c.b16 %v2443, %v2442
      %v2449 = vsel %vm646, %v2424, 0
      %2451 = vmatprep.subr.bf16.mxu0 0
      %2452 = vmatpush1.bf16.msra.mxu0 0
      %2453 = vmatprep.subr.bf16.mxu0 0
      %2454 = vmatpush1.bf16.msra.mxu0 0
      %2455 = vmatprep.subr.bf16.mxu0 0
      %2456 = vmatpush1.bf16.msra.mxu0 0
      %2457 = vmatprep.subr.bf16.mxu0 0
      %2458 = vmatpush1.bf16.msra.mxu0 0
      %2459 = vmatprep.subr.bf16.mxu0 0
      %2460 = vmatpush1.bf16.msra.mxu0 0
      %2461 = vmatprep.subr.bf16.mxu0 0
      %2462 = vmatpush1.bf16.msra.mxu0 0
      %2463 = vmatprep.subr.bf16.mxu0 0
      %2464 = vmatpush1.bf16.msra.mxu0 %v2445
      %2465 = vmatprep.subr.bf16.mxu0 0
      %2466 = vmatpush1.bf16.msra.mxu0 %v2444
      %2467 = vmatprep.subr.bf16.mxu0 0
      %2468 = vmatpush2.bf16.msra.mxu0 0
      %2469 = vmatprep.subr.bf16.mxu0 0
      %2470 = vmatpush2.bf16.msra.mxu0 0
      %2471 = vmatprep.subr.bf16.mxu0 0
      %2472 = vmatpush2.bf16.msra.mxu0 0
      %2473 = vmatprep.subr.bf16.mxu0 0
      %2474 = vmatpush2.bf16.msra.mxu0 0
      %2475 = vmatprep.subr.bf16.mxu0 0
      %2476 = vmatpush2.bf16.msra.mxu0 0
      %2477 = vmatprep.subr.bf16.mxu0 0
      %2478 = vmatpush2.bf16.msra.mxu0 0
      %2479 = vmatprep.subr.bf16.mxu0 0
      %2480 = vmatpush2.bf16.msra.mxu0 0
      %2481 = vmatprep.subr.bf16.mxu0 0
      %2482 = vmatpush2.bf16.msra.mxu0 0
      %2483 = vmatprep.mubr.bf16.mxu0 0
      %2484 = vmatmul.mubr.bf16.gmra.mxu0 %v2449
      %v2485 = vpop.f32.mrf.mxu0
      %v2486 = vadd.f32 %v2434, %v2485
      %v2487 = vpop.f32.mrf.mxu0
      %v2488 = vpop.f32.mrf.mxu0
      %v2489 = vadd.f32 %v2434, %v2488
      %v2490 = vpop.f32.mrf.mxu0
      %2491 = vdwg.mxu0
      %v2492 = vmax.f32 %v2486, 0.0
      %v2493 = vmax.f32 %v2489, 0.0
      %v2494 = vpack.c.bf16 %v2493, %v2492
      %v2495 = vld [vmem:[%s19] sm:$0xf]
      %v2496 = vld [vmem:[%s19 + $0x4] sm:$0xf]
      %v2497 = vld [vmem:[%s19 + $0x8] sm:$0xf]
      %v2498 = vld [vmem:[%s19 + $0xc] sm:$0xf]
      %v2499 = vld [vmem:[%s19 + $0x10] sm:$0xf]
      %v2500 = vld [vmem:[%s19 + $0x14] sm:$0xf]
      %v2501 = vld [vmem:[%s19 + $0x18] sm:$0xf]
      %v2502 = vld [vmem:[%s19 + $0x1c] sm:$0xf]
      %v2503 = vld [vmem:[%s20] sm:$0x1]
      %v2505 = vlaneseq
      %v2506 = vshrl.u32 %v2505, 7
      %v2507 = vsub.s32 0, %v2506
      %v2508 = vrot.slane %v2503, %v2507
      %v2518 = vunpack.c.l.b16 %v2495
      %v2519 = vunpack.c.l.b16 %v2496
      %v2520 = vunpack.c.l.b16 %v2497
      %v2521 = vunpack.c.l.b16 %v2498
      %v2522 = vunpack.c.l.b16 %v2499
      %v2523 = vunpack.c.l.b16 %v2500
      %v2524 = vunpack.c.l.b16 %v2501
      %v2525 = vunpack.c.l.b16 %v2502
      %v2526 = vpack.c.b16 %v2519, %v2518
      %v2527 = vpack.c.b16 %v2521, %v2520
      %v2528 = vpack.c.b16 %v2523, %v2522
      %v2529 = vpack.c.b16 %v2525, %v2524
      %vm2534 = vcmask 523264
      %v2536 = vsel %vm2534, %v2494, 0
      %2538 = vmatprep.subr.bf16.mxu0 0
      %2539 = vmatpush1.bf16.msra.mxu0 0
      %2540 = vmatprep.subr.bf16.mxu0 0
      %2541 = vmatpush1.bf16.msra.mxu0 0
      %2542 = vmatprep.subr.bf16.mxu0 0
      %2543 = vmatpush1.bf16.msra.mxu0 0
      %2544 = vmatprep.subr.bf16.mxu0 0
      %2545 = vmatpush1.bf16.msra.mxu0 0
      %2546 = vmatprep.subr.bf16.mxu0 0
      %2547 = vmatpush1.bf16.msra.mxu0 %v2529
      %2548 = vmatprep.subr.bf16.mxu0 0
      %2549 = vmatpush1.bf16.msra.mxu0 %v2528
      %2550 = vmatprep.subr.bf16.mxu0 0
      %2551 = vmatpush1.bf16.msra.mxu0 %v2527
      %2552 = vmatprep.subr.bf16.mxu0 0
      %2553 = vmatpush1.bf16.msra.mxu0 %v2526
      %2554 = vmatprep.subr.bf16.mxu0 0
      %2555 = vmatpush2.bf16.msra.mxu0 0
      %2556 = vmatprep.subr.bf16.mxu0 0
      %2557 = vmatpush2.bf16.msra.mxu0 0
      %2558 = vmatprep.subr.bf16.mxu0 0
      %2559 = vmatpush2.bf16.msra.mxu0 0
      %2560 = vmatprep.subr.bf16.mxu0 0
      %2561 = vmatpush2.bf16.msra.mxu0 0
      %2562 = vmatprep.subr.bf16.mxu0 0
      %2563 = vmatpush2.bf16.msra.mxu0 0
      %2564 = vmatprep.subr.bf16.mxu0 0
      %2565 = vmatpush2.bf16.msra.mxu0 0
      %2566 = vmatprep.subr.bf16.mxu0 0
      %2567 = vmatpush2.bf16.msra.mxu0 0
      %2568 = vmatprep.subr.bf16.mxu0 0
      %2569 = vmatpush2.bf16.msra.mxu0 0
      %2570 = vmatprep.mubr.bf16.mxu0 0
      %2571 = vmatmul.mubr.bf16.gmra.mxu0 %v2536
      %v2572 = vpop.f32.mrf.mxu0
      %v2573 = vadd.f32 %v2508, %v2572
      %v2574 = vpop.f32.mrf.mxu0
      %v2575 = vpop.f32.mrf.mxu0
      %v2576 = vadd.f32 %v2508, %v2575
      %v2577 = vpop.f32.mrf.mxu0
      %2578 = vdwg.mxu0
      %v2579 = vadd.f32 %v2378, %v2573
      %v2580 = vadd.f32 %v2379, %v2576
      %v2581 = vpack.c.bf16 %v2580, %v2579
      %v2583 = vunpack.c.l.b16 %v2581
      %v2584 = vunpack.c.h.b16 %v2581
      %v2585 = vpack.c.b16 %v2583, %v2583
      %v2586 = vpack.c.b16 %v2584, %v2584
      %vm2589 = vcmask 257024
      %2590 = vst.msk [vmem:[%s634] sm:$0xf] %vm2589, %v2585
      %vm2591 = vcmask 253952
      %vm2592 = vsmask.f32 256
      %vm2593 = vmand %vm2591, %vm2592
      %v2594 = vld [vmem:[%s634 + $0x4] sm:$0x1]
      %v2595 = vsel %vm2593, %v2586, %v2594
      %2596 = vst [vmem:[%s634 + $0x4] sm:$0x1] %v2595
      %p2597 = scmp.lt.s32.totalorder %s42, 1
      %s2598 = scalar_select %p2597, %s42, 1
      %s2599 = smul.addr %s2598, 2
      %s2600 = smul.addr %s2599, 4
      %s2601 = scalar_lea.vmem %s21, %s2600
      // Predicated region
      $region97: #{_fwd.3} parent=95 // pred_check
        %p2602 = pneg %p469
      $region98: #{_fwd.3} parent=95 // pred_check_branch
        %2604 = sbr.rel (%p2602) target = $region100
      $region99: #{_fwd.3} parent=95 // pred_region
        _
      $region100: #{_fwd.3} parent=95 // pred_fallthru
        _
    $region96: #{_fwd.3} parent=5 // pred_fallthru
      _
    %p2605 = scmp.le.s32.totalorder 2, %s37
    // Predicated region
    $region101: #{_fwd.3} parent=5 // pred_check
      %p2606 = pneg %p2605
    $region102: #{_fwd.3} parent=5 // pred_check_branch
      %2608 = sbr.rel (%p2606) target = $region104
    $region103: #{_fwd.3} parent=5 // pred_region
      %s2609 = ssub.s32 %s37, 2
      // Predicated region
      $region105: #{_fwd.3} parent=103 // pred_check
        %p2610 = pneg %p475
      $region106: #{_fwd.3} parent=103 // pred_check_branch
        %2612 = sbr.rel (%p2610) target = $region108
      $region107: #{_fwd.3} parent=103 // pred_region
        %p2613 = scmp.lt.s32.totalorder %s43, 1
        %s2614 = scalar_select %p2613, %s43, 1
        %s2615 = smul.addr %s2614, 2
        %s2616 = smul.addr %s2615, 4
        %s2617 = scalar_lea.vmem %s21, %s2616
      $region108: #{_fwd.3} parent=103 // pred_fallthru
        _
    $region104: #{_fwd.3} parent=5 // pred_fallthru
      _
  $region6: #{_fwd.3} parent=0 // loop_footer
    %s41 = sadd.s32 1, %s37
  $region7: #{_fwd.3} parent=0 // loop_footer_branch
    %36 = sbr.rel target = $region3
  $region8: #{_fwd.3} parent=0 // loop_exit
    _

</llo_original>
